<compile_context>
chip_gen: v5e
topology: v5e:2x2
jax: 0.10.0
libtpu: 0.0.40
codegen_flags: <defaults>
</compile_context>

<pallas_src>
import jax
import jax.numpy as jnp
from jax.experimental import pallas as pl
from jax.experimental.pallas import tpu as pltpu


def _make_basic_block_kernel(H, W, Cp):
    Wp = W + 2
    P = (H + 2) * Wp          # flattened padded spatial size
    PAD = Wp + 1              # largest |row shift| needed by a 3x3 tap
    # tap order: kh-major, kw-minor -> matches the (3,3,Cin,Cout) weight reshape
    SHIFTS = tuple(dh * Wp + dw for dh in (-1, 0, 1) for dw in (-1, 0, 1))

    def conv3x3(a_f32, w_ref):
        # a_f32: (P, Cp) f32 padded/flattened image; w_ref: (9, Cp, Cp) bf16.
        # Direct conv as a sum of 9 shifted matmuls.  Rows shifted in from
        # outside the slab only ever feed border output rows, which are masked
        # (after conv2) or cropped by the wrapper (after conv3).
        a = a_f32.astype(jnp.bfloat16)                       # cast once, early
        zpad = jnp.zeros((PAD, Cp), jnp.bfloat16)
        a_ext = jnp.concatenate([zpad, a, zpad], axis=0)     # (P + 2*PAD, Cp)
        acc = None
        for t, s in enumerate(SHIFTS):
            piece = a_ext[PAD + s:PAD + s + P, :]            # (P, Cp) bf16
            part = jnp.dot(piece, w_ref[t],
                           preferred_element_type=jnp.float32)
            acc = part if acc is None else acc + part
        return acc                                           # (P, Cp) f32

    def kernel(x_ref, mask_ref, w2_ref, s2_ref, b2_ref, w3_ref, s3_ref, b3_ref,
               o_ref):
        # x_ref   : (1, P, Cp)   f32   zero-padded, channel-padded, flat image
        # mask_ref: (P, 1)       f32   1.0 on interior rows, 0.0 on border rows
        # w2_ref  : (9, Cp, Cp)  bf16  conv2 weights, one (Cp,Cp) block per tap
        # s2/b2   : (1, Cp)      f32   folded BN2 scale / bias
        # w3_ref  : (9, Cp, Cp)  bf16  conv3 weights
        # s3/b3   : (1, Cp)      f32   folded BN3 scale / bias
        # o_ref   : (1, P, Cp)   f32   output (border rows are garbage, cropped
        #                              by the wrapper)
        x = x_ref[0]                                    # (P, Cp) f32
        mask = mask_ref[...]                            # (P, 1)  f32

        # ---- conv2 (3x3, stride 1, pad 1) + bn2 + relu ----
        acc1 = conv3x3(x, w2_ref)
        # re-zero border rows so conv3 sees correct zero padding
        out1 = jnp.maximum(acc1 * s2_ref[0] + b2_ref[0], 0.0) * mask

        # ---- conv3 (3x3, stride 1, pad 1) + bn3 + identity residual + relu ----
        acc2 = conv3x3(out1, w3_ref)
        out2 = acc2 * s3_ref[0] + b3_ref[0]
        o_ref[0] = jnp.maximum(out2 + x, 0.0)

    return kernel


def basic_block_forward(x_nchw, w2, scale2, bias2, w3, scale3, bias3):
    """x_nchw: (N, C, H, W) f32 (PyTorch layout); w*: HWIO (3, 3, Cin, Cout);
    scale*/bias*: inference-mode BatchNorm folded into per-channel affine."""
    N, C, H, W = x_nchw.shape
    Cmid = w2.shape[3]
    Cout = w3.shape[3]
    assert C == Cout, "identity residual requires Cin == Cout (downsample=None)"

    LANE = 128
    Cp = ((max(C, Cmid, Cout) + LANE - 1) // LANE) * LANE
    P = (H + 2) * (W + 2)

    # NHWC, zero-pad spatially (for the 3x3 convs) and channels to 128 lanes,
    # then flatten the padded spatial dims: the kernel works on (P, Cp) slabs.
    x = jnp.transpose(x_nchw, (0, 2, 3, 1)).astype(jnp.float32)
    x = jnp.pad(x, ((0, 0), (1, 1), (1, 1), (0, Cp - C)))
    x = x.reshape(N, P, Cp)

    # interior-row mask (1.0 where the padded position is a real pixel)
    interior = jnp.pad(jnp.ones((H, W), jnp.float32), ((1, 1), (1, 1)))
    mask = interior.reshape(P, 1)

    def pack_w(w, ci, co):
        # HWIO -> (9, Cp, Cp) bf16, kh-major/kw-minor tap order
        wp = jnp.zeros((3, 3, Cp, Cp), jnp.float32).at[:, :, :ci, :co].set(w)
        return wp.reshape(9, Cp, Cp).astype(jnp.bfloat16)

    def pack_affine(s, b, c):
        sp = jnp.zeros((1, Cp), jnp.float32).at[0, :c].set(s.astype(jnp.float32))
        bp = jnp.zeros((1, Cp), jnp.float32).at[0, :c].set(b.astype(jnp.float32))
        return sp, bp

    w2m = pack_w(w2, C, Cmid)
    w3m = pack_w(w3, Cmid, Cout)
    s2, b2 = pack_affine(scale2, bias2, Cmid)
    s3, b3 = pack_affine(scale3, bias3, Cout)

    kernel = _make_basic_block_kernel(H, W, Cp)

    out_flat = pl.pallas_call(
        kernel,
        out_shape=jax.ShapeDtypeStruct((N, P, Cp), jnp.float32),
        grid_spec=pltpu.PrefetchScalarGridSpec(
            num_scalar_prefetch=0,
            grid=(N,),
            in_specs=[
                pl.BlockSpec((1, P, Cp), lambda n: (n, 0, 0)),
                pl.BlockSpec((P, 1), lambda n: (0, 0)),
                pl.BlockSpec((9, Cp, Cp), lambda n: (0, 0, 0)),
                pl.BlockSpec((1, Cp), lambda n: (0, 0)),
                pl.BlockSpec((1, Cp), lambda n: (0, 0)),
                pl.BlockSpec((9, Cp, Cp), lambda n: (0, 0, 0)),
                pl.BlockSpec((1, Cp), lambda n: (0, 0)),
                pl.BlockSpec((1, Cp), lambda n: (0, 0)),
            ],
            out_specs=pl.BlockSpec((1, P, Cp), lambda n: (n, 0, 0)),
        ),
        compiler_params=pltpu.CompilerParams(
            dimension_semantics=("parallel",)),
    )(x, mask, w2m, s2, b2, w3m, s3, b3)

    out = out_flat.reshape(N, H + 2, W + 2, Cp)[:, 1:H + 1, 1:W + 1, :Cout]
    return jnp.transpose(out, (0, 3, 1, 2))                     # -> NCHW


def _reference(x_nchw, w2, g2, be2, m2, v2, w3, g3, be3, m3, v3, eps=1e-5):
    """Plain-JAX reference (eval-mode BN, downsample=None).  Convs use the same
    bf16-operand / f32-accumulate numerics as the kernel's MXU path."""
    x = jnp.transpose(x_nchw, (0, 2, 3, 1)).astype(jnp.float32)

    def conv(a, w):
        dn = jax.lax.conv_dimension_numbers(a.shape, w.shape,
                                            ("NHWC", "HWIO", "NHWC"))
        return jax.lax.conv_general_dilated(
            a.astype(jnp.bfloat16), w.astype(jnp.bfloat16), (1, 1),
            ((1, 1), (1, 1)), dimension_numbers=dn,
            preferred_element_type=jnp.float32)

    out = conv(x, w2)
    out = (out - m2) / jnp.sqrt(v2 + eps) * g2 + be2
    out = jnp.maximum(out, 0.0)
    out = conv(out, w3)
    out = (out - m3) / jnp.sqrt(v3 + eps) * g3 + be3
    out = jnp.maximum(out + x, 0.0)
    return jnp.transpose(out, (0, 3, 1, 2))


if __name__ == "__main__":
    # BasicBlock(num_layer=18, in_channels=4, out_channels=4, stride=1,
    #            expansion=1, downsample=None)
    N, C, H, W = 2, 4, 16, 16
    Cout = C  # out_channels * expansion
    eps = 1e-5

    key = jax.random.PRNGKey(0)
    ks = jax.random.split(key, 12)

    x = jax.random.normal(ks[0], (N, C, H, W), jnp.float32)

    # conv2: 3x3 Cin->Cout ; conv3: 3x3 Cout->Cout*expansion   (HWIO layout)
    w2 = 0.1 * jax.random.normal(ks[1], (3, 3, C, Cout), jnp.float32)
    w3 = 0.1 * jax.random.normal(ks[2], (3, 3, Cout, Cout), jnp.float32)

    # BN2 / BN3 parameters and running statistics (deterministic)
    g2 = 1.0 + 0.1 * jax.random.normal(ks[3], (Cout,), jnp.float32)
    be2 = 0.05 * jax.random.normal(ks[4], (Cout,), jnp.float32)
    m2 = 0.1 * jax.random.normal(ks[5], (Cout,), jnp.float32)
    v2 = 0.5 + jnp.abs(jax.random.normal(ks[6], (Cout,), jnp.float32)) * 0.5

    g3 = 1.0 + 0.1 * jax.random.normal(ks[7], (Cout,), jnp.float32)
    be3 = 0.05 * jax.random.normal(ks[8], (Cout,), jnp.float32)
    m3 = 0.1 * jax.random.normal(ks[9], (Cout,), jnp.float32)
    v3 = 0.5 + jnp.abs(jax.random.normal(ks[10], (Cout,), jnp.float32)) * 0.5

    # Fold BN into per-channel scale/bias:  y = x*scale + bias
    scale2 = g2 / jnp.sqrt(v2 + eps)
    bias2 = be2 - m2 * scale2
    scale3 = g3 / jnp.sqrt(v3 + eps)
    bias3 = be3 - m3 * scale3

    out = basic_block_forward(x, w2, scale2, bias2, w3, scale3, bias3)
    out = jax.block_until_ready(out)

    ref = _reference(x, w2, g2, be2, m2, v2, w3, g3, be3, m3, v3, eps)
    assert out.shape == (N, C, H, W)
    assert jnp.allclose(out, ref, atol=2e-3, rtol=2e-3), (
        f"max abs err {jnp.max(jnp.abs(out - ref))}")

    print("KERNEL_OK")
</pallas_src>

<mosaic_0001>
module attributes {stable_mosaic.version = 11 : i64} {
  func.func @kernel(%arg0: i32, %arg1: memref<1x324x128xf32, #tpu.memory_space<vmem>>, %arg2: memref<324x1xf32, #tpu.memory_space<vmem>>, %arg3: memref<9x128x128xbf16, #tpu.memory_space<vmem>>, %arg4: memref<1x128xf32, #tpu.memory_space<vmem>>, %arg5: memref<1x128xf32, #tpu.memory_space<vmem>>, %arg6: memref<9x128x128xbf16, #tpu.memory_space<vmem>>, %arg7: memref<1x128xf32, #tpu.memory_space<vmem>>, %arg8: memref<1x128xf32, #tpu.memory_space<vmem>>, %arg9: memref<1x324x128xf32, #tpu.memory_space<vmem>>) attributes {dimension_semantics = [#tpu.dimension_semantics<parallel>], iteration_bounds = array<i64: 2>, scalar_prefetch = 0 : i64, scratch_operands = 0 : i64, tpu.core_type = #tpu.core_type<tc>, window_params = [{transform_indices = @transform_0, window_bounds = array<i64: 1, 324, 128>}, {pipeline_mode = #tpu.pipeline_mode<synchronous>, transform_indices = @transform_1, window_bounds = array<i64: 324, 1>}, {pipeline_mode = #tpu.pipeline_mode<synchronous>, transform_indices = @transform_2, window_bounds = array<i64: 9, 128, 128>}, {pipeline_mode = #tpu.pipeline_mode<synchronous>, transform_indices = @transform_3, window_bounds = array<i64: 1, 128>}, {pipeline_mode = #tpu.pipeline_mode<synchronous>, transform_indices = @transform_4, window_bounds = array<i64: 1, 128>}, {pipeline_mode = #tpu.pipeline_mode<synchronous>, transform_indices = @transform_5, window_bounds = array<i64: 9, 128, 128>}, {pipeline_mode = #tpu.pipeline_mode<synchronous>, transform_indices = @transform_6, window_bounds = array<i64: 1, 128>}, {pipeline_mode = #tpu.pipeline_mode<synchronous>, transform_indices = @transform_7, window_bounds = array<i64: 1, 128>}, {transform_indices = @transform_8, window_bounds = array<i64: 1, 324, 128>}]} {
    %c0 = arith.constant 0 : index
    %c0_0 = arith.constant 0 : index
    %c0_1 = arith.constant 0 : index
    %0 = vector.load %arg1[%c0, %c0_0, %c0_1] : memref<1x324x128xf32, #tpu.memory_space<vmem>>, vector<1x324x128xf32>
    %1 = vector.shape_cast %0 : vector<1x324x128xf32> to vector<324x128xf32>
    %c0_2 = arith.constant 0 : index
    %c0_3 = arith.constant 0 : index
    %2 = vector.load %arg2[%c0_2, %c0_3] : memref<324x1xf32, #tpu.memory_space<vmem>>, vector<324x1xf32>
    %3 = arith.truncf %1 : vector<324x128xf32> to vector<324x128xbf16>
    %cst = arith.constant 0.000000e+00 : bf16
    %4 = vector.broadcast %cst : bf16 to vector<19x128xbf16>
    %5 = tpu.concatenate %4, %3, %4 in 0 : vector<19x128xbf16>, vector<324x128xbf16>, vector<19x128xbf16> -> vector<362x128xbf16>
    %6 = vector.extract_strided_slice %5 {offsets = [0, 0], sizes = [324, 128], strides = [1, 1]} : vector<362x128xbf16> to vector<324x128xbf16>
    %c0_4 = arith.constant 0 : index
    %c0_5 = arith.constant 0 : index
    %c0_6 = arith.constant 0 : index
    %7 = vector.load %arg3[%c0_4, %c0_5, %c0_6] : memref<9x128x128xbf16, #tpu.memory_space<vmem>>, vector<1x128x128xbf16>
    %8 = vector.shape_cast %7 : vector<1x128x128xbf16> to vector<128x128xbf16>
    %cst_7 = arith.constant dense<0.000000e+00> : vector<324x128xf32>
    %9 = tpu.matmul %6, %8, %cst_7 {dimension_numbers = #tpu.dot_dimension_numbers<[1], [0], [0], [1], [0, 0, 1, 1], [], []>} : vector<324x128xbf16>, vector<128x128xbf16>, vector<324x128xf32> -> vector<324x128xf32>
    %10 = vector.extract_strided_slice %5 {offsets = [1, 0], sizes = [324, 128], strides = [1, 1]} : vector<362x128xbf16> to vector<324x128xbf16>
    %c1 = arith.constant 1 : index
    %c0_8 = arith.constant 0 : index
    %c0_9 = arith.constant 0 : index
    %11 = vector.load %arg3[%c1, %c0_8, %c0_9] : memref<9x128x128xbf16, #tpu.memory_space<vmem>>, vector<1x128x128xbf16>
    %12 = vector.shape_cast %11 : vector<1x128x128xbf16> to vector<128x128xbf16>
    %cst_10 = arith.constant dense<0.000000e+00> : vector<324x128xf32>
    %13 = tpu.matmul %10, %12, %cst_10 {dimension_numbers = #tpu.dot_dimension_numbers<[1], [0], [0], [1], [0, 0, 1, 1], [], []>} : vector<324x128xbf16>, vector<128x128xbf16>, vector<324x128xf32> -> vector<324x128xf32>
    %14 = arith.addf %9, %13 : vector<324x128xf32>
    %15 = vector.extract_strided_slice %5 {offsets = [2, 0], sizes = [324, 128], strides = [1, 1]} : vector<362x128xbf16> to vector<324x128xbf16>
    %c2 = arith.constant 2 : index
    %c0_11 = arith.constant 0 : index
    %c0_12 = arith.constant 0 : index
    %16 = vector.load %arg3[%c2, %c0_11, %c0_12] : memref<9x128x128xbf16, #tpu.memory_space<vmem>>, vector<1x128x128xbf16>
    %17 = vector.shape_cast %16 : vector<1x128x128xbf16> to vector<128x128xbf16>
    %cst_13 = arith.constant dense<0.000000e+00> : vector<324x128xf32>
    %18 = tpu.matmul %15, %17, %cst_13 {dimension_numbers = #tpu.dot_dimension_numbers<[1], [0], [0], [1], [0, 0, 1, 1], [], []>} : vector<324x128xbf16>, vector<128x128xbf16>, vector<324x128xf32> -> vector<324x128xf32>
    %19 = arith.addf %14, %18 : vector<324x128xf32>
    %20 = vector.extract_strided_slice %5 {offsets = [18, 0], sizes = [324, 128], strides = [1, 1]} : vector<362x128xbf16> to vector<324x128xbf16>
    %c3 = arith.constant 3 : index
    %c0_14 = arith.constant 0 : index
    %c0_15 = arith.constant 0 : index
    %21 = vector.load %arg3[%c3, %c0_14, %c0_15] : memref<9x128x128xbf16, #tpu.memory_space<vmem>>, vector<1x128x128xbf16>
    %22 = vector.shape_cast %21 : vector<1x128x128xbf16> to vector<128x128xbf16>
    %cst_16 = arith.constant dense<0.000000e+00> : vector<324x128xf32>
    %23 = tpu.matmul %20, %22, %cst_16 {dimension_numbers = #tpu.dot_dimension_numbers<[1], [0], [0], [1], [0, 0, 1, 1], [], []>} : vector<324x128xbf16>, vector<128x128xbf16>, vector<324x128xf32> -> vector<324x128xf32>
    %24 = arith.addf %19, %23 : vector<324x128xf32>
    %25 = vector.extract_strided_slice %5 {offsets = [19, 0], sizes = [324, 128], strides = [1, 1]} : vector<362x128xbf16> to vector<324x128xbf16>
    %c4 = arith.constant 4 : index
    %c0_17 = arith.constant 0 : index
    %c0_18 = arith.constant 0 : index
    %26 = vector.load %arg3[%c4, %c0_17, %c0_18] : memref<9x128x128xbf16, #tpu.memory_space<vmem>>, vector<1x128x128xbf16>
    %27 = vector.shape_cast %26 : vector<1x128x128xbf16> to vector<128x128xbf16>
    %cst_19 = arith.constant dense<0.000000e+00> : vector<324x128xf32>
    %28 = tpu.matmul %25, %27, %cst_19 {dimension_numbers = #tpu.dot_dimension_numbers<[1], [0], [0], [1], [0, 0, 1, 1], [], []>} : vector<324x128xbf16>, vector<128x128xbf16>, vector<324x128xf32> -> vector<324x128xf32>
    %29 = arith.addf %24, %28 : vector<324x128xf32>
    %30 = vector.extract_strided_slice %5 {offsets = [20, 0], sizes = [324, 128], strides = [1, 1]} : vector<362x128xbf16> to vector<324x128xbf16>
    %c5 = arith.constant 5 : index
    %c0_20 = arith.constant 0 : index
    %c0_21 = arith.constant 0 : index
    %31 = vector.load %arg3[%c5, %c0_20, %c0_21] : memref<9x128x128xbf16, #tpu.memory_space<vmem>>, vector<1x128x128xbf16>
    %32 = vector.shape_cast %31 : vector<1x128x128xbf16> to vector<128x128xbf16>
    %cst_22 = arith.constant dense<0.000000e+00> : vector<324x128xf32>
    %33 = tpu.matmul %30, %32, %cst_22 {dimension_numbers = #tpu.dot_dimension_numbers<[1], [0], [0], [1], [0, 0, 1, 1], [], []>} : vector<324x128xbf16>, vector<128x128xbf16>, vector<324x128xf32> -> vector<324x128xf32>
    %34 = arith.addf %29, %33 : vector<324x128xf32>
    %35 = vector.extract_strided_slice %5 {offsets = [36, 0], sizes = [324, 128], strides = [1, 1]} : vector<362x128xbf16> to vector<324x128xbf16>
    %c6 = arith.constant 6 : index
    %c0_23 = arith.constant 0 : index
    %c0_24 = arith.constant 0 : index
    %36 = vector.load %arg3[%c6, %c0_23, %c0_24] : memref<9x128x128xbf16, #tpu.memory_space<vmem>>, vector<1x128x128xbf16>
    %37 = vector.shape_cast %36 : vector<1x128x128xbf16> to vector<128x128xbf16>
    %cst_25 = arith.constant dense<0.000000e+00> : vector<324x128xf32>
    %38 = tpu.matmul %35, %37, %cst_25 {dimension_numbers = #tpu.dot_dimension_numbers<[1], [0], [0], [1], [0, 0, 1, 1], [], []>} : vector<324x128xbf16>, vector<128x128xbf16>, vector<324x128xf32> -> vector<324x128xf32>
    %39 = arith.addf %34, %38 : vector<324x128xf32>
    %40 = vector.extract_strided_slice %5 {offsets = [37, 0], sizes = [324, 128], strides = [1, 1]} : vector<362x128xbf16> to vector<324x128xbf16>
    %c7 = arith.constant 7 : index
    %c0_26 = arith.constant 0 : index
    %c0_27 = arith.constant 0 : index
    %41 = vector.load %arg3[%c7, %c0_26, %c0_27] : memref<9x128x128xbf16, #tpu.memory_space<vmem>>, vector<1x128x128xbf16>
    %42 = vector.shape_cast %41 : vector<1x128x128xbf16> to vector<128x128xbf16>
    %cst_28 = arith.constant dense<0.000000e+00> : vector<324x128xf32>
    %43 = tpu.matmul %40, %42, %cst_28 {dimension_numbers = #tpu.dot_dimension_numbers<[1], [0], [0], [1], [0, 0, 1, 1], [], []>} : vector<324x128xbf16>, vector<128x128xbf16>, vector<324x128xf32> -> vector<324x128xf32>
    %44 = arith.addf %39, %43 : vector<324x128xf32>
    %45 = vector.extract_strided_slice %5 {offsets = [38, 0], sizes = [324, 128], strides = [1, 1]} : vector<362x128xbf16> to vector<324x128xbf16>
    %c8 = arith.constant 8 : index
    %c0_29 = arith.constant 0 : index
    %c0_30 = arith.constant 0 : index
    %46 = vector.load %arg3[%c8, %c0_29, %c0_30] : memref<9x128x128xbf16, #tpu.memory_space<vmem>>, vector<1x128x128xbf16>
    %47 = vector.shape_cast %46 : vector<1x128x128xbf16> to vector<128x128xbf16>
    %cst_31 = arith.constant dense<0.000000e+00> : vector<324x128xf32>
    %48 = tpu.matmul %45, %47, %cst_31 {dimension_numbers = #tpu.dot_dimension_numbers<[1], [0], [0], [1], [0, 0, 1, 1], [], []>} : vector<324x128xbf16>, vector<128x128xbf16>, vector<324x128xf32> -> vector<324x128xf32>
    %49 = arith.addf %44, %48 : vector<324x128xf32>
    %c0_32 = arith.constant 0 : index
    %c0_33 = arith.constant 0 : index
    %50 = vector.load %arg4[%c0_32, %c0_33] : memref<1x128xf32, #tpu.memory_space<vmem>>, vector<1x128xf32>
    %51 = vector.shape_cast %50 : vector<1x128xf32> to vector<128xf32>
    %52 = vector.shape_cast %51 : vector<128xf32> to vector<1x128xf32>
    %53 = vector.broadcast %52 : vector<1x128xf32> to vector<324x128xf32>
    %54 = arith.mulf %49, %53 : vector<324x128xf32>
    %c0_34 = arith.constant 0 : index
    %c0_35 = arith.constant 0 : index
    %55 = vector.load %arg5[%c0_34, %c0_35] : memref<1x128xf32, #tpu.memory_space<vmem>>, vector<1x128xf32>
    %56 = vector.shape_cast %55 : vector<1x128xf32> to vector<128xf32>
    %57 = vector.shape_cast %56 : vector<128xf32> to vector<1x128xf32>
    %58 = vector.broadcast %57 : vector<1x128xf32> to vector<324x128xf32>
    %59 = arith.addf %54, %58 : vector<324x128xf32>
    %cst_36 = arith.constant 0.000000e+00 : f32
    %60 = vector.broadcast %cst_36 : f32 to vector<324x128xf32>
    %61 = arith.maximumf %59, %60 : vector<324x128xf32>
    %62 = vector.broadcast %2 : vector<324x1xf32> to vector<324x128xf32>
    %63 = arith.mulf %61, %62 : vector<324x128xf32>
    %64 = arith.truncf %63 : vector<324x128xf32> to vector<324x128xbf16>
    %cst_37 = arith.constant 0.000000e+00 : bf16
    %65 = vector.broadcast %cst_37 : bf16 to vector<19x128xbf16>
    %66 = tpu.concatenate %65, %64, %65 in 0 : vector<19x128xbf16>, vector<324x128xbf16>, vector<19x128xbf16> -> vector<362x128xbf16>
    %67 = vector.extract_strided_slice %66 {offsets = [0, 0], sizes = [324, 128], strides = [1, 1]} : vector<362x128xbf16> to vector<324x128xbf16>
    %c0_38 = arith.constant 0 : index
    %c0_39 = arith.constant 0 : index
    %c0_40 = arith.constant 0 : index
    %68 = vector.load %arg6[%c0_38, %c0_39, %c0_40] : memref<9x128x128xbf16, #tpu.memory_space<vmem>>, vector<1x128x128xbf16>
    %69 = vector.shape_cast %68 : vector<1x128x128xbf16> to vector<128x128xbf16>
    %cst_41 = arith.constant dense<0.000000e+00> : vector<324x128xf32>
    %70 = tpu.matmul %67, %69, %cst_41 {dimension_numbers = #tpu.dot_dimension_numbers<[1], [0], [0], [1], [0, 0, 1, 1], [], []>} : vector<324x128xbf16>, vector<128x128xbf16>, vector<324x128xf32> -> vector<324x128xf32>
    %71 = vector.extract_strided_slice %66 {offsets = [1, 0], sizes = [324, 128], strides = [1, 1]} : vector<362x128xbf16> to vector<324x128xbf16>
    %c1_42 = arith.constant 1 : index
    %c0_43 = arith.constant 0 : index
    %c0_44 = arith.constant 0 : index
    %72 = vector.load %arg6[%c1_42, %c0_43, %c0_44] : memref<9x128x128xbf16, #tpu.memory_space<vmem>>, vector<1x128x128xbf16>
    %73 = vector.shape_cast %72 : vector<1x128x128xbf16> to vector<128x128xbf16>
    %cst_45 = arith.constant dense<0.000000e+00> : vector<324x128xf32>
    %74 = tpu.matmul %71, %73, %cst_45 {dimension_numbers = #tpu.dot_dimension_numbers<[1], [0], [0], [1], [0, 0, 1, 1], [], []>} : vector<324x128xbf16>, vector<128x128xbf16>, vector<324x128xf32> -> vector<324x128xf32>
    %75 = arith.addf %70, %74 : vector<324x128xf32>
    %76 = vector.extract_strided_slice %66 {offsets = [2, 0], sizes = [324, 128], strides = [1, 1]} : vector<362x128xbf16> to vector<324x128xbf16>
    %c2_46 = arith.constant 2 : index
    %c0_47 = arith.constant 0 : index
    %c0_48 = arith.constant 0 : index
    %77 = vector.load %arg6[%c2_46, %c0_47, %c0_48] : memref<9x128x128xbf16, #tpu.memory_space<vmem>>, vector<1x128x128xbf16>
    %78 = vector.shape_cast %77 : vector<1x128x128xbf16> to vector<128x128xbf16>
    %cst_49 = arith.constant dense<0.000000e+00> : vector<324x128xf32>
    %79 = tpu.matmul %76, %78, %cst_49 {dimension_numbers = #tpu.dot_dimension_numbers<[1], [0], [0], [1], [0, 0, 1, 1], [], []>} : vector<324x128xbf16>, vector<128x128xbf16>, vector<324x128xf32> -> vector<324x128xf32>
    %80 = arith.addf %75, %79 : vector<324x128xf32>
    %81 = vector.extract_strided_slice %66 {offsets = [18, 0], sizes = [324, 128], strides = [1, 1]} : vector<362x128xbf16> to vector<324x128xbf16>
    %c3_50 = arith.constant 3 : index
    %c0_51 = arith.constant 0 : index
    %c0_52 = arith.constant 0 : index
    %82 = vector.load %arg6[%c3_50, %c0_51, %c0_52] : memref<9x128x128xbf16, #tpu.memory_space<vmem>>, vector<1x128x128xbf16>
    %83 = vector.shape_cast %82 : vector<1x128x128xbf16> to vector<128x128xbf16>
    %cst_53 = arith.constant dense<0.000000e+00> : vector<324x128xf32>
    %84 = tpu.matmul %81, %83, %cst_53 {dimension_numbers = #tpu.dot_dimension_numbers<[1], [0], [0], [1], [0, 0, 1, 1], [], []>} : vector<324x128xbf16>, vector<128x128xbf16>, vector<324x128xf32> -> vector<324x128xf32>
    %85 = arith.addf %80, %84 : vector<324x128xf32>
    %86 = vector.extract_strided_slice %66 {offsets = [19, 0], sizes = [324, 128], strides = [1, 1]} : vector<362x128xbf16> to vector<324x128xbf16>
    %c4_54 = arith.constant 4 : index
    %c0_55 = arith.constant 0 : index
    %c0_56 = arith.constant 0 : index
    %87 = vector.load %arg6[%c4_54, %c0_55, %c0_56] : memref<9x128x128xbf16, #tpu.memory_space<vmem>>, vector<1x128x128xbf16>
    %88 = vector.shape_cast %87 : vector<1x128x128xbf16> to vector<128x128xbf16>
    %cst_57 = arith.constant dense<0.000000e+00> : vector<324x128xf32>
    %89 = tpu.matmul %86, %88, %cst_57 {dimension_numbers = #tpu.dot_dimension_numbers<[1], [0], [0], [1], [0, 0, 1, 1], [], []>} : vector<324x128xbf16>, vector<128x128xbf16>, vector<324x128xf32> -> vector<324x128xf32>
    %90 = arith.addf %85, %89 : vector<324x128xf32>
    %91 = vector.extract_strided_slice %66 {offsets = [20, 0], sizes = [324, 128], strides = [1, 1]} : vector<362x128xbf16> to vector<324x128xbf16>
    %c5_58 = arith.constant 5 : index
    %c0_59 = arith.constant 0 : index
    %c0_60 = arith.constant 0 : index
    %92 = vector.load %arg6[%c5_58, %c0_59, %c0_60] : memref<9x128x128xbf16, #tpu.memory_space<vmem>>, vector<1x128x128xbf16>
    %93 = vector.shape_cast %92 : vector<1x128x128xbf16> to vector<128x128xbf16>
    %cst_61 = arith.constant dense<0.000000e+00> : vector<324x128xf32>
    %94 = tpu.matmul %91, %93, %cst_61 {dimension_numbers = #tpu.dot_dimension_numbers<[1], [0], [0], [1], [0, 0, 1, 1], [], []>} : vector<324x128xbf16>, vector<128x128xbf16>, vector<324x128xf32> -> vector<324x128xf32>
    %95 = arith.addf %90, %94 : vector<324x128xf32>
    %96 = vector.extract_strided_slice %66 {offsets = [36, 0], sizes = [324, 128], strides = [1, 1]} : vector<362x128xbf16> to vector<324x128xbf16>
    %c6_62 = arith.constant 6 : index
    %c0_63 = arith.constant 0 : index
    %c0_64 = arith.constant 0 : index
    %97 = vector.load %arg6[%c6_62, %c0_63, %c0_64] : memref<9x128x128xbf16, #tpu.memory_space<vmem>>, vector<1x128x128xbf16>
    %98 = vector.shape_cast %97 : vector<1x128x128xbf16> to vector<128x128xbf16>
    %cst_65 = arith.constant dense<0.000000e+00> : vector<324x128xf32>
    %99 = tpu.matmul %96, %98, %cst_65 {dimension_numbers = #tpu.dot_dimension_numbers<[1], [0], [0], [1], [0, 0, 1, 1], [], []>} : vector<324x128xbf16>, vector<128x128xbf16>, vector<324x128xf32> -> vector<324x128xf32>
    %100 = arith.addf %95, %99 : vector<324x128xf32>
    %101 = vector.extract_strided_slice %66 {offsets = [37, 0], sizes = [324, 128], strides = [1, 1]} : vector<362x128xbf16> to vector<324x128xbf16>
    %c7_66 = arith.constant 7 : index
    %c0_67 = arith.constant 0 : index
    %c0_68 = arith.constant 0 : index
    %102 = vector.load %arg6[%c7_66, %c0_67, %c0_68] : memref<9x128x128xbf16, #tpu.memory_space<vmem>>, vector<1x128x128xbf16>
    %103 = vector.shape_cast %102 : vector<1x128x128xbf16> to vector<128x128xbf16>
    %cst_69 = arith.constant dense<0.000000e+00> : vector<324x128xf32>
    %104 = tpu.matmul %101, %103, %cst_69 {dimension_numbers = #tpu.dot_dimension_numbers<[1], [0], [0], [1], [0, 0, 1, 1], [], []>} : vector<324x128xbf16>, vector<128x128xbf16>, vector<324x128xf32> -> vector<324x128xf32>
    %105 = arith.addf %100, %104 : vector<324x128xf32>
    %106 = vector.extract_strided_slice %66 {offsets = [38, 0], sizes = [324, 128], strides = [1, 1]} : vector<362x128xbf16> to vector<324x128xbf16>
    %c8_70 = arith.constant 8 : index
    %c0_71 = arith.constant 0 : index
    %c0_72 = arith.constant 0 : index
    %107 = vector.load %arg6[%c8_70, %c0_71, %c0_72] : memref<9x128x128xbf16, #tpu.memory_space<vmem>>, vector<1x128x128xbf16>
    %108 = vector.shape_cast %107 : vector<1x128x128xbf16> to vector<128x128xbf16>
    %cst_73 = arith.constant dense<0.000000e+00> : vector<324x128xf32>
    %109 = tpu.matmul %106, %108, %cst_73 {dimension_numbers = #tpu.dot_dimension_numbers<[1], [0], [0], [1], [0, 0, 1, 1], [], []>} : vector<324x128xbf16>, vector<128x128xbf16>, vector<324x128xf32> -> vector<324x128xf32>
    %110 = arith.addf %105, %109 : vector<324x128xf32>
    %c0_74 = arith.constant 0 : index
    %c0_75 = arith.constant 0 : index
    %111 = vector.load %arg7[%c0_74, %c0_75] : memref<1x128xf32, #tpu.memory_space<vmem>>, vector<1x128xf32>
    %112 = vector.shape_cast %111 : vector<1x128xf32> to vector<128xf32>
    %113 = vector.shape_cast %112 : vector<128xf32> to vector<1x128xf32>
    %114 = vector.broadcast %113 : vector<1x128xf32> to vector<324x128xf32>
    %115 = arith.mulf %110, %114 : vector<324x128xf32>
    %c0_76 = arith.constant 0 : index
    %c0_77 = arith.constant 0 : index
    %116 = vector.load %arg8[%c0_76, %c0_77] : memref<1x128xf32, #tpu.memory_space<vmem>>, vector<1x128xf32>
    %117 = vector.shape_cast %116 : vector<1x128xf32> to vector<128xf32>
    %118 = vector.shape_cast %117 : vector<128xf32> to vector<1x128xf32>
    %119 = vector.broadcast %118 : vector<1x128xf32> to vector<324x128xf32>
    %120 = arith.addf %115, %119 : vector<324x128xf32>
    %121 = arith.addf %120, %1 : vector<324x128xf32>
    %cst_78 = arith.constant 0.000000e+00 : f32
    %122 = vector.broadcast %cst_78 : f32 to vector<324x128xf32>
    %123 = arith.maximumf %121, %122 : vector<324x128xf32>
    %c0_79 = arith.constant 0 : index
    %c0_80 = arith.constant 0 : index
    %c0_81 = arith.constant 0 : index
    %124 = vector.load %arg9[%c0_79, %c0_80, %c0_81] : memref<1x324x128xf32, #tpu.memory_space<vmem>>, vector<1x324x128xf32>
    %125 = vector.shape_cast %124 : vector<1x324x128xf32> to vector<324x128xf32>
    %126 = vector.shape_cast %123 : vector<324x128xf32> to vector<1x324x128xf32>
    tpu.vector_store %arg9[%c0_79, %c0_80, %c0_81], %126 {strides = array<i32>} : memref<1x324x128xf32, #tpu.memory_space<vmem>>, vector<1x324x128xf32>,
    return
  }
  func.func @transform_0(%arg0: i32) -> (i32, i32, i32) {
    %c0_i32 = arith.constant 0 : i32
    %c0_i32_0 = arith.constant 0 : i32
    %c0_i32_1 = arith.constant 0 : i32
    return %arg0, %c0_i32, %c0_i32_0 : i32, i32, i32
  }
  func.func @transform_1(%arg0: i32) -> (i32, i32) {
    %c0_i32 = arith.constant 0 : i32
    %c0_i32_0 = arith.constant 0 : i32
    %c0_i32_1 = arith.constant 0 : i32
    return %c0_i32, %c0_i32_0 : i32, i32
  }
  func.func @transform_2(%arg0: i32) -> (i32, i32, i32) {
    %c0_i32 = arith.constant 0 : i32
    %c0_i32_0 = arith.constant 0 : i32
    %c0_i32_1 = arith.constant 0 : i32
    %c0_i32_2 = arith.constant 0 : i32
    return %c0_i32, %c0_i32_0, %c0_i32_1 : i32, i32, i32
  }
  func.func @transform_3(%arg0: i32) -> (i32, i32) {
    %c0_i32 = arith.constant 0 : i32
    %c0_i32_0 = arith.constant 0 : i32
    %c0_i32_1 = arith.constant 0 : i32
    return %c0_i32, %c0_i32_0 : i32, i32
  }
  func.func @transform_4(%arg0: i32) -> (i32, i32) {
    %c0_i32 = arith.constant 0 : i32
    %c0_i32_0 = arith.constant 0 : i32
    %c0_i32_1 = arith.constant 0 : i32
    return %c0_i32, %c0_i32_0 : i32, i32
  }
  func.func @transform_5(%arg0: i32) -> (i32, i32, i32) {
    %c0_i32 = arith.constant 0 : i32
    %c0_i32_0 = arith.constant 0 : i32
    %c0_i32_1 = arith.constant 0 : i32
    %c0_i32_2 = arith.constant 0 : i32
    return %c0_i32, %c0_i32_0, %c0_i32_1 : i32, i32, i32
  }
  func.func @transform_6(%arg0: i32) -> (i32, i32) {
    %c0_i32 = arith.constant 0 : i32
    %c0_i32_0 = arith.constant 0 : i32
    %c0_i32_1 = arith.constant 0 : i32
    return %c0_i32, %c0_i32_0 : i32, i32
  }
  func.func @transform_7(%arg0: i32) -> (i32, i32) {
    %c0_i32 = arith.constant 0 : i32
    %c0_i32_0 = arith.constant 0 : i32
    %c0_i32_1 = arith.constant 0 : i32
    return %c0_i32, %c0_i32_0 : i32, i32
  }
  func.func @transform_8(%arg0: i32) -> (i32, i32, i32) {
    %c0_i32 = arith.constant 0 : i32
    %c0_i32_0 = arith.constant 0 : i32
    %c0_i32_1 = arith.constant 0 : i32
    return %arg0, %c0_i32, %c0_i32_0 : i32, i32, i32
  }
}

</mosaic_0001>

<llo_original>
// kernel: tpu_custom_call.1
$region0: #{tpu_custom_call.1}
  #allocation0 [shape = 'u32[]', space=smem, size = 0x4, offset = 0x4, fixed_abs, tag = 'smem constant byte address 0x4 - core index']
  #allocation1 [shape = 'u32[72,128]{1,0:T(1,128)}', space=vmem, size = 0x9000, scoped, tag = 'internal scratch']
  %s0 = inlined_call_operand.vmem [shape: f32[2,324,128], index: 0, kind: input, shape index: {}]
  %s1 = inlined_call_operand.vmem [shape: f32[324,1], index: 1, kind: input, shape index: {}]
  %s2 = inlined_call_operand.vmem [shape: bf16[9,128,128], index: 2, kind: input, shape index: {}]
  %s3 = inlined_call_operand.vmem [shape: f32[1,128], index: 3, kind: input, shape index: {}]
  %s4 = inlined_call_operand.vmem [shape: f32[1,128], index: 4, kind: input, shape index: {}]
  %s5 = inlined_call_operand.vmem [shape: bf16[9,128,128], index: 5, kind: input, shape index: {}]
  %s6 = inlined_call_operand.vmem [shape: f32[1,128], index: 6, kind: input, shape index: {}]
  %s7 = inlined_call_operand.vmem [shape: f32[1,128], index: 7, kind: input, shape index: {}]
  %s8 = inlined_call_operand.vmem [shape: f32[2,324,128], index: 8, kind: output, shape index: {}]
  %s9 = sld [smem:[#allocation0]]
  $region65: #{tpu_custom_call.1} parent=0
    _
  %s11 = ssub.s32 1, %s9
  %s12 = scalar_select 0, %s11, %s9
  loop: start=0, step=1, limit=4
  $region2: #{tpu_custom_call.1} parent=0 // loop_pre_header
    _
  $region3: #{tpu_custom_call.1} parent=0 // loop_header
    %s14 = sphi 0, %s18
    %p15 = scmp.ge.s32.totalorder %s14, 4
    %s24 = sphi 0, %s26
    %s27 = sphi 0, %s24
    %s28 = sphi 0, %s27
    %s44 = sphi 0, %s28
    %s48 = sphi 0, %s48
    %s50 = sphi 0, %s48
    %s51 = sphi 0, %s50
    %s65 = sphi 0, %s51
    %s69 = sphi 0, %s69
    %s71 = sphi 0, %s69
    %s72 = sphi 0, %s71
    %s86 = sphi 0, %s72
    %s90 = sphi 0, %s90
    %s92 = sphi 0, %s90
    %s93 = sphi 0, %s92
    %s107 = sphi 0, %s93
    %s111 = sphi 0, %s111
    %s113 = sphi 0, %s111
    %s114 = sphi 0, %s113
    %s128 = sphi 0, %s114
    %s132 = sphi 0, %s132
    %s134 = sphi 0, %s132
    %s135 = sphi 0, %s134
    %s149 = sphi 0, %s135
    %s153 = sphi 0, %s153
    %s155 = sphi 0, %s153
    %s156 = sphi 0, %s155
    %s170 = sphi 0, %s156
    %s174 = sphi 0, %s174
    %s176 = sphi 0, %s174
    %s177 = sphi 0, %s176
    %s191 = sphi 0, %s177
    %s197 = sphi 0, %s199
    %s200 = sphi 0, %s197
    %s201 = sphi 0, %s200
    %s217 = sphi 0, %s201
  $region4: #{tpu_custom_call.1} parent=0 // loop_header_branch
    %17 = sbr.rel (%p15) target = $region8
  $region5: #{tpu_custom_call.1} parent=0 // loop_body
    %s19 = ssub.s32 %s14, 1
    %s20 = ssub.s32 %s14, 2
    %s21 = sadd.s32 %s14, 1
    %s22 = ssub.s32 %s14, %s21
    %p23 = scmp.eq.s32.totalorder %s22, 0
    %s25 = sadd.s32 %s24, 1
    %s26 = scalar_select %p23, %s24, %s25
    %p29 = pneg %p23
    %p30 = scmp.eq.s32.totalorder %s14, 1
    %p31 = por %p29, %p30
    %p32 = scmp.ne.s32.totalorder %s24, %s27
    %p33 = scmp.eq.s32.totalorder %s14, 0
    %p34 = por %p32, %p33
    %p35 = scmp.ne.s32.totalorder %s24, %s27
    %p36 = scmp.eq.s32.totalorder %s19, 1
    %p37 = por %p35, %p36
    %p38 = scmp.ne.s32.totalorder %s27, %s28
    %p39 = scmp.eq.s32.totalorder %s19, 0
    %p40 = por %p38, %p39
    %p41 = scmp.ne.s32.totalorder %s27, %s28
    %p42 = scmp.eq.s32.totalorder %s20, 1
    %p43 = por %p41, %p42
    %p45 = scmp.ne.s32.totalorder %s28, %s44
    %p46 = scmp.eq.s32.totalorder %s20, 0
    %p47 = por %p45, %p46
    %s49 = sadd.s32 %s48, 1
    %p52 = scmp.eq.s32.totalorder %s14, 1
    %p53 = scmp.ne.s32.totalorder %s48, %s50
    %p54 = scmp.eq.s32.totalorder %s14, 0
    %p55 = por %p53, %p54
    %p56 = scmp.ne.s32.totalorder %s48, %s50
    %p57 = scmp.eq.s32.totalorder %s19, 1
    %p58 = por %p56, %p57
    %p59 = scmp.ne.s32.totalorder %s50, %s51
    %p60 = scmp.eq.s32.totalorder %s19, 0
    %p61 = por %p59, %p60
    %p62 = scmp.ne.s32.totalorder %s50, %s51
    %p63 = scmp.eq.s32.totalorder %s20, 1
    %p64 = por %p62, %p63
    %p66 = scmp.ne.s32.totalorder %s51, %s65
    %p67 = scmp.eq.s32.totalorder %s20, 0
    %p68 = por %p66, %p67
    %s70 = sadd.s32 %s69, 1
    %p73 = scmp.eq.s32.totalorder %s14, 1
    %p74 = scmp.ne.s32.totalorder %s69, %s71
    %p75 = scmp.eq.s32.totalorder %s14, 0
    %p76 = por %p74, %p75
    %p77 = scmp.ne.s32.totalorder %s69, %s71
    %p78 = scmp.eq.s32.totalorder %s19, 1
    %p79 = por %p77, %p78
    %p80 = scmp.ne.s32.totalorder %s71, %s72
    %p81 = scmp.eq.s32.totalorder %s19, 0
    %p82 = por %p80, %p81
    %p83 = scmp.ne.s32.totalorder %s71, %s72
    %p84 = scmp.eq.s32.totalorder %s20, 1
    %p85 = por %p83, %p84
    %p87 = scmp.ne.s32.totalorder %s72, %s86
    %p88 = scmp.eq.s32.totalorder %s20, 0
    %p89 = por %p87, %p88
    %s91 = sadd.s32 %s90, 1
    %p94 = scmp.eq.s32.totalorder %s14, 1
    %p95 = scmp.ne.s32.totalorder %s90, %s92
    %p96 = scmp.eq.s32.totalorder %s14, 0
    %p97 = por %p95, %p96
    %p98 = scmp.ne.s32.totalorder %s90, %s92
    %p99 = scmp.eq.s32.totalorder %s19, 1
    %p100 = por %p98, %p99
    %p101 = scmp.ne.s32.totalorder %s92, %s93
    %p102 = scmp.eq.s32.totalorder %s19, 0
    %p103 = por %p101, %p102
    %p104 = scmp.ne.s32.totalorder %s92, %s93
    %p105 = scmp.eq.s32.totalorder %s20, 1
    %p106 = por %p104, %p105
    %p108 = scmp.ne.s32.totalorder %s93, %s107
    %p109 = scmp.eq.s32.totalorder %s20, 0
    %p110 = por %p108, %p109
    %s112 = sadd.s32 %s111, 1
    %p115 = scmp.eq.s32.totalorder %s14, 1
    %p116 = scmp.ne.s32.totalorder %s111, %s113
    %p117 = scmp.eq.s32.totalorder %s14, 0
    %p118 = por %p116, %p117
    %p119 = scmp.ne.s32.totalorder %s111, %s113
    %p120 = scmp.eq.s32.totalorder %s19, 1
    %p121 = por %p119, %p120
    %p122 = scmp.ne.s32.totalorder %s113, %s114
    %p123 = scmp.eq.s32.totalorder %s19, 0
    %p124 = por %p122, %p123
    %p125 = scmp.ne.s32.totalorder %s113, %s114
    %p126 = scmp.eq.s32.totalorder %s20, 1
    %p127 = por %p125, %p126
    %p129 = scmp.ne.s32.totalorder %s114, %s128
    %p130 = scmp.eq.s32.totalorder %s20, 0
    %p131 = por %p129, %p130
    %s133 = sadd.s32 %s132, 1
    %p136 = scmp.eq.s32.totalorder %s14, 1
    %p137 = scmp.ne.s32.totalorder %s132, %s134
    %p138 = scmp.eq.s32.totalorder %s14, 0
    %p139 = por %p137, %p138
    %p140 = scmp.ne.s32.totalorder %s132, %s134
    %p141 = scmp.eq.s32.totalorder %s19, 1
    %p142 = por %p140, %p141
    %p143 = scmp.ne.s32.totalorder %s134, %s135
    %p144 = scmp.eq.s32.totalorder %s19, 0
    %p145 = por %p143, %p144
    %p146 = scmp.ne.s32.totalorder %s134, %s135
    %p147 = scmp.eq.s32.totalorder %s20, 1
    %p148 = por %p146, %p147
    %p150 = scmp.ne.s32.totalorder %s135, %s149
    %p151 = scmp.eq.s32.totalorder %s20, 0
    %p152 = por %p150, %p151
    %s154 = sadd.s32 %s153, 1
    %p157 = scmp.eq.s32.totalorder %s14, 1
    %p158 = scmp.ne.s32.totalorder %s153, %s155
    %p159 = scmp.eq.s32.totalorder %s14, 0
    %p160 = por %p158, %p159
    %p161 = scmp.ne.s32.totalorder %s153, %s155
    %p162 = scmp.eq.s32.totalorder %s19, 1
    %p163 = por %p161, %p162
    %p164 = scmp.ne.s32.totalorder %s155, %s156
    %p165 = scmp.eq.s32.totalorder %s19, 0
    %p166 = por %p164, %p165
    %p167 = scmp.ne.s32.totalorder %s155, %s156
    %p168 = scmp.eq.s32.totalorder %s20, 1
    %p169 = por %p167, %p168
    %p171 = scmp.ne.s32.totalorder %s156, %s170
    %p172 = scmp.eq.s32.totalorder %s20, 0
    %p173 = por %p171, %p172
    %s175 = sadd.s32 %s174, 1
    %p178 = scmp.eq.s32.totalorder %s14, 1
    %p179 = scmp.ne.s32.totalorder %s174, %s176
    %p180 = scmp.eq.s32.totalorder %s14, 0
    %p181 = por %p179, %p180
    %p182 = scmp.ne.s32.totalorder %s174, %s176
    %p183 = scmp.eq.s32.totalorder %s19, 1
    %p184 = por %p182, %p183
    %p185 = scmp.ne.s32.totalorder %s176, %s177
    %p186 = scmp.eq.s32.totalorder %s19, 0
    %p187 = por %p185, %p186
    %p188 = scmp.ne.s32.totalorder %s176, %s177
    %p189 = scmp.eq.s32.totalorder %s20, 1
    %p190 = por %p188, %p189
    %p192 = scmp.ne.s32.totalorder %s177, %s191
    %p193 = scmp.eq.s32.totalorder %s20, 0
    %p194 = por %p192, %p193
    %s195 = ssub.s32 %s14, %s21
    %p196 = scmp.eq.s32.totalorder %s195, 0
    %s198 = sadd.s32 %s197, 1
    %s199 = scalar_select %p196, %s197, %s198
    %p202 = pneg %p196
    %p203 = scmp.eq.s32.totalorder %s14, 1
    %p204 = por %p202, %p203
    %p205 = scmp.ne.s32.totalorder %s197, %s200
    %p206 = scmp.eq.s32.totalorder %s14, 0
    %p207 = por %p205, %p206
    %p208 = scmp.ne.s32.totalorder %s197, %s200
    %p209 = scmp.eq.s32.totalorder %s19, 1
    %p210 = por %p208, %p209
    %p211 = scmp.ne.s32.totalorder %s200, %s201
    %p212 = scmp.eq.s32.totalorder %s19, 0
    %p213 = por %p211, %p212
    %p214 = scmp.ne.s32.totalorder %s200, %s201
    %p215 = scmp.eq.s32.totalorder %s20, 1
    %p216 = por %p214, %p215
    %p218 = scmp.ne.s32.totalorder %s201, %s217
    %p219 = scmp.eq.s32.totalorder %s20, 0
    %p220 = por %p218, %p219
    %p221 = scmp.le.s32.totalorder 1, %s14
    %p222 = scmp.lt.s32.totalorder %s14, 3
    %p223 = pnand %p221, %p222
    %p224 = pneg %p223
    // Predicated region
    $region9: #{tpu_custom_call.1} parent=5 // pred_check
      _
    $region10: #{tpu_custom_call.1} parent=5 // pred_check_branch
      %226 = sbr.rel (%p223) target = $region12
    $region11: #{tpu_custom_call.1} parent=5 // pred_region
      %s227 = ssub.s32 %s14, 1
      // Predicated region
      $region13: #{tpu_custom_call.1} parent=11 // pred_check
        %p228 = pneg %p61
      $region14: #{tpu_custom_call.1} parent=11 // pred_check_branch
        %230 = sbr.rel (%p228) target = $region16
      $region15: #{tpu_custom_call.1} parent=11 // pred_region
        _
      $region16: #{tpu_custom_call.1} parent=11 // pred_fallthru
        _
      // Predicated region
      $region17: #{tpu_custom_call.1} parent=11 // pred_check
        %p231 = pneg %p82
      $region18: #{tpu_custom_call.1} parent=11 // pred_check_branch
        %233 = sbr.rel (%p231) target = $region20
      $region19: #{tpu_custom_call.1} parent=11 // pred_region
        _
      $region20: #{tpu_custom_call.1} parent=11 // pred_fallthru
        _
      // Predicated region
      $region21: #{tpu_custom_call.1} parent=11 // pred_check
        %p234 = pneg %p103
      $region22: #{tpu_custom_call.1} parent=11 // pred_check_branch
        %236 = sbr.rel (%p234) target = $region24
      $region23: #{tpu_custom_call.1} parent=11 // pred_region
        _
      $region24: #{tpu_custom_call.1} parent=11 // pred_fallthru
        _
      // Predicated region
      $region25: #{tpu_custom_call.1} parent=11 // pred_check
        %p237 = pneg %p124
      $region26: #{tpu_custom_call.1} parent=11 // pred_check_branch
        %239 = sbr.rel (%p237) target = $region28
      $region27: #{tpu_custom_call.1} parent=11 // pred_region
        _
      $region28: #{tpu_custom_call.1} parent=11 // pred_fallthru
        _
      // Predicated region
      $region29: #{tpu_custom_call.1} parent=11 // pred_check
        %p240 = pneg %p145
      $region30: #{tpu_custom_call.1} parent=11 // pred_check_branch
        %242 = sbr.rel (%p240) target = $region32
      $region31: #{tpu_custom_call.1} parent=11 // pred_region
        _
      $region32: #{tpu_custom_call.1} parent=11 // pred_fallthru
        _
      // Predicated region
      $region33: #{tpu_custom_call.1} parent=11 // pred_check
        %p243 = pneg %p166
      $region34: #{tpu_custom_call.1} parent=11 // pred_check_branch
        %245 = sbr.rel (%p243) target = $region36
      $region35: #{tpu_custom_call.1} parent=11 // pred_region
        _
      $region36: #{tpu_custom_call.1} parent=11 // pred_fallthru
        _
      // Predicated region
      $region37: #{tpu_custom_call.1} parent=11 // pred_check
        %p246 = pneg %p187
      $region38: #{tpu_custom_call.1} parent=11 // pred_check_branch
        %248 = sbr.rel (%p246) target = $region40
      $region39: #{tpu_custom_call.1} parent=11 // pred_region
        _
      $region40: #{tpu_custom_call.1} parent=11 // pred_fallthru
        _
    $region12: #{tpu_custom_call.1} parent=5 // pred_fallthru
      _
    %p249 = scmp.lt.s32.totalorder %s14, 2
    // Predicated region
    $region41: #{tpu_custom_call.1} parent=5 // pred_check
      %p250 = pneg %p249
    $region42: #{tpu_custom_call.1} parent=5 // pred_check_branch
      %252 = sbr.rel (%p250) target = $region44
    $region43: #{tpu_custom_call.1} parent=5 // pred_region
      // Predicated region
      $region45: #{tpu_custom_call.1} parent=43 // pred_check
        %p253 = pneg %p34
      $region46: #{tpu_custom_call.1} parent=43 // pred_check_branch
        %255 = sbr.rel (%p253) target = $region48
      $region47: #{tpu_custom_call.1} parent=43 // pred_region
        %p256 = scmp.lt.s32.totalorder %s14, 1
        %s257 = scalar_select %p256, %s14, 1
        %s258 = smul.addr %s257, 41
        %s259 = smul.addr %s258, 8
        %s260 = scalar_lea.vmem %s0, %s259
      $region48: #{tpu_custom_call.1} parent=43 // pred_fallthru
        _
    $region44: #{tpu_custom_call.1} parent=5 // pred_fallthru
      _
    %p261 = scmp.le.s32.totalorder 1, %s14
    %p262 = scmp.lt.s32.totalorder %s14, 3
    %p263 = pnand %p261, %p262
    %p264 = pneg %p263
    // Predicated region
    $region49: #{tpu_custom_call.1} parent=5 // pred_check
      _
    $region50: #{tpu_custom_call.1} parent=5 // pred_check_branch
      %266 = sbr.rel (%p263) target = $region52
    $region51: #{tpu_custom_call.1} parent=5 // pred_region
      %s267 = ssub.s32 %s14, 1
      %p268 = scmp.lt.s32.totalorder %s19, 1
      %s269 = scalar_select %p268, %s19, 1
      %s270 = smul.addr %s269, 41
      %s271 = smul.addr %s270, 8
      %s272 = scalar_lea.vmem %s0, %s271
      %p273 = pneg %p40
      %p274 = pneg %p37
      %p275 = pneg %p61
      %p276 = pneg %p58
      %p277 = pneg %p82
      %p278 = pneg %p79
      %p279 = pneg %p103
      %p280 = pneg %p100
      %p281 = pneg %p124
      %p282 = pneg %p121
      %p283 = pneg %p145
      %p284 = pneg %p142
      %p285 = pneg %p166
      %p286 = pneg %p163
      %p287 = pneg %p187
      %p288 = pneg %p184
      %p289 = pneg %p213
      %p290 = pneg %p210
      %p291 = scmp.lt.s32.totalorder %s19, 1
      %s292 = scalar_select %p291, %s19, 1
      %s293 = smul.addr %s292, 41
      %s294 = smul.addr %s293, 8
      %s295 = scalar_lea.vmem %s8, %s294
      %p296 = scmp.lt.s32.totalorder %s19, 1
      %s297 = scalar_select %p296, %s19, 1
      %s298 = smul.addr %s297, 41
      %s299 = smul.addr %s298, 8
      %s300 = scalar_lea.vmem %s0, %s299
      %p301 = scmp.lt.s32.totalorder %s19, 1
      %s302 = scalar_select %p301, %s19, 1
      %s303 = smul.addr %s302, 41
      %s304 = smul.addr %s303, 8
      %s305 = scalar_lea.vmem %s8, %s304
      %v307 = vld [vmem:[%s300] sm:$0xff]
      %v308 = vld [vmem:[%s300 + $0x8] sm:$0xff]
      %v309 = vld [vmem:[%s300 + $0x10] sm:$0xff]
      %v310 = vld [vmem:[%s300 + $0x18] sm:$0xff]
      %v311 = vld [vmem:[%s300 + $0x20] sm:$0xff]
      %v312 = vld [vmem:[%s300 + $0x28] sm:$0xff]
      %v313 = vld [vmem:[%s300 + $0x30] sm:$0xff]
      %v314 = vld [vmem:[%s300 + $0x38] sm:$0xff]
      %v315 = vld [vmem:[%s300 + $0x40] sm:$0xff]
      %v316 = vld [vmem:[%s300 + $0x48] sm:$0xff]
      %v317 = vld [vmem:[%s300 + $0x50] sm:$0xff]
      %v318 = vld [vmem:[%s300 + $0x58] sm:$0xff]
      %v319 = vld [vmem:[%s300 + $0x60] sm:$0xff]
      %v320 = vld [vmem:[%s300 + $0x68] sm:$0xff]
      %v321 = vld [vmem:[%s300 + $0x70] sm:$0xff]
      %v322 = vld [vmem:[%s300 + $0x78] sm:$0xff]
      %v323 = vld [vmem:[%s300 + $0x80] sm:$0xff]
      %v324 = vld [vmem:[%s300 + $0x88] sm:$0xff]
      %v325 = vld [vmem:[%s300 + $0x90] sm:$0xff]
      %v326 = vld [vmem:[%s300 + $0x98] sm:$0xff]
      %v327 = vld [vmem:[%s300 + $0xa0] sm:$0xff]
      %v328 = vld [vmem:[%s300 + $0xa8] sm:$0xff]
      %v329 = vld [vmem:[%s300 + $0xb0] sm:$0xff]
      %v330 = vld [vmem:[%s300 + $0xb8] sm:$0xff]
      %v331 = vld [vmem:[%s300 + $0xc0] sm:$0xff]
      %v332 = vld [vmem:[%s300 + $0xc8] sm:$0xff]
      %v333 = vld [vmem:[%s300 + $0xd0] sm:$0xff]
      %v334 = vld [vmem:[%s300 + $0xd8] sm:$0xff]
      %v335 = vld [vmem:[%s300 + $0xe0] sm:$0xff]
      %v336 = vld [vmem:[%s300 + $0xe8] sm:$0xff]
      %v337 = vld [vmem:[%s300 + $0xf0] sm:$0xff]
      %v338 = vld [vmem:[%s300 + $0xf8] sm:$0xff]
      %v339 = vld [vmem:[%s300 + $0x100] sm:$0xff]
      %v340 = vld [vmem:[%s300 + $0x108] sm:$0xff]
      %v341 = vld [vmem:[%s300 + $0x110] sm:$0xff]
      %v342 = vld [vmem:[%s300 + $0x118] sm:$0xff]
      %v343 = vld [vmem:[%s300 + $0x120] sm:$0xff]
      %v344 = vld [vmem:[%s300 + $0x128] sm:$0xff]
      %v345 = vld [vmem:[%s300 + $0x130] sm:$0xff]
      %v346 = vld [vmem:[%s300 + $0x138] sm:$0xff]
      %v347 = vld [vmem:[%s300 + $0x140] sm:$0xf]
      %v348 = vld [vmem:[%s1] sm:$0xff]
      %v349 = vld [vmem:[%s1 + $0x8] sm:$0xff]
      %v350 = vld [vmem:[%s1 + $0x10] sm:$0xff]
      %v351 = vld [vmem:[%s1 + $0x18] sm:$0xff]
      %v352 = vld [vmem:[%s1 + $0x20] sm:$0xff]
      %v353 = vld [vmem:[%s1 + $0x28] sm:$0xff]
      %v354 = vld [vmem:[%s1 + $0x30] sm:$0xff]
      %v355 = vld [vmem:[%s1 + $0x38] sm:$0xff]
      %v356 = vld [vmem:[%s1 + $0x40] sm:$0xff]
      %v357 = vld [vmem:[%s1 + $0x48] sm:$0xff]
      %v358 = vld [vmem:[%s1 + $0x50] sm:$0xff]
      %v359 = vld [vmem:[%s1 + $0x58] sm:$0xff]
      %v360 = vld [vmem:[%s1 + $0x60] sm:$0xff]
      %v361 = vld [vmem:[%s1 + $0x68] sm:$0xff]
      %v362 = vld [vmem:[%s1 + $0x70] sm:$0xff]
      %v363 = vld [vmem:[%s1 + $0x78] sm:$0xff]
      %v364 = vld [vmem:[%s1 + $0x80] sm:$0xff]
      %v365 = vld [vmem:[%s1 + $0x88] sm:$0xff]
      %v366 = vld [vmem:[%s1 + $0x90] sm:$0xff]
      %v367 = vld [vmem:[%s1 + $0x98] sm:$0xff]
      %v368 = vld [vmem:[%s1 + $0xa0] sm:$0xff]
      %v369 = vld [vmem:[%s1 + $0xa8] sm:$0xff]
      %v370 = vld [vmem:[%s1 + $0xb0] sm:$0xff]
      %v371 = vld [vmem:[%s1 + $0xb8] sm:$0xff]
      %v372 = vld [vmem:[%s1 + $0xc0] sm:$0xff]
      %v373 = vld [vmem:[%s1 + $0xc8] sm:$0xff]
      %v374 = vld [vmem:[%s1 + $0xd0] sm:$0xff]
      %v375 = vld [vmem:[%s1 + $0xd8] sm:$0xff]
      %v376 = vld [vmem:[%s1 + $0xe0] sm:$0xff]
      %v377 = vld [vmem:[%s1 + $0xe8] sm:$0xff]
      %v378 = vld [vmem:[%s1 + $0xf0] sm:$0xff]
      %v379 = vld [vmem:[%s1 + $0xf8] sm:$0xff]
      %v380 = vld [vmem:[%s1 + $0x100] sm:$0xff]
      %v381 = vld [vmem:[%s1 + $0x108] sm:$0xff]
      %v382 = vld [vmem:[%s1 + $0x110] sm:$0xff]
      %v383 = vld [vmem:[%s1 + $0x118] sm:$0xff]
      %v384 = vld [vmem:[%s1 + $0x120] sm:$0xff]
      %v385 = vld [vmem:[%s1 + $0x128] sm:$0xff]
      %v386 = vld [vmem:[%s1 + $0x130] sm:$0xff]
      %v387 = vld [vmem:[%s1 + $0x138] sm:$0xff]
      %v388 = vld [vmem:[%s1 + $0x140] sm:$0xf]
      %v389 = vpack.c.bf16 %v307, %v307
      %v390 = vpack.c.bf16 %v308, %v308
      %v391 = vpack.c.bf16 %v309, %v309
      %v392 = vpack.c.bf16 %v310, %v310
      %v393 = vpack.c.bf16 %v311, %v311
      %v394 = vpack.c.bf16 %v312, %v312
      %v395 = vpack.c.bf16 %v313, %v313
      %v396 = vpack.c.bf16 %v314, %v314
      %v397 = vpack.c.bf16 %v315, %v315
      %v398 = vpack.c.bf16 %v316, %v316
      %v399 = vpack.c.bf16 %v317, %v317
      %v400 = vpack.c.bf16 %v318, %v318
      %v401 = vpack.c.bf16 %v319, %v319
      %v402 = vpack.c.bf16 %v320, %v320
      %v403 = vpack.c.bf16 %v321, %v321
      %v404 = vpack.c.bf16 %v322, %v322
      %v405 = vpack.c.bf16 %v323, %v323
      %v406 = vpack.c.bf16 %v324, %v324
      %v407 = vpack.c.bf16 %v325, %v325
      %v408 = vpack.c.bf16 %v326, %v326
      %v409 = vpack.c.bf16 %v327, %v327
      %v410 = vpack.c.bf16 %v328, %v328
      %v411 = vpack.c.bf16 %v329, %v329
      %v412 = vpack.c.bf16 %v330, %v330
      %v413 = vpack.c.bf16 %v331, %v331
      %v414 = vpack.c.bf16 %v332, %v332
      %v415 = vpack.c.bf16 %v333, %v333
      %v416 = vpack.c.bf16 %v334, %v334
      %v417 = vpack.c.bf16 %v335, %v335
      %v418 = vpack.c.bf16 %v336, %v336
      %v419 = vpack.c.bf16 %v337, %v337
      %v420 = vpack.c.bf16 %v338, %v338
      %v421 = vpack.c.bf16 %v339, %v339
      %v422 = vpack.c.bf16 %v340, %v340
      %v423 = vpack.c.bf16 %v341, %v341
      %v424 = vpack.c.bf16 %v342, %v342
      %v425 = vpack.c.bf16 %v343, %v343
      %v426 = vpack.c.bf16 %v344, %v344
      %v427 = vpack.c.bf16 %v345, %v345
      %v428 = vpack.c.bf16 %v346, %v346
      %v429 = vpack.c.bf16 %v347, %v347
      %v471 = vunpack.c.l.b16 %v389
      %v472 = vunpack.c.l.b16 %v390
      %v473 = vunpack.c.l.b16 %v391
      %v474 = vunpack.c.l.b16 %v392
      %v475 = vunpack.c.l.b16 %v393
      %v476 = vunpack.c.l.b16 %v394
      %v477 = vunpack.c.l.b16 %v395
      %v478 = vunpack.c.l.b16 %v396
      %v479 = vunpack.c.l.b16 %v397
      %v480 = vunpack.c.l.b16 %v398
      %v481 = vunpack.c.l.b16 %v399
      %v482 = vunpack.c.l.b16 %v400
      %v483 = vunpack.c.l.b16 %v401
      %v484 = vunpack.c.l.b16 %v402
      %v485 = vunpack.c.l.b16 %v403
      %v486 = vunpack.c.l.b16 %v404
      %v487 = vunpack.c.l.b16 %v405
      %v488 = vunpack.c.l.b16 %v406
      %v489 = vunpack.c.l.b16 %v407
      %v490 = vunpack.c.l.b16 %v408
      %v491 = vunpack.c.l.b16 %v409
      %v492 = vunpack.c.l.b16 %v410
      %v493 = vunpack.c.l.b16 %v411
      %v494 = vunpack.c.l.b16 %v412
      %v495 = vunpack.c.l.b16 %v413
      %v496 = vunpack.c.l.b16 %v414
      %v497 = vunpack.c.l.b16 %v415
      %v498 = vunpack.c.l.b16 %v416
      %v499 = vunpack.c.l.b16 %v417
      %v500 = vunpack.c.l.b16 %v418
      %v501 = vunpack.c.l.b16 %v419
      %v502 = vunpack.c.l.b16 %v420
      %v503 = vunpack.c.l.b16 %v421
      %v504 = vunpack.c.l.b16 %v422
      %v505 = vunpack.c.l.b16 %v423
      %v506 = vunpack.c.l.b16 %v424
      %v507 = vunpack.c.l.b16 %v425
      %v508 = vunpack.c.l.b16 %v426
      %v509 = vunpack.c.l.b16 %v427
      %v510 = vunpack.c.l.b16 %v428
      %v511 = vunpack.c.l.b16 %v429
      %v512 = vpack.c.b16 %v472, %v471
      %v513 = vpack.c.b16 %v474, %v473
      %v514 = vpack.c.b16 %v476, %v475
      %v515 = vpack.c.b16 %v478, %v477
      %v516 = vpack.c.b16 %v480, %v479
      %v517 = vpack.c.b16 %v482, %v481
      %v518 = vpack.c.b16 %v484, %v483
      %v519 = vpack.c.b16 %v486, %v485
      %v520 = vpack.c.b16 %v488, %v487
      %v521 = vpack.c.b16 %v490, %v489
      %v522 = vpack.c.b16 %v492, %v491
      %v523 = vpack.c.b16 %v494, %v493
      %v524 = vpack.c.b16 %v496, %v495
      %v525 = vpack.c.b16 %v498, %v497
      %v526 = vpack.c.b16 %v500, %v499
      %v527 = vpack.c.b16 %v502, %v501
      %v528 = vpack.c.b16 %v504, %v503
      %v529 = vpack.c.b16 %v506, %v505
      %v530 = vpack.c.b16 %v508, %v507
      %v531 = vpack.c.b16 %v510, %v509
      %v532 = vpack.c.b16 %v511, %v511
      %vm533 = vsmask.f32 1280
      %v535 = vshrl.u32 %v512, 16
      %v537 = vrot.slane %v535, 6
      %v538 = vshll.u32 %v512, 16
      %v540 = vrot.slane %v538, 7
      %v541 = vor.u32 %v537, %v540
      %v543 = vshrl.u32 %v513, 16
      %v545 = vrot.slane %v543, 6
      %v546 = vshll.u32 %v513, 16
      %v548 = vrot.slane %v546, 7
      %v549 = vor.u32 %v545, %v548
      %v550 = vsel %vm533, %v541, %v549
      %v552 = vshrl.u32 %v514, 16
      %v554 = vrot.slane %v552, 6
      %v555 = vshll.u32 %v514, 16
      %v557 = vrot.slane %v555, 7
      %v558 = vor.u32 %v554, %v557
      %v559 = vsel %vm533, %v549, %v558
      %v561 = vshrl.u32 %v515, 16
      %v563 = vrot.slane %v561, 6
      %v564 = vshll.u32 %v515, 16
      %v566 = vrot.slane %v564, 7
      %v567 = vor.u32 %v563, %v566
      %v568 = vsel %vm533, %v558, %v567
      %v570 = vshrl.u32 %v516, 16
      %v572 = vrot.slane %v570, 6
      %v573 = vshll.u32 %v516, 16
      %v575 = vrot.slane %v573, 7
      %v576 = vor.u32 %v572, %v575
      %v577 = vsel %vm533, %v567, %v576
      %v579 = vshrl.u32 %v517, 16
      %v581 = vrot.slane %v579, 6
      %v582 = vshll.u32 %v517, 16
      %v584 = vrot.slane %v582, 7
      %v585 = vor.u32 %v581, %v584
      %v586 = vsel %vm533, %v576, %v585
      %v588 = vshrl.u32 %v518, 16
      %v590 = vrot.slane %v588, 6
      %v591 = vshll.u32 %v518, 16
      %v593 = vrot.slane %v591, 7
      %v594 = vor.u32 %v590, %v593
      %v595 = vsel %vm533, %v585, %v594
      %v597 = vshrl.u32 %v519, 16
      %v599 = vrot.slane %v597, 6
      %v600 = vshll.u32 %v519, 16
      %v602 = vrot.slane %v600, 7
      %v603 = vor.u32 %v599, %v602
      %v604 = vsel %vm533, %v594, %v603
      %v606 = vshrl.u32 %v520, 16
      %v608 = vrot.slane %v606, 6
      %v609 = vshll.u32 %v520, 16
      %v611 = vrot.slane %v609, 7
      %v612 = vor.u32 %v608, %v611
      %v613 = vsel %vm533, %v603, %v612
      %v615 = vshrl.u32 %v521, 16
      %v617 = vrot.slane %v615, 6
      %v618 = vshll.u32 %v521, 16
      %v620 = vrot.slane %v618, 7
      %v621 = vor.u32 %v617, %v620
      %v622 = vsel %vm533, %v612, %v621
      %v624 = vshrl.u32 %v522, 16
      %v626 = vrot.slane %v624, 6
      %v627 = vshll.u32 %v522, 16
      %v629 = vrot.slane %v627, 7
      %v630 = vor.u32 %v626, %v629
      %v631 = vsel %vm533, %v621, %v630
      %v633 = vshrl.u32 %v523, 16
      %v635 = vrot.slane %v633, 6
      %v636 = vshll.u32 %v523, 16
      %v638 = vrot.slane %v636, 7
      %v639 = vor.u32 %v635, %v638
      %v640 = vsel %vm533, %v630, %v639
      %v642 = vshrl.u32 %v524, 16
      %v644 = vrot.slane %v642, 6
      %v645 = vshll.u32 %v524, 16
      %v647 = vrot.slane %v645, 7
      %v648 = vor.u32 %v644, %v647
      %v649 = vsel %vm533, %v639, %v648
      %v651 = vshrl.u32 %v525, 16
      %v653 = vrot.slane %v651, 6
      %v654 = vshll.u32 %v525, 16
      %v656 = vrot.slane %v654, 7
      %v657 = vor.u32 %v653, %v656
      %v658 = vsel %vm533, %v648, %v657
      %v660 = vshrl.u32 %v526, 16
      %v662 = vrot.slane %v660, 6
      %v663 = vshll.u32 %v526, 16
      %v665 = vrot.slane %v663, 7
      %v666 = vor.u32 %v662, %v665
      %v667 = vsel %vm533, %v657, %v666
      %v669 = vshrl.u32 %v527, 16
      %v671 = vrot.slane %v669, 6
      %v672 = vshll.u32 %v527, 16
      %v674 = vrot.slane %v672, 7
      %v675 = vor.u32 %v671, %v674
      %v676 = vsel %vm533, %v666, %v675
      %v678 = vshrl.u32 %v528, 16
      %v680 = vrot.slane %v678, 6
      %v681 = vshll.u32 %v528, 16
      %v683 = vrot.slane %v681, 7
      %v684 = vor.u32 %v680, %v683
      %v685 = vsel %vm533, %v675, %v684
      %v687 = vshrl.u32 %v529, 16
      %v689 = vrot.slane %v687, 6
      %v690 = vshll.u32 %v529, 16
      %v692 = vrot.slane %v690, 7
      %v693 = vor.u32 %v689, %v692
      %v694 = vsel %vm533, %v684, %v693
      %v696 = vshrl.u32 %v530, 16
      %v698 = vrot.slane %v696, 6
      %v699 = vshll.u32 %v530, 16
      %v701 = vrot.slane %v699, 7
      %v702 = vor.u32 %v698, %v701
      %v703 = vsel %vm533, %v693, %v702
      %v705 = vshrl.u32 %v531, 16
      %v707 = vrot.slane %v705, 6
      %v708 = vshll.u32 %v531, 16
      %v710 = vrot.slane %v708, 7
      %v711 = vor.u32 %v707, %v710
      %v712 = vsel %vm533, %v702, %v711
      %v714 = vshrl.u32 %v532, 16
      %v716 = vrot.slane %v714, 6
      %v717 = vshll.u32 %v532, 16
      %v719 = vrot.slane %v717, 7
      %v720 = vor.u32 %v716, %v719
      %v721 = vsel %vm533, %v711, %v720
      %vm743 = vcmask 1041408
      %vm744 = vmand %vm743, %vm533
      %v745 = vsel %vm744, 0, %v541
      %vm746 = vcmask 1043456
      %vm747 = vsmask.f32 3328
      %vm748 = vmand %vm746, %vm747
      %v749 = vsel %vm748, %v721, 0
      %v750 = vld [vmem:[%s2] sm:$0xf]
      %v751 = vld [vmem:[%s2 + $0x4] sm:$0xf]
      %v752 = vld [vmem:[%s2 + $0x8] sm:$0xf]
      %v753 = vld [vmem:[%s2 + $0xc] sm:$0xf]
      %v754 = vld [vmem:[%s2 + $0x10] sm:$0xf]
      %v755 = vld [vmem:[%s2 + $0x14] sm:$0xf]
      %v756 = vld [vmem:[%s2 + $0x18] sm:$0xf]
      %v757 = vld [vmem:[%s2 + $0x1c] sm:$0xf]
      %v758 = vld [vmem:[%s2 + $0x20] sm:$0xf]
      %v759 = vld [vmem:[%s2 + $0x24] sm:$0xf]
      %v760 = vld [vmem:[%s2 + $0x28] sm:$0xf]
      %v761 = vld [vmem:[%s2 + $0x2c] sm:$0xf]
      %v762 = vld [vmem:[%s2 + $0x30] sm:$0xf]
      %v763 = vld [vmem:[%s2 + $0x34] sm:$0xf]
      %v764 = vld [vmem:[%s2 + $0x38] sm:$0xf]
      %v765 = vld [vmem:[%s2 + $0x3c] sm:$0xf]
      %s766 = scalar_lea.vmem %s2, 64
      %v767 = vld [vmem:[%s766] sm:$0xf]
      %v768 = vld [vmem:[%s766 + $0x4] sm:$0xf]
      %v769 = vld [vmem:[%s766 + $0x8] sm:$0xf]
      %v770 = vld [vmem:[%s766 + $0xc] sm:$0xf]
      %v771 = vld [vmem:[%s766 + $0x10] sm:$0xf]
      %v772 = vld [vmem:[%s766 + $0x14] sm:$0xf]
      %v773 = vld [vmem:[%s766 + $0x18] sm:$0xf]
      %v774 = vld [vmem:[%s766 + $0x1c] sm:$0xf]
      %v775 = vld [vmem:[%s766 + $0x20] sm:$0xf]
      %v776 = vld [vmem:[%s766 + $0x24] sm:$0xf]
      %v777 = vld [vmem:[%s766 + $0x28] sm:$0xf]
      %v778 = vld [vmem:[%s766 + $0x2c] sm:$0xf]
      %v779 = vld [vmem:[%s766 + $0x30] sm:$0xf]
      %v780 = vld [vmem:[%s766 + $0x34] sm:$0xf]
      %v781 = vld [vmem:[%s766 + $0x38] sm:$0xf]
      %v782 = vld [vmem:[%s766 + $0x3c] sm:$0xf]
      %vm783 = vsmask.f32 7424
      %v785 = vshrl.u32 0, 16
      %v787 = vshll.u32 0, 16
      %v789 = vrot.slane %v787, 1
      %v790 = vor.u32 %v785, %v789
      %v792 = vshll.u32 %v745, 16
      %v794 = vrot.slane %v792, 1
      %v795 = vsel %vm783, %v790, %v794
      %v796 = vshrl.u32 %v745, 16
      %v798 = vor.u32 %v796, %v794
      %v800 = vshll.u32 %v550, 16
      %v802 = vrot.slane %v800, 1
      %v803 = vsel %vm783, %v798, %v802
      %v804 = vshrl.u32 %v550, 16
      %v806 = vor.u32 %v804, %v802
      %v808 = vshll.u32 %v559, 16
      %v810 = vrot.slane %v808, 1
      %v811 = vsel %vm783, %v806, %v810
      %v812 = vshrl.u32 %v559, 16
      %v814 = vor.u32 %v812, %v810
      %v816 = vshll.u32 %v568, 16
      %v818 = vrot.slane %v816, 1
      %v819 = vsel %vm783, %v814, %v818
      %v820 = vshrl.u32 %v568, 16
      %v822 = vor.u32 %v820, %v818
      %v824 = vshll.u32 %v577, 16
      %v826 = vrot.slane %v824, 1
      %v827 = vsel %vm783, %v822, %v826
      %v828 = vshrl.u32 %v577, 16
      %v830 = vor.u32 %v828, %v826
      %v832 = vshll.u32 %v586, 16
      %v834 = vrot.slane %v832, 1
      %v835 = vsel %vm783, %v830, %v834
      %v836 = vshrl.u32 %v586, 16
      %v838 = vor.u32 %v836, %v834
      %v840 = vshll.u32 %v595, 16
      %v842 = vrot.slane %v840, 1
      %v843 = vsel %vm783, %v838, %v842
      %v844 = vshrl.u32 %v595, 16
      %v846 = vor.u32 %v844, %v842
      %v848 = vshll.u32 %v604, 16
      %v850 = vrot.slane %v848, 1
      %v851 = vsel %vm783, %v846, %v850
      %v852 = vshrl.u32 %v604, 16
      %v854 = vor.u32 %v852, %v850
      %v856 = vshll.u32 %v613, 16
      %v858 = vrot.slane %v856, 1
      %v859 = vsel %vm783, %v854, %v858
      %v860 = vshrl.u32 %v613, 16
      %v862 = vor.u32 %v860, %v858
      %v864 = vshll.u32 %v622, 16
      %v866 = vrot.slane %v864, 1
      %v867 = vsel %vm783, %v862, %v866
      %v868 = vshrl.u32 %v622, 16
      %v870 = vor.u32 %v868, %v866
      %v872 = vshll.u32 %v631, 16
      %v874 = vrot.slane %v872, 1
      %v875 = vsel %vm783, %v870, %v874
      %v876 = vshrl.u32 %v631, 16
      %v878 = vor.u32 %v876, %v874
      %v880 = vshll.u32 %v640, 16
      %v882 = vrot.slane %v880, 1
      %v883 = vsel %vm783, %v878, %v882
      %v884 = vshrl.u32 %v640, 16
      %v886 = vor.u32 %v884, %v882
      %v888 = vshll.u32 %v649, 16
      %v890 = vrot.slane %v888, 1
      %v891 = vsel %vm783, %v886, %v890
      %v892 = vshrl.u32 %v649, 16
      %v894 = vor.u32 %v892, %v890
      %v896 = vshll.u32 %v658, 16
      %v898 = vrot.slane %v896, 1
      %v899 = vsel %vm783, %v894, %v898
      %v900 = vshrl.u32 %v658, 16
      %v902 = vor.u32 %v900, %v898
      %v904 = vshll.u32 %v667, 16
      %v906 = vrot.slane %v904, 1
      %v907 = vsel %vm783, %v902, %v906
      %v908 = vshrl.u32 %v667, 16
      %v910 = vor.u32 %v908, %v906
      %v912 = vshll.u32 %v676, 16
      %v914 = vrot.slane %v912, 1
      %v915 = vsel %vm783, %v910, %v914
      %v916 = vshrl.u32 %v676, 16
      %v918 = vor.u32 %v916, %v914
      %v920 = vshll.u32 %v685, 16
      %v922 = vrot.slane %v920, 1
      %v923 = vsel %vm783, %v918, %v922
      %v924 = vshrl.u32 %v685, 16
      %v926 = vor.u32 %v924, %v922
      %v928 = vshll.u32 %v694, 16
      %v930 = vrot.slane %v928, 1
      %v931 = vsel %vm783, %v926, %v930
      %v932 = vshrl.u32 %v694, 16
      %v934 = vor.u32 %v932, %v930
      %v936 = vshll.u32 %v703, 16
      %v938 = vrot.slane %v936, 1
      %v939 = vsel %vm783, %v934, %v938
      %v940 = vshrl.u32 %v703, 16
      %v942 = vor.u32 %v940, %v938
      %v944 = vshll.u32 %v712, 16
      %v946 = vrot.slane %v944, 1
      %v947 = vsel %vm783, %v942, %v946
      %v948 = vshrl.u32 %v712, 16
      %v950 = vor.u32 %v948, %v946
      %v988 = vunpack.c.l.b16 %v767
      %v989 = vunpack.c.l.b16 %v768
      %v990 = vunpack.c.l.b16 %v769
      %v991 = vunpack.c.l.b16 %v770
      %v992 = vunpack.c.l.b16 %v771
      %v993 = vunpack.c.l.b16 %v772
      %v994 = vunpack.c.l.b16 %v773
      %v995 = vunpack.c.l.b16 %v774
      %v996 = vunpack.c.l.b16 %v775
      %v997 = vunpack.c.l.b16 %v776
      %v998 = vunpack.c.l.b16 %v777
      %v999 = vunpack.c.l.b16 %v778
      %v1000 = vunpack.c.l.b16 %v779
      %v1001 = vunpack.c.l.b16 %v780
      %v1002 = vunpack.c.l.b16 %v781
      %v1003 = vunpack.c.l.b16 %v782
      %v1004 = vpack.c.b16 %v989, %v988
      %v1005 = vpack.c.b16 %v991, %v990
      %v1006 = vpack.c.b16 %v993, %v992
      %v1007 = vpack.c.b16 %v995, %v994
      %v1008 = vpack.c.b16 %v997, %v996
      %v1009 = vpack.c.b16 %v999, %v998
      %v1010 = vpack.c.b16 %v1001, %v1000
      %v1011 = vpack.c.b16 %v1003, %v1002
      %1020 = vmatpush.bf16.msra.mxu0 %v1011
      %1021 = vmatpush.bf16.msra.mxu0 %v1010
      %1022 = vmatpush.bf16.msra.mxu0 %v1009
      %1023 = vmatpush.bf16.msra.mxu0 %v1008
      %1024 = vmatpush.bf16.msra.mxu0 %v1007
      %1025 = vmatpush.bf16.msra.mxu0 %v1006
      %1026 = vmatpush.bf16.msra.mxu0 %v1005
      %1027 = vmatpush.bf16.msra.mxu0 %v1004
      %1028 = vmatmul.bf16.gmra.mxu0 %v795
      %v1029 = vpop.f32.mrf.mxu0
      %v1030 = vadd.f32 0.0, %v1029
      %v1031 = vpop.f32.mrf.mxu0
      %v1032 = vadd.f32 0.0, %v1031
      %1033 = vmatmul.bf16.gmra.mxu0 %v803
      %v1034 = vpop.f32.mrf.mxu0
      %v1035 = vadd.f32 0.0, %v1034
      %v1036 = vpop.f32.mrf.mxu0
      %v1037 = vadd.f32 0.0, %v1036
      %1038 = vmatmul.bf16.gmra.mxu0 %v811
      %v1039 = vpop.f32.mrf.mxu0
      %v1040 = vadd.f32 0.0, %v1039
      %v1041 = vpop.f32.mrf.mxu0
      %v1042 = vadd.f32 0.0, %v1041
      %1043 = vmatmul.bf16.gmra.mxu0 %v819
      %v1044 = vpop.f32.mrf.mxu0
      %v1045 = vadd.f32 0.0, %v1044
      %v1046 = vpop.f32.mrf.mxu0
      %v1047 = vadd.f32 0.0, %v1046
      %1048 = vmatmul.bf16.gmra.mxu0 %v827
      %v1049 = vpop.f32.mrf.mxu0
      %v1050 = vadd.f32 0.0, %v1049
      %v1051 = vpop.f32.mrf.mxu0
      %v1052 = vadd.f32 0.0, %v1051
      %1053 = vmatmul.bf16.gmra.mxu0 %v835
      %v1054 = vpop.f32.mrf.mxu0
      %v1055 = vadd.f32 0.0, %v1054
      %v1056 = vpop.f32.mrf.mxu0
      %v1057 = vadd.f32 0.0, %v1056
      %1058 = vmatmul.bf16.gmra.mxu0 %v843
      %v1059 = vpop.f32.mrf.mxu0
      %v1060 = vadd.f32 0.0, %v1059
      %v1061 = vpop.f32.mrf.mxu0
      %v1062 = vadd.f32 0.0, %v1061
      %1063 = vmatmul.bf16.gmra.mxu0 %v851
      %v1064 = vpop.f32.mrf.mxu0
      %v1065 = vadd.f32 0.0, %v1064
      %v1066 = vpop.f32.mrf.mxu0
      %v1067 = vadd.f32 0.0, %v1066
      %1068 = vmatmul.bf16.gmra.mxu0 %v859
      %v1069 = vpop.f32.mrf.mxu0
      %v1070 = vadd.f32 0.0, %v1069
      %v1071 = vpop.f32.mrf.mxu0
      %v1072 = vadd.f32 0.0, %v1071
      %1073 = vmatmul.bf16.gmra.mxu0 %v867
      %v1074 = vpop.f32.mrf.mxu0
      %v1075 = vadd.f32 0.0, %v1074
      %v1076 = vpop.f32.mrf.mxu0
      %v1077 = vadd.f32 0.0, %v1076
      %1078 = vmatmul.bf16.gmra.mxu0 %v875
      %v1079 = vpop.f32.mrf.mxu0
      %v1080 = vadd.f32 0.0, %v1079
      %v1081 = vpop.f32.mrf.mxu0
      %v1082 = vadd.f32 0.0, %v1081
      %1083 = vmatmul.bf16.gmra.mxu0 %v883
      %v1084 = vpop.f32.mrf.mxu0
      %v1085 = vadd.f32 0.0, %v1084
      %v1086 = vpop.f32.mrf.mxu0
      %v1087 = vadd.f32 0.0, %v1086
      %1088 = vmatmul.bf16.gmra.mxu0 %v891
      %v1089 = vpop.f32.mrf.mxu0
      %v1090 = vadd.f32 0.0, %v1089
      %v1091 = vpop.f32.mrf.mxu0
      %v1092 = vadd.f32 0.0, %v1091
      %1093 = vmatmul.bf16.gmra.mxu0 %v899
      %v1094 = vpop.f32.mrf.mxu0
      %v1095 = vadd.f32 0.0, %v1094
      %v1096 = vpop.f32.mrf.mxu0
      %v1097 = vadd.f32 0.0, %v1096
      %1098 = vmatmul.bf16.gmra.mxu0 %v907
      %v1099 = vpop.f32.mrf.mxu0
      %v1100 = vadd.f32 0.0, %v1099
      %v1101 = vpop.f32.mrf.mxu0
      %v1102 = vadd.f32 0.0, %v1101
      %1103 = vmatmul.bf16.gmra.mxu0 %v915
      %v1104 = vpop.f32.mrf.mxu0
      %v1105 = vadd.f32 0.0, %v1104
      %v1106 = vpop.f32.mrf.mxu0
      %v1107 = vadd.f32 0.0, %v1106
      %1108 = vmatmul.bf16.gmra.mxu0 %v923
      %v1109 = vpop.f32.mrf.mxu0
      %v1110 = vadd.f32 0.0, %v1109
      %v1111 = vpop.f32.mrf.mxu0
      %v1112 = vadd.f32 0.0, %v1111
      %1113 = vmatmul.bf16.gmra.mxu0 %v931
      %v1114 = vpop.f32.mrf.mxu0
      %v1115 = vadd.f32 0.0, %v1114
      %v1116 = vpop.f32.mrf.mxu0
      %v1117 = vadd.f32 0.0, %v1116
      %1118 = vmatmul.bf16.gmra.mxu0 %v939
      %v1119 = vpop.f32.mrf.mxu0
      %v1120 = vadd.f32 0.0, %v1119
      %v1121 = vpop.f32.mrf.mxu0
      %v1122 = vadd.f32 0.0, %v1121
      %1123 = vmatmul.bf16.gmra.mxu0 %v947
      %v1124 = vpop.f32.mrf.mxu0
      %v1125 = vadd.f32 0.0, %v1124
      %v1126 = vpop.f32.mrf.mxu0
      %v1127 = vadd.f32 0.0, %v1126
      %1128 = vmatmul.bf16.gmra.mxu0 %v950
      %v1129 = vpop.f32.mrf.mxu0
      %v1130 = vadd.f32 0.0, %v1129
      %v1131 = vpop.f32.mrf.mxu0
      %1132 = vdwg.mxu0
      %v1149 = vunpack.c.l.b16 %v750
      %v1150 = vunpack.c.l.b16 %v751
      %v1151 = vunpack.c.l.b16 %v752
      %v1152 = vunpack.c.l.b16 %v753
      %v1153 = vunpack.c.l.b16 %v754
      %v1154 = vunpack.c.l.b16 %v755
      %v1155 = vunpack.c.l.b16 %v756
      %v1156 = vunpack.c.l.b16 %v757
      %v1157 = vunpack.c.l.b16 %v758
      %v1158 = vunpack.c.l.b16 %v759
      %v1159 = vunpack.c.l.b16 %v760
      %v1160 = vunpack.c.l.b16 %v761
      %v1161 = vunpack.c.l.b16 %v762
      %v1162 = vunpack.c.l.b16 %v763
      %v1163 = vunpack.c.l.b16 %v764
      %v1164 = vunpack.c.l.b16 %v765
      %v1165 = vpack.c.b16 %v1150, %v1149
      %v1166 = vpack.c.b16 %v1152, %v1151
      %v1167 = vpack.c.b16 %v1154, %v1153
      %v1168 = vpack.c.b16 %v1156, %v1155
      %v1169 = vpack.c.b16 %v1158, %v1157
      %v1170 = vpack.c.b16 %v1160, %v1159
      %v1171 = vpack.c.b16 %v1162, %v1161
      %v1172 = vpack.c.b16 %v1164, %v1163
      %1181 = vmatpush.bf16.msra.mxu0 %v1172
      %1182 = vmatpush.bf16.msra.mxu0 %v1171
      %1183 = vmatpush.bf16.msra.mxu0 %v1170
      %1184 = vmatpush.bf16.msra.mxu0 %v1169
      %1185 = vmatpush.bf16.msra.mxu0 %v1168
      %1186 = vmatpush.bf16.msra.mxu0 %v1167
      %1187 = vmatpush.bf16.msra.mxu0 %v1166
      %1188 = vmatpush.bf16.msra.mxu0 %v1165
      %1189 = vmatmul.bf16.gmra.mxu0 0
      %v1190 = vpop.f32.mrf.mxu0
      %v1191 = vadd.f32 %v1030, %v1190
      %v1192 = vpop.f32.mrf.mxu0
      %v1193 = vadd.f32 %v1032, %v1192
      %1194 = vmatmul.bf16.gmra.mxu0 %v745
      %v1195 = vpop.f32.mrf.mxu0
      %v1196 = vadd.f32 %v1035, %v1195
      %v1197 = vpop.f32.mrf.mxu0
      %v1198 = vadd.f32 %v1037, %v1197
      %1199 = vmatmul.bf16.gmra.mxu0 %v550
      %v1200 = vpop.f32.mrf.mxu0
      %v1201 = vadd.f32 %v1040, %v1200
      %v1202 = vpop.f32.mrf.mxu0
      %v1203 = vadd.f32 %v1042, %v1202
      %1204 = vmatmul.bf16.gmra.mxu0 %v559
      %v1205 = vpop.f32.mrf.mxu0
      %v1206 = vadd.f32 %v1045, %v1205
      %v1207 = vpop.f32.mrf.mxu0
      %v1208 = vadd.f32 %v1047, %v1207
      %1209 = vmatmul.bf16.gmra.mxu0 %v568
      %v1210 = vpop.f32.mrf.mxu0
      %v1211 = vadd.f32 %v1050, %v1210
      %v1212 = vpop.f32.mrf.mxu0
      %v1213 = vadd.f32 %v1052, %v1212
      %1214 = vmatmul.bf16.gmra.mxu0 %v577
      %v1215 = vpop.f32.mrf.mxu0
      %v1216 = vadd.f32 %v1055, %v1215
      %v1217 = vpop.f32.mrf.mxu0
      %v1218 = vadd.f32 %v1057, %v1217
      %1219 = vmatmul.bf16.gmra.mxu0 %v586
      %v1220 = vpop.f32.mrf.mxu0
      %v1221 = vadd.f32 %v1060, %v1220
      %v1222 = vpop.f32.mrf.mxu0
      %v1223 = vadd.f32 %v1062, %v1222
      %1224 = vmatmul.bf16.gmra.mxu0 %v595
      %v1225 = vpop.f32.mrf.mxu0
      %v1226 = vadd.f32 %v1065, %v1225
      %v1227 = vpop.f32.mrf.mxu0
      %v1228 = vadd.f32 %v1067, %v1227
      %1229 = vmatmul.bf16.gmra.mxu0 %v604
      %v1230 = vpop.f32.mrf.mxu0
      %v1231 = vadd.f32 %v1070, %v1230
      %v1232 = vpop.f32.mrf.mxu0
      %v1233 = vadd.f32 %v1072, %v1232
      %1234 = vmatmul.bf16.gmra.mxu0 %v613
      %v1235 = vpop.f32.mrf.mxu0
      %v1236 = vadd.f32 %v1075, %v1235
      %v1237 = vpop.f32.mrf.mxu0
      %v1238 = vadd.f32 %v1077, %v1237
      %1239 = vmatmul.bf16.gmra.mxu0 %v622
      %v1240 = vpop.f32.mrf.mxu0
      %v1241 = vadd.f32 %v1080, %v1240
      %v1242 = vpop.f32.mrf.mxu0
      %v1243 = vadd.f32 %v1082, %v1242
      %1244 = vmatmul.bf16.gmra.mxu0 %v631
      %v1245 = vpop.f32.mrf.mxu0
      %v1246 = vadd.f32 %v1085, %v1245
      %v1247 = vpop.f32.mrf.mxu0
      %v1248 = vadd.f32 %v1087, %v1247
      %1249 = vmatmul.bf16.gmra.mxu0 %v640
      %v1250 = vpop.f32.mrf.mxu0
      %v1251 = vadd.f32 %v1090, %v1250
      %v1252 = vpop.f32.mrf.mxu0
      %v1253 = vadd.f32 %v1092, %v1252
      %1254 = vmatmul.bf16.gmra.mxu0 %v649
      %v1255 = vpop.f32.mrf.mxu0
      %v1256 = vadd.f32 %v1095, %v1255
      %v1257 = vpop.f32.mrf.mxu0
      %v1258 = vadd.f32 %v1097, %v1257
      %1259 = vmatmul.bf16.gmra.mxu0 %v658
      %v1260 = vpop.f32.mrf.mxu0
      %v1261 = vadd.f32 %v1100, %v1260
      %v1262 = vpop.f32.mrf.mxu0
      %v1263 = vadd.f32 %v1102, %v1262
      %1264 = vmatmul.bf16.gmra.mxu0 %v667
      %v1265 = vpop.f32.mrf.mxu0
      %v1266 = vadd.f32 %v1105, %v1265
      %v1267 = vpop.f32.mrf.mxu0
      %v1268 = vadd.f32 %v1107, %v1267
      %1269 = vmatmul.bf16.gmra.mxu0 %v676
      %v1270 = vpop.f32.mrf.mxu0
      %v1271 = vadd.f32 %v1110, %v1270
      %v1272 = vpop.f32.mrf.mxu0
      %v1273 = vadd.f32 %v1112, %v1272
      %1274 = vmatmul.bf16.gmra.mxu0 %v685
      %v1275 = vpop.f32.mrf.mxu0
      %v1276 = vadd.f32 %v1115, %v1275
      %v1277 = vpop.f32.mrf.mxu0
      %v1278 = vadd.f32 %v1117, %v1277
      %1279 = vmatmul.bf16.gmra.mxu0 %v694
      %v1280 = vpop.f32.mrf.mxu0
      %v1281 = vadd.f32 %v1120, %v1280
      %v1282 = vpop.f32.mrf.mxu0
      %v1283 = vadd.f32 %v1122, %v1282
      %1284 = vmatmul.bf16.gmra.mxu0 %v703
      %v1285 = vpop.f32.mrf.mxu0
      %v1286 = vadd.f32 %v1125, %v1285
      %v1287 = vpop.f32.mrf.mxu0
      %v1288 = vadd.f32 %v1127, %v1287
      %1289 = vmatmul.bf16.gmra.mxu0 %v712
      %v1290 = vpop.f32.mrf.mxu0
      %v1291 = vadd.f32 %v1130, %v1290
      %v1292 = vpop.f32.mrf.mxu0
      %1293 = vdwg.mxu0
      %s1294 = scalar_lea.vmem %s2, 128
      %v1295 = vld [vmem:[%s1294] sm:$0xf]
      %v1296 = vld [vmem:[%s1294 + $0x4] sm:$0xf]
      %v1297 = vld [vmem:[%s1294 + $0x8] sm:$0xf]
      %v1298 = vld [vmem:[%s1294 + $0xc] sm:$0xf]
      %v1299 = vld [vmem:[%s1294 + $0x10] sm:$0xf]
      %v1300 = vld [vmem:[%s1294 + $0x14] sm:$0xf]
      %v1301 = vld [vmem:[%s1294 + $0x18] sm:$0xf]
      %v1302 = vld [vmem:[%s1294 + $0x1c] sm:$0xf]
      %v1303 = vld [vmem:[%s1294 + $0x20] sm:$0xf]
      %v1304 = vld [vmem:[%s1294 + $0x24] sm:$0xf]
      %v1305 = vld [vmem:[%s1294 + $0x28] sm:$0xf]
      %v1306 = vld [vmem:[%s1294 + $0x2c] sm:$0xf]
      %v1307 = vld [vmem:[%s1294 + $0x30] sm:$0xf]
      %v1308 = vld [vmem:[%s1294 + $0x34] sm:$0xf]
      %v1309 = vld [vmem:[%s1294 + $0x38] sm:$0xf]
      %v1310 = vld [vmem:[%s1294 + $0x3c] sm:$0xf]
      %vm1313 = vcmask 1046528
      %v1314 = vrot.slane 0, 1
      %v1315 = vrot.slane %v745, 1
      %v1316 = vsel %vm1313, %v1314, %v1315
      %v1317 = vrot.slane %v550, 1
      %v1318 = vsel %vm1313, %v1315, %v1317
      %v1319 = vrot.slane %v559, 1
      %v1320 = vsel %vm1313, %v1317, %v1319
      %v1321 = vrot.slane %v568, 1
      %v1322 = vsel %vm1313, %v1319, %v1321
      %v1323 = vrot.slane %v577, 1
      %v1324 = vsel %vm1313, %v1321, %v1323
      %v1325 = vrot.slane %v586, 1
      %v1326 = vsel %vm1313, %v1323, %v1325
      %v1327 = vrot.slane %v595, 1
      %v1328 = vsel %vm1313, %v1325, %v1327
      %v1329 = vrot.slane %v604, 1
      %v1330 = vsel %vm1313, %v1327, %v1329
      %v1331 = vrot.slane %v613, 1
      %v1332 = vsel %vm1313, %v1329, %v1331
      %v1333 = vrot.slane %v622, 1
      %v1334 = vsel %vm1313, %v1331, %v1333
      %v1335 = vrot.slane %v631, 1
      %v1336 = vsel %vm1313, %v1333, %v1335
      %v1337 = vrot.slane %v640, 1
      %v1338 = vsel %vm1313, %v1335, %v1337
      %v1339 = vrot.slane %v649, 1
      %v1340 = vsel %vm1313, %v1337, %v1339
      %v1341 = vrot.slane %v658, 1
      %v1342 = vsel %vm1313, %v1339, %v1341
      %v1343 = vrot.slane %v667, 1
      %v1344 = vsel %vm1313, %v1341, %v1343
      %v1345 = vrot.slane %v676, 1
      %v1346 = vsel %vm1313, %v1343, %v1345
      %v1347 = vrot.slane %v685, 1
      %v1348 = vsel %vm1313, %v1345, %v1347
      %v1349 = vrot.slane %v694, 1
      %v1350 = vsel %vm1313, %v1347, %v1349
      %v1351 = vrot.slane %v703, 1
      %v1352 = vsel %vm1313, %v1349, %v1351
      %v1353 = vrot.slane %v712, 1
      %v1354 = vsel %vm1313, %v1351, %v1353
      %v1392 = vunpack.c.l.b16 %v1295
      %v1393 = vunpack.c.l.b16 %v1296
      %v1394 = vunpack.c.l.b16 %v1297
      %v1395 = vunpack.c.l.b16 %v1298
      %v1396 = vunpack.c.l.b16 %v1299
      %v1397 = vunpack.c.l.b16 %v1300
      %v1398 = vunpack.c.l.b16 %v1301
      %v1399 = vunpack.c.l.b16 %v1302
      %v1400 = vunpack.c.l.b16 %v1303
      %v1401 = vunpack.c.l.b16 %v1304
      %v1402 = vunpack.c.l.b16 %v1305
      %v1403 = vunpack.c.l.b16 %v1306
      %v1404 = vunpack.c.l.b16 %v1307
      %v1405 = vunpack.c.l.b16 %v1308
      %v1406 = vunpack.c.l.b16 %v1309
      %v1407 = vunpack.c.l.b16 %v1310
      %v1408 = vpack.c.b16 %v1393, %v1392
      %v1409 = vpack.c.b16 %v1395, %v1394
      %v1410 = vpack.c.b16 %v1397, %v1396
      %v1411 = vpack.c.b16 %v1399, %v1398
      %v1412 = vpack.c.b16 %v1401, %v1400
      %v1413 = vpack.c.b16 %v1403, %v1402
      %v1414 = vpack.c.b16 %v1405, %v1404
      %v1415 = vpack.c.b16 %v1407, %v1406
      %1424 = vmatpush.bf16.msra.mxu0 %v1415
      %1425 = vmatpush.bf16.msra.mxu0 %v1414
      %1426 = vmatpush.bf16.msra.mxu0 %v1413
      %1427 = vmatpush.bf16.msra.mxu0 %v1412
      %1428 = vmatpush.bf16.msra.mxu0 %v1411
      %1429 = vmatpush.bf16.msra.mxu0 %v1410
      %1430 = vmatpush.bf16.msra.mxu0 %v1409
      %1431 = vmatpush.bf16.msra.mxu0 %v1408
      %1432 = vmatmul.bf16.gmra.mxu0 %v1316
      %v1433 = vpop.f32.mrf.mxu0
      %v1434 = vadd.f32 0.0, %v1433
      %v1435 = vpop.f32.mrf.mxu0
      %v1436 = vadd.f32 0.0, %v1435
      %1437 = vmatmul.bf16.gmra.mxu0 %v1318
      %v1438 = vpop.f32.mrf.mxu0
      %v1439 = vadd.f32 0.0, %v1438
      %v1440 = vpop.f32.mrf.mxu0
      %v1441 = vadd.f32 0.0, %v1440
      %1442 = vmatmul.bf16.gmra.mxu0 %v1320
      %v1443 = vpop.f32.mrf.mxu0
      %v1444 = vadd.f32 0.0, %v1443
      %v1445 = vpop.f32.mrf.mxu0
      %v1446 = vadd.f32 0.0, %v1445
      %1447 = vmatmul.bf16.gmra.mxu0 %v1322
      %v1448 = vpop.f32.mrf.mxu0
      %v1449 = vadd.f32 0.0, %v1448
      %v1450 = vpop.f32.mrf.mxu0
      %v1451 = vadd.f32 0.0, %v1450
      %1452 = vmatmul.bf16.gmra.mxu0 %v1324
      %v1453 = vpop.f32.mrf.mxu0
      %v1454 = vadd.f32 0.0, %v1453
      %v1455 = vpop.f32.mrf.mxu0
      %v1456 = vadd.f32 0.0, %v1455
      %1457 = vmatmul.bf16.gmra.mxu0 %v1326
      %v1458 = vpop.f32.mrf.mxu0
      %v1459 = vadd.f32 0.0, %v1458
      %v1460 = vpop.f32.mrf.mxu0
      %v1461 = vadd.f32 0.0, %v1460
      %1462 = vmatmul.bf16.gmra.mxu0 %v1328
      %v1463 = vpop.f32.mrf.mxu0
      %v1464 = vadd.f32 0.0, %v1463
      %v1465 = vpop.f32.mrf.mxu0
      %v1466 = vadd.f32 0.0, %v1465
      %1467 = vmatmul.bf16.gmra.mxu0 %v1330
      %v1468 = vpop.f32.mrf.mxu0
      %v1469 = vadd.f32 0.0, %v1468
      %v1470 = vpop.f32.mrf.mxu0
      %v1471 = vadd.f32 0.0, %v1470
      %1472 = vmatmul.bf16.gmra.mxu0 %v1332
      %v1473 = vpop.f32.mrf.mxu0
      %v1474 = vadd.f32 0.0, %v1473
      %v1475 = vpop.f32.mrf.mxu0
      %v1476 = vadd.f32 0.0, %v1475
      %1477 = vmatmul.bf16.gmra.mxu0 %v1334
      %v1478 = vpop.f32.mrf.mxu0
      %v1479 = vadd.f32 0.0, %v1478
      %v1480 = vpop.f32.mrf.mxu0
      %v1481 = vadd.f32 0.0, %v1480
      %1482 = vmatmul.bf16.gmra.mxu0 %v1336
      %v1483 = vpop.f32.mrf.mxu0
      %v1484 = vadd.f32 0.0, %v1483
      %v1485 = vpop.f32.mrf.mxu0
      %v1486 = vadd.f32 0.0, %v1485
      %1487 = vmatmul.bf16.gmra.mxu0 %v1338
      %v1488 = vpop.f32.mrf.mxu0
      %v1489 = vadd.f32 0.0, %v1488
      %v1490 = vpop.f32.mrf.mxu0
      %v1491 = vadd.f32 0.0, %v1490
      %1492 = vmatmul.bf16.gmra.mxu0 %v1340
      %v1493 = vpop.f32.mrf.mxu0
      %v1494 = vadd.f32 0.0, %v1493
      %v1495 = vpop.f32.mrf.mxu0
      %v1496 = vadd.f32 0.0, %v1495
      %1497 = vmatmul.bf16.gmra.mxu0 %v1342
      %v1498 = vpop.f32.mrf.mxu0
      %v1499 = vadd.f32 0.0, %v1498
      %v1500 = vpop.f32.mrf.mxu0
      %v1501 = vadd.f32 0.0, %v1500
      %1502 = vmatmul.bf16.gmra.mxu0 %v1344
      %v1503 = vpop.f32.mrf.mxu0
      %v1504 = vadd.f32 0.0, %v1503
      %v1505 = vpop.f32.mrf.mxu0
      %v1506 = vadd.f32 0.0, %v1505
      %1507 = vmatmul.bf16.gmra.mxu0 %v1346
      %v1508 = vpop.f32.mrf.mxu0
      %v1509 = vadd.f32 0.0, %v1508
      %v1510 = vpop.f32.mrf.mxu0
      %v1511 = vadd.f32 0.0, %v1510
      %1512 = vmatmul.bf16.gmra.mxu0 %v1348
      %v1513 = vpop.f32.mrf.mxu0
      %v1514 = vadd.f32 0.0, %v1513
      %v1515 = vpop.f32.mrf.mxu0
      %v1516 = vadd.f32 0.0, %v1515
      %1517 = vmatmul.bf16.gmra.mxu0 %v1350
      %v1518 = vpop.f32.mrf.mxu0
      %v1519 = vadd.f32 0.0, %v1518
      %v1520 = vpop.f32.mrf.mxu0
      %v1521 = vadd.f32 0.0, %v1520
      %1522 = vmatmul.bf16.gmra.mxu0 %v1352
      %v1523 = vpop.f32.mrf.mxu0
      %v1524 = vadd.f32 0.0, %v1523
      %v1525 = vpop.f32.mrf.mxu0
      %v1526 = vadd.f32 0.0, %v1525
      %1527 = vmatmul.bf16.gmra.mxu0 %v1354
      %v1528 = vpop.f32.mrf.mxu0
      %v1529 = vadd.f32 0.0, %v1528
      %v1530 = vpop.f32.mrf.mxu0
      %v1531 = vadd.f32 0.0, %v1530
      %1532 = vmatmul.bf16.gmra.mxu0 %v1353
      %v1533 = vpop.f32.mrf.mxu0
      %v1534 = vadd.f32 0.0, %v1533
      %v1535 = vpop.f32.mrf.mxu0
      %1536 = vdwg.mxu0
      %v1537 = vadd.f32 %v1191, %v1434
      %v1538 = vadd.f32 %v1193, %v1436
      %v1539 = vadd.f32 %v1196, %v1439
      %v1540 = vadd.f32 %v1198, %v1441
      %v1541 = vadd.f32 %v1201, %v1444
      %v1542 = vadd.f32 %v1203, %v1446
      %v1543 = vadd.f32 %v1206, %v1449
      %v1544 = vadd.f32 %v1208, %v1451
      %v1545 = vadd.f32 %v1211, %v1454
      %v1546 = vadd.f32 %v1213, %v1456
      %v1547 = vadd.f32 %v1216, %v1459
      %v1548 = vadd.f32 %v1218, %v1461
      %v1549 = vadd.f32 %v1221, %v1464
      %v1550 = vadd.f32 %v1223, %v1466
      %v1551 = vadd.f32 %v1226, %v1469
      %v1552 = vadd.f32 %v1228, %v1471
      %v1553 = vadd.f32 %v1231, %v1474
      %v1554 = vadd.f32 %v1233, %v1476
      %v1555 = vadd.f32 %v1236, %v1479
      %v1556 = vadd.f32 %v1238, %v1481
      %v1557 = vadd.f32 %v1241, %v1484
      %v1558 = vadd.f32 %v1243, %v1486
      %v1559 = vadd.f32 %v1246, %v1489
      %v1560 = vadd.f32 %v1248, %v1491
      %v1561 = vadd.f32 %v1251, %v1494
      %v1562 = vadd.f32 %v1253, %v1496
      %v1563 = vadd.f32 %v1256, %v1499
      %v1564 = vadd.f32 %v1258, %v1501
      %v1565 = vadd.f32 %v1261, %v1504
      %v1566 = vadd.f32 %v1263, %v1506
      %v1567 = vadd.f32 %v1266, %v1509
      %v1568 = vadd.f32 %v1268, %v1511
      %v1569 = vadd.f32 %v1271, %v1514
      %v1570 = vadd.f32 %v1273, %v1516
      %v1571 = vadd.f32 %v1276, %v1519
      %v1572 = vadd.f32 %v1278, %v1521
      %v1573 = vadd.f32 %v1281, %v1524
      %v1574 = vadd.f32 %v1283, %v1526
      %v1575 = vadd.f32 %v1286, %v1529
      %v1576 = vadd.f32 %v1288, %v1531
      %v1577 = vadd.f32 %v1291, %v1534
      %s1578 = scalar_lea.vmem %s2, 192
      %v1579 = vld [vmem:[%s1578] sm:$0xf]
      %v1580 = vld [vmem:[%s1578 + $0x4] sm:$0xf]
      %v1581 = vld [vmem:[%s1578 + $0x8] sm:$0xf]
      %v1582 = vld [vmem:[%s1578 + $0xc] sm:$0xf]
      %v1583 = vld [vmem:[%s1578 + $0x10] sm:$0xf]
      %v1584 = vld [vmem:[%s1578 + $0x14] sm:$0xf]
      %v1585 = vld [vmem:[%s1578 + $0x18] sm:$0xf]
      %v1586 = vld [vmem:[%s1578 + $0x1c] sm:$0xf]
      %v1587 = vld [vmem:[%s1578 + $0x20] sm:$0xf]
      %v1588 = vld [vmem:[%s1578 + $0x24] sm:$0xf]
      %v1589 = vld [vmem:[%s1578 + $0x28] sm:$0xf]
      %v1590 = vld [vmem:[%s1578 + $0x2c] sm:$0xf]
      %v1591 = vld [vmem:[%s1578 + $0x30] sm:$0xf]
      %v1592 = vld [vmem:[%s1578 + $0x34] sm:$0xf]
      %v1593 = vld [vmem:[%s1578 + $0x38] sm:$0xf]
      %v1594 = vld [vmem:[%s1578 + $0x3c] sm:$0xf]
      %v1596 = vrot.slane %v749, 1
      %v1597 = vsel %vm1313, %v1353, %v1596
      %v1616 = vunpack.c.l.b16 %v1579
      %v1617 = vunpack.c.l.b16 %v1580
      %v1618 = vunpack.c.l.b16 %v1581
      %v1619 = vunpack.c.l.b16 %v1582
      %v1620 = vunpack.c.l.b16 %v1583
      %v1621 = vunpack.c.l.b16 %v1584
      %v1622 = vunpack.c.l.b16 %v1585
      %v1623 = vunpack.c.l.b16 %v1586
      %v1624 = vunpack.c.l.b16 %v1587
      %v1625 = vunpack.c.l.b16 %v1588
      %v1626 = vunpack.c.l.b16 %v1589
      %v1627 = vunpack.c.l.b16 %v1590
      %v1628 = vunpack.c.l.b16 %v1591
      %v1629 = vunpack.c.l.b16 %v1592
      %v1630 = vunpack.c.l.b16 %v1593
      %v1631 = vunpack.c.l.b16 %v1594
      %v1632 = vpack.c.b16 %v1617, %v1616
      %v1633 = vpack.c.b16 %v1619, %v1618
      %v1634 = vpack.c.b16 %v1621, %v1620
      %v1635 = vpack.c.b16 %v1623, %v1622
      %v1636 = vpack.c.b16 %v1625, %v1624
      %v1637 = vpack.c.b16 %v1627, %v1626
      %v1638 = vpack.c.b16 %v1629, %v1628
      %v1639 = vpack.c.b16 %v1631, %v1630
      %1648 = vmatpush.bf16.msra.mxu0 %v1639
      %1649 = vmatpush.bf16.msra.mxu0 %v1638
      %1650 = vmatpush.bf16.msra.mxu0 %v1637
      %1651 = vmatpush.bf16.msra.mxu0 %v1636
      %1652 = vmatpush.bf16.msra.mxu0 %v1635
      %1653 = vmatpush.bf16.msra.mxu0 %v1634
      %1654 = vmatpush.bf16.msra.mxu0 %v1633
      %1655 = vmatpush.bf16.msra.mxu0 %v1632
      %1656 = vmatmul.bf16.gmra.mxu0 %v1318
      %v1657 = vpop.f32.mrf.mxu0
      %v1658 = vadd.f32 0.0, %v1657
      %v1659 = vpop.f32.mrf.mxu0
      %v1660 = vadd.f32 0.0, %v1659
      %1661 = vmatmul.bf16.gmra.mxu0 %v1320
      %v1662 = vpop.f32.mrf.mxu0
      %v1663 = vadd.f32 0.0, %v1662
      %v1664 = vpop.f32.mrf.mxu0
      %v1665 = vadd.f32 0.0, %v1664
      %1666 = vmatmul.bf16.gmra.mxu0 %v1322
      %v1667 = vpop.f32.mrf.mxu0
      %v1668 = vadd.f32 0.0, %v1667
      %v1669 = vpop.f32.mrf.mxu0
      %v1670 = vadd.f32 0.0, %v1669
      %1671 = vmatmul.bf16.gmra.mxu0 %v1324
      %v1672 = vpop.f32.mrf.mxu0
      %v1673 = vadd.f32 0.0, %v1672
      %v1674 = vpop.f32.mrf.mxu0
      %v1675 = vadd.f32 0.0, %v1674
      %1676 = vmatmul.bf16.gmra.mxu0 %v1326
      %v1677 = vpop.f32.mrf.mxu0
      %v1678 = vadd.f32 0.0, %v1677
      %v1679 = vpop.f32.mrf.mxu0
      %v1680 = vadd.f32 0.0, %v1679
      %1681 = vmatmul.bf16.gmra.mxu0 %v1328
      %v1682 = vpop.f32.mrf.mxu0
      %v1683 = vadd.f32 0.0, %v1682
      %v1684 = vpop.f32.mrf.mxu0
      %v1685 = vadd.f32 0.0, %v1684
      %1686 = vmatmul.bf16.gmra.mxu0 %v1330
      %v1687 = vpop.f32.mrf.mxu0
      %v1688 = vadd.f32 0.0, %v1687
      %v1689 = vpop.f32.mrf.mxu0
      %v1690 = vadd.f32 0.0, %v1689
      %1691 = vmatmul.bf16.gmra.mxu0 %v1332
      %v1692 = vpop.f32.mrf.mxu0
      %v1693 = vadd.f32 0.0, %v1692
      %v1694 = vpop.f32.mrf.mxu0
      %v1695 = vadd.f32 0.0, %v1694
      %1696 = vmatmul.bf16.gmra.mxu0 %v1334
      %v1697 = vpop.f32.mrf.mxu0
      %v1698 = vadd.f32 0.0, %v1697
      %v1699 = vpop.f32.mrf.mxu0
      %v1700 = vadd.f32 0.0, %v1699
      %1701 = vmatmul.bf16.gmra.mxu0 %v1336
      %v1702 = vpop.f32.mrf.mxu0
      %v1703 = vadd.f32 0.0, %v1702
      %v1704 = vpop.f32.mrf.mxu0
      %v1705 = vadd.f32 0.0, %v1704
      %1706 = vmatmul.bf16.gmra.mxu0 %v1338
      %v1707 = vpop.f32.mrf.mxu0
      %v1708 = vadd.f32 0.0, %v1707
      %v1709 = vpop.f32.mrf.mxu0
      %v1710 = vadd.f32 0.0, %v1709
      %1711 = vmatmul.bf16.gmra.mxu0 %v1340
      %v1712 = vpop.f32.mrf.mxu0
      %v1713 = vadd.f32 0.0, %v1712
      %v1714 = vpop.f32.mrf.mxu0
      %v1715 = vadd.f32 0.0, %v1714
      %1716 = vmatmul.bf16.gmra.mxu0 %v1342
      %v1717 = vpop.f32.mrf.mxu0
      %v1718 = vadd.f32 0.0, %v1717
      %v1719 = vpop.f32.mrf.mxu0
      %v1720 = vadd.f32 0.0, %v1719
      %1721 = vmatmul.bf16.gmra.mxu0 %v1344
      %v1722 = vpop.f32.mrf.mxu0
      %v1723 = vadd.f32 0.0, %v1722
      %v1724 = vpop.f32.mrf.mxu0
      %v1725 = vadd.f32 0.0, %v1724
      %1726 = vmatmul.bf16.gmra.mxu0 %v1346
      %v1727 = vpop.f32.mrf.mxu0
      %v1728 = vadd.f32 0.0, %v1727
      %v1729 = vpop.f32.mrf.mxu0
      %v1730 = vadd.f32 0.0, %v1729
      %1731 = vmatmul.bf16.gmra.mxu0 %v1348
      %v1732 = vpop.f32.mrf.mxu0
      %v1733 = vadd.f32 0.0, %v1732
      %v1734 = vpop.f32.mrf.mxu0
      %v1735 = vadd.f32 0.0, %v1734
      %1736 = vmatmul.bf16.gmra.mxu0 %v1350
      %v1737 = vpop.f32.mrf.mxu0
      %v1738 = vadd.f32 0.0, %v1737
      %v1739 = vpop.f32.mrf.mxu0
      %v1740 = vadd.f32 0.0, %v1739
      %1741 = vmatmul.bf16.gmra.mxu0 %v1352
      %v1742 = vpop.f32.mrf.mxu0
      %v1743 = vadd.f32 0.0, %v1742
      %v1744 = vpop.f32.mrf.mxu0
      %v1745 = vadd.f32 0.0, %v1744
      %1746 = vmatmul.bf16.gmra.mxu0 %v1354
      %v1747 = vpop.f32.mrf.mxu0
      %v1748 = vadd.f32 0.0, %v1747
      %v1749 = vpop.f32.mrf.mxu0
      %v1750 = vadd.f32 0.0, %v1749
      %1751 = vmatmul.bf16.gmra.mxu0 %v1597
      %v1752 = vpop.f32.mrf.mxu0
      %v1753 = vadd.f32 0.0, %v1752
      %v1754 = vpop.f32.mrf.mxu0
      %v1755 = vadd.f32 0.0, %v1754
      %1756 = vmatmul.bf16.gmra.mxu0 %v1596
      %v1757 = vpop.f32.mrf.mxu0
      %v1758 = vadd.f32 0.0, %v1757
      %v1759 = vpop.f32.mrf.mxu0
      %1760 = vdwg.mxu0
      %v1761 = vadd.f32 %v1537, %v1658
      %v1762 = vadd.f32 %v1538, %v1660
      %v1763 = vadd.f32 %v1539, %v1663
      %v1764 = vadd.f32 %v1540, %v1665
      %v1765 = vadd.f32 %v1541, %v1668
      %v1766 = vadd.f32 %v1542, %v1670
      %v1767 = vadd.f32 %v1543, %v1673
      %v1768 = vadd.f32 %v1544, %v1675
      %v1769 = vadd.f32 %v1545, %v1678
      %v1770 = vadd.f32 %v1546, %v1680
      %v1771 = vadd.f32 %v1547, %v1683
      %v1772 = vadd.f32 %v1548, %v1685
      %v1773 = vadd.f32 %v1549, %v1688
      %v1774 = vadd.f32 %v1550, %v1690
      %v1775 = vadd.f32 %v1551, %v1693
      %v1776 = vadd.f32 %v1552, %v1695
      %v1777 = vadd.f32 %v1553, %v1698
      %v1778 = vadd.f32 %v1554, %v1700
      %v1779 = vadd.f32 %v1555, %v1703
      %v1780 = vadd.f32 %v1556, %v1705
      %v1781 = vadd.f32 %v1557, %v1708
      %v1782 = vadd.f32 %v1558, %v1710
      %v1783 = vadd.f32 %v1559, %v1713
      %v1784 = vadd.f32 %v1560, %v1715
      %v1785 = vadd.f32 %v1561, %v1718
      %v1786 = vadd.f32 %v1562, %v1720
      %v1787 = vadd.f32 %v1563, %v1723
      %v1788 = vadd.f32 %v1564, %v1725
      %v1789 = vadd.f32 %v1565, %v1728
      %v1790 = vadd.f32 %v1566, %v1730
      %v1791 = vadd.f32 %v1567, %v1733
      %v1792 = vadd.f32 %v1568, %v1735
      %v1793 = vadd.f32 %v1569, %v1738
      %v1794 = vadd.f32 %v1570, %v1740
      %v1795 = vadd.f32 %v1571, %v1743
      %v1796 = vadd.f32 %v1572, %v1745
      %v1797 = vadd.f32 %v1573, %v1748
      %v1798 = vadd.f32 %v1574, %v1750
      %v1799 = vadd.f32 %v1575, %v1753
      %v1800 = vadd.f32 %v1576, %v1755
      %v1801 = vadd.f32 %v1577, %v1758
      %s1802 = scalar_lea.vmem %s2, 256
      %v1803 = vld [vmem:[%s1802] sm:$0xf]
      %v1804 = vld [vmem:[%s1802 + $0x4] sm:$0xf]
      %v1805 = vld [vmem:[%s1802 + $0x8] sm:$0xf]
      %v1806 = vld [vmem:[%s1802 + $0xc] sm:$0xf]
      %v1807 = vld [vmem:[%s1802 + $0x10] sm:$0xf]
      %v1808 = vld [vmem:[%s1802 + $0x14] sm:$0xf]
      %v1809 = vld [vmem:[%s1802 + $0x18] sm:$0xf]
      %v1810 = vld [vmem:[%s1802 + $0x1c] sm:$0xf]
      %v1811 = vld [vmem:[%s1802 + $0x20] sm:$0xf]
      %v1812 = vld [vmem:[%s1802 + $0x24] sm:$0xf]
      %v1813 = vld [vmem:[%s1802 + $0x28] sm:$0xf]
      %v1814 = vld [vmem:[%s1802 + $0x2c] sm:$0xf]
      %v1815 = vld [vmem:[%s1802 + $0x30] sm:$0xf]
      %v1816 = vld [vmem:[%s1802 + $0x34] sm:$0xf]
      %v1817 = vld [vmem:[%s1802 + $0x38] sm:$0xf]
      %v1818 = vld [vmem:[%s1802 + $0x3c] sm:$0xf]
      %vm1819 = vsmask.f32 6400
      %v1820 = vrot.slane %v796, 1
      %v1821 = vrot.slane %v792, 2
      %v1822 = vor.u32 %v1820, %v1821
      %v1823 = vrot.slane %v804, 1
      %v1824 = vrot.slane %v800, 2
      %v1825 = vor.u32 %v1823, %v1824
      %v1826 = vsel %vm1819, %v1822, %v1825
      %v1827 = vrot.slane %v812, 1
      %v1828 = vrot.slane %v808, 2
      %v1829 = vor.u32 %v1827, %v1828
      %v1830 = vsel %vm1819, %v1825, %v1829
      %v1831 = vrot.slane %v820, 1
      %v1832 = vrot.slane %v816, 2
      %v1833 = vor.u32 %v1831, %v1832
      %v1834 = vsel %vm1819, %v1829, %v1833
      %v1835 = vrot.slane %v828, 1
      %v1836 = vrot.slane %v824, 2
      %v1837 = vor.u32 %v1835, %v1836
      %v1838 = vsel %vm1819, %v1833, %v1837
      %v1839 = vrot.slane %v836, 1
      %v1840 = vrot.slane %v832, 2
      %v1841 = vor.u32 %v1839, %v1840
      %v1842 = vsel %vm1819, %v1837, %v1841
      %v1843 = vrot.slane %v844, 1
      %v1844 = vrot.slane %v840, 2
      %v1845 = vor.u32 %v1843, %v1844
      %v1846 = vsel %vm1819, %v1841, %v1845
      %v1847 = vrot.slane %v852, 1
      %v1848 = vrot.slane %v848, 2
      %v1849 = vor.u32 %v1847, %v1848
      %v1850 = vsel %vm1819, %v1845, %v1849
      %v1851 = vrot.slane %v860, 1
      %v1852 = vrot.slane %v856, 2
      %v1853 = vor.u32 %v1851, %v1852
      %v1854 = vsel %vm1819, %v1849, %v1853
      %v1855 = vrot.slane %v868, 1
      %v1856 = vrot.slane %v864, 2
      %v1857 = vor.u32 %v1855, %v1856
      %v1858 = vsel %vm1819, %v1853, %v1857
      %v1859 = vrot.slane %v876, 1
      %v1860 = vrot.slane %v872, 2
      %v1861 = vor.u32 %v1859, %v1860
      %v1862 = vsel %vm1819, %v1857, %v1861
      %v1863 = vrot.slane %v884, 1
      %v1864 = vrot.slane %v880, 2
      %v1865 = vor.u32 %v1863, %v1864
      %v1866 = vsel %vm1819, %v1861, %v1865
      %v1867 = vrot.slane %v892, 1
      %v1868 = vrot.slane %v888, 2
      %v1869 = vor.u32 %v1867, %v1868
      %v1870 = vsel %vm1819, %v1865, %v1869
      %v1871 = vrot.slane %v900, 1
      %v1872 = vrot.slane %v896, 2
      %v1873 = vor.u32 %v1871, %v1872
      %v1874 = vsel %vm1819, %v1869, %v1873
      %v1875 = vrot.slane %v908, 1
      %v1876 = vrot.slane %v904, 2
      %v1877 = vor.u32 %v1875, %v1876
      %v1878 = vsel %vm1819, %v1873, %v1877
      %v1879 = vrot.slane %v916, 1
      %v1880 = vrot.slane %v912, 2
      %v1881 = vor.u32 %v1879, %v1880
      %v1882 = vsel %vm1819, %v1877, %v1881
      %v1883 = vrot.slane %v924, 1
      %v1884 = vrot.slane %v920, 2
      %v1885 = vor.u32 %v1883, %v1884
      %v1886 = vsel %vm1819, %v1881, %v1885
      %v1887 = vrot.slane %v932, 1
      %v1888 = vrot.slane %v928, 2
      %v1889 = vor.u32 %v1887, %v1888
      %v1890 = vsel %vm1819, %v1885, %v1889
      %v1891 = vrot.slane %v940, 1
      %v1892 = vrot.slane %v936, 2
      %v1893 = vor.u32 %v1891, %v1892
      %v1894 = vsel %vm1819, %v1889, %v1893
      %v1895 = vrot.slane %v948, 1
      %v1896 = vrot.slane %v944, 2
      %v1897 = vor.u32 %v1895, %v1896
      %v1898 = vsel %vm1819, %v1893, %v1897
      %v1900 = vshrl.u32 %v749, 16
      %v1902 = vrot.slane %v1900, 1
      %v1903 = vshll.u32 %v749, 16
      %v1905 = vrot.slane %v1903, 2
      %v1906 = vor.u32 %v1902, %v1905
      %v1907 = vsel %vm1819, %v1897, %v1906
      %v1945 = vunpack.c.l.b16 %v1803
      %v1946 = vunpack.c.l.b16 %v1804
      %v1947 = vunpack.c.l.b16 %v1805
      %v1948 = vunpack.c.l.b16 %v1806
      %v1949 = vunpack.c.l.b16 %v1807
      %v1950 = vunpack.c.l.b16 %v1808
      %v1951 = vunpack.c.l.b16 %v1809
      %v1952 = vunpack.c.l.b16 %v1810
      %v1953 = vunpack.c.l.b16 %v1811
      %v1954 = vunpack.c.l.b16 %v1812
      %v1955 = vunpack.c.l.b16 %v1813
      %v1956 = vunpack.c.l.b16 %v1814
      %v1957 = vunpack.c.l.b16 %v1815
      %v1958 = vunpack.c.l.b16 %v1816
      %v1959 = vunpack.c.l.b16 %v1817
      %v1960 = vunpack.c.l.b16 %v1818
      %v1961 = vpack.c.b16 %v1946, %v1945
      %v1962 = vpack.c.b16 %v1948, %v1947
      %v1963 = vpack.c.b16 %v1950, %v1949
      %v1964 = vpack.c.b16 %v1952, %v1951
      %v1965 = vpack.c.b16 %v1954, %v1953
      %v1966 = vpack.c.b16 %v1956, %v1955
      %v1967 = vpack.c.b16 %v1958, %v1957
      %v1968 = vpack.c.b16 %v1960, %v1959
      %1977 = vmatpush.bf16.msra.mxu0 %v1968
      %1978 = vmatpush.bf16.msra.mxu0 %v1967
      %1979 = vmatpush.bf16.msra.mxu0 %v1966
      %1980 = vmatpush.bf16.msra.mxu0 %v1965
      %1981 = vmatpush.bf16.msra.mxu0 %v1964
      %1982 = vmatpush.bf16.msra.mxu0 %v1963
      %1983 = vmatpush.bf16.msra.mxu0 %v1962
      %1984 = vmatpush.bf16.msra.mxu0 %v1961
      %1985 = vmatmul.bf16.gmra.mxu0 %v1826
      %v1986 = vpop.f32.mrf.mxu0
      %v1987 = vadd.f32 0.0, %v1986
      %v1988 = vpop.f32.mrf.mxu0
      %v1989 = vadd.f32 0.0, %v1988
      %1990 = vmatmul.bf16.gmra.mxu0 %v1830
      %v1991 = vpop.f32.mrf.mxu0
      %v1992 = vadd.f32 0.0, %v1991
      %v1993 = vpop.f32.mrf.mxu0
      %v1994 = vadd.f32 0.0, %v1993
      %1995 = vmatmul.bf16.gmra.mxu0 %v1834
      %v1996 = vpop.f32.mrf.mxu0
      %v1997 = vadd.f32 0.0, %v1996
      %v1998 = vpop.f32.mrf.mxu0
      %v1999 = vadd.f32 0.0, %v1998
      %2000 = vmatmul.bf16.gmra.mxu0 %v1838
      %v2001 = vpop.f32.mrf.mxu0
      %v2002 = vadd.f32 0.0, %v2001
      %v2003 = vpop.f32.mrf.mxu0
      %v2004 = vadd.f32 0.0, %v2003
      %2005 = vmatmul.bf16.gmra.mxu0 %v1842
      %v2006 = vpop.f32.mrf.mxu0
      %v2007 = vadd.f32 0.0, %v2006
      %v2008 = vpop.f32.mrf.mxu0
      %v2009 = vadd.f32 0.0, %v2008
      %2010 = vmatmul.bf16.gmra.mxu0 %v1846
      %v2011 = vpop.f32.mrf.mxu0
      %v2012 = vadd.f32 0.0, %v2011
      %v2013 = vpop.f32.mrf.mxu0
      %v2014 = vadd.f32 0.0, %v2013
      %2015 = vmatmul.bf16.gmra.mxu0 %v1850
      %v2016 = vpop.f32.mrf.mxu0
      %v2017 = vadd.f32 0.0, %v2016
      %v2018 = vpop.f32.mrf.mxu0
      %v2019 = vadd.f32 0.0, %v2018
      %2020 = vmatmul.bf16.gmra.mxu0 %v1854
      %v2021 = vpop.f32.mrf.mxu0
      %v2022 = vadd.f32 0.0, %v2021
      %v2023 = vpop.f32.mrf.mxu0
      %v2024 = vadd.f32 0.0, %v2023
      %2025 = vmatmul.bf16.gmra.mxu0 %v1858
      %v2026 = vpop.f32.mrf.mxu0
      %v2027 = vadd.f32 0.0, %v2026
      %v2028 = vpop.f32.mrf.mxu0
      %v2029 = vadd.f32 0.0, %v2028
      %2030 = vmatmul.bf16.gmra.mxu0 %v1862
      %v2031 = vpop.f32.mrf.mxu0
      %v2032 = vadd.f32 0.0, %v2031
      %v2033 = vpop.f32.mrf.mxu0
      %v2034 = vadd.f32 0.0, %v2033
      %2035 = vmatmul.bf16.gmra.mxu0 %v1866
      %v2036 = vpop.f32.mrf.mxu0
      %v2037 = vadd.f32 0.0, %v2036
      %v2038 = vpop.f32.mrf.mxu0
      %v2039 = vadd.f32 0.0, %v2038
      %2040 = vmatmul.bf16.gmra.mxu0 %v1870
      %v2041 = vpop.f32.mrf.mxu0
      %v2042 = vadd.f32 0.0, %v2041
      %v2043 = vpop.f32.mrf.mxu0
      %v2044 = vadd.f32 0.0, %v2043
      %2045 = vmatmul.bf16.gmra.mxu0 %v1874
      %v2046 = vpop.f32.mrf.mxu0
      %v2047 = vadd.f32 0.0, %v2046
      %v2048 = vpop.f32.mrf.mxu0
      %v2049 = vadd.f32 0.0, %v2048
      %2050 = vmatmul.bf16.gmra.mxu0 %v1878
      %v2051 = vpop.f32.mrf.mxu0
      %v2052 = vadd.f32 0.0, %v2051
      %v2053 = vpop.f32.mrf.mxu0
      %v2054 = vadd.f32 0.0, %v2053
      %2055 = vmatmul.bf16.gmra.mxu0 %v1882
      %v2056 = vpop.f32.mrf.mxu0
      %v2057 = vadd.f32 0.0, %v2056
      %v2058 = vpop.f32.mrf.mxu0
      %v2059 = vadd.f32 0.0, %v2058
      %2060 = vmatmul.bf16.gmra.mxu0 %v1886
      %v2061 = vpop.f32.mrf.mxu0
      %v2062 = vadd.f32 0.0, %v2061
      %v2063 = vpop.f32.mrf.mxu0
      %v2064 = vadd.f32 0.0, %v2063
      %2065 = vmatmul.bf16.gmra.mxu0 %v1890
      %v2066 = vpop.f32.mrf.mxu0
      %v2067 = vadd.f32 0.0, %v2066
      %v2068 = vpop.f32.mrf.mxu0
      %v2069 = vadd.f32 0.0, %v2068
      %2070 = vmatmul.bf16.gmra.mxu0 %v1894
      %v2071 = vpop.f32.mrf.mxu0
      %v2072 = vadd.f32 0.0, %v2071
      %v2073 = vpop.f32.mrf.mxu0
      %v2074 = vadd.f32 0.0, %v2073
      %2075 = vmatmul.bf16.gmra.mxu0 %v1898
      %v2076 = vpop.f32.mrf.mxu0
      %v2077 = vadd.f32 0.0, %v2076
      %v2078 = vpop.f32.mrf.mxu0
      %v2079 = vadd.f32 0.0, %v2078
      %2080 = vmatmul.bf16.gmra.mxu0 %v1907
      %v2081 = vpop.f32.mrf.mxu0
      %v2082 = vadd.f32 0.0, %v2081
      %v2083 = vpop.f32.mrf.mxu0
      %v2084 = vadd.f32 0.0, %v2083
      %2085 = vmatmul.bf16.gmra.mxu0 %v1906
      %v2086 = vpop.f32.mrf.mxu0
      %v2087 = vadd.f32 0.0, %v2086
      %v2088 = vpop.f32.mrf.mxu0
      %2089 = vdwg.mxu0
      %v2090 = vadd.f32 %v1761, %v1987
      %v2091 = vadd.f32 %v1762, %v1989
      %v2092 = vadd.f32 %v1763, %v1992
      %v2093 = vadd.f32 %v1764, %v1994
      %v2094 = vadd.f32 %v1765, %v1997
      %v2095 = vadd.f32 %v1766, %v1999
      %v2096 = vadd.f32 %v1767, %v2002
      %v2097 = vadd.f32 %v1768, %v2004
      %v2098 = vadd.f32 %v1769, %v2007
      %v2099 = vadd.f32 %v1770, %v2009
      %v2100 = vadd.f32 %v1771, %v2012
      %v2101 = vadd.f32 %v1772, %v2014
      %v2102 = vadd.f32 %v1773, %v2017
      %v2103 = vadd.f32 %v1774, %v2019
      %v2104 = vadd.f32 %v1775, %v2022
      %v2105 = vadd.f32 %v1776, %v2024
      %v2106 = vadd.f32 %v1777, %v2027
      %v2107 = vadd.f32 %v1778, %v2029
      %v2108 = vadd.f32 %v1779, %v2032
      %v2109 = vadd.f32 %v1780, %v2034
      %v2110 = vadd.f32 %v1781, %v2037
      %v2111 = vadd.f32 %v1782, %v2039
      %v2112 = vadd.f32 %v1783, %v2042
      %v2113 = vadd.f32 %v1784, %v2044
      %v2114 = vadd.f32 %v1785, %v2047
      %v2115 = vadd.f32 %v1786, %v2049
      %v2116 = vadd.f32 %v1787, %v2052
      %v2117 = vadd.f32 %v1788, %v2054
      %v2118 = vadd.f32 %v1789, %v2057
      %v2119 = vadd.f32 %v1790, %v2059
      %v2120 = vadd.f32 %v1791, %v2062
      %v2121 = vadd.f32 %v1792, %v2064
      %v2122 = vadd.f32 %v1793, %v2067
      %v2123 = vadd.f32 %v1794, %v2069
      %v2124 = vadd.f32 %v1795, %v2072
      %v2125 = vadd.f32 %v1796, %v2074
      %v2126 = vadd.f32 %v1797, %v2077
      %v2127 = vadd.f32 %v1798, %v2079
      %v2128 = vadd.f32 %v1799, %v2082
      %v2129 = vadd.f32 %v1800, %v2084
      %v2130 = vadd.f32 %v1801, %v2087
      %s2131 = scalar_lea.vmem %s2, 320
      %v2132 = vld [vmem:[%s2131] sm:$0xf]
      %v2133 = vld [vmem:[%s2131 + $0x4] sm:$0xf]
      %v2134 = vld [vmem:[%s2131 + $0x8] sm:$0xf]
      %v2135 = vld [vmem:[%s2131 + $0xc] sm:$0xf]
      %v2136 = vld [vmem:[%s2131 + $0x10] sm:$0xf]
      %v2137 = vld [vmem:[%s2131 + $0x14] sm:$0xf]
      %v2138 = vld [vmem:[%s2131 + $0x18] sm:$0xf]
      %v2139 = vld [vmem:[%s2131 + $0x1c] sm:$0xf]
      %v2140 = vld [vmem:[%s2131 + $0x20] sm:$0xf]
      %v2141 = vld [vmem:[%s2131 + $0x24] sm:$0xf]
      %v2142 = vld [vmem:[%s2131 + $0x28] sm:$0xf]
      %v2143 = vld [vmem:[%s2131 + $0x2c] sm:$0xf]
      %v2144 = vld [vmem:[%s2131 + $0x30] sm:$0xf]
      %v2145 = vld [vmem:[%s2131 + $0x34] sm:$0xf]
      %v2146 = vld [vmem:[%s2131 + $0x38] sm:$0xf]
      %v2147 = vld [vmem:[%s2131 + $0x3c] sm:$0xf]
      %vm2148 = vcmask 1045504
      %v2149 = vrot.slane %v745, 2
      %v2150 = vrot.slane %v550, 2
      %v2151 = vsel %vm2148, %v2149, %v2150
      %v2152 = vrot.slane %v559, 2
      %v2153 = vsel %vm2148, %v2150, %v2152
      %v2154 = vrot.slane %v568, 2
      %v2155 = vsel %vm2148, %v2152, %v2154
      %v2156 = vrot.slane %v577, 2
      %v2157 = vsel %vm2148, %v2154, %v2156
      %v2158 = vrot.slane %v586, 2
      %v2159 = vsel %vm2148, %v2156, %v2158
      %v2160 = vrot.slane %v595, 2
      %v2161 = vsel %vm2148, %v2158, %v2160
      %v2162 = vrot.slane %v604, 2
      %v2163 = vsel %vm2148, %v2160, %v2162
      %v2164 = vrot.slane %v613, 2
      %v2165 = vsel %vm2148, %v2162, %v2164
      %v2166 = vrot.slane %v622, 2
      %v2167 = vsel %vm2148, %v2164, %v2166
      %v2168 = vrot.slane %v631, 2
      %v2169 = vsel %vm2148, %v2166, %v2168
      %v2170 = vrot.slane %v640, 2
      %v2171 = vsel %vm2148, %v2168, %v2170
      %v2172 = vrot.slane %v649, 2
      %v2173 = vsel %vm2148, %v2170, %v2172
      %v2174 = vrot.slane %v658, 2
      %v2175 = vsel %vm2148, %v2172, %v2174
      %v2176 = vrot.slane %v667, 2
      %v2177 = vsel %vm2148, %v2174, %v2176
      %v2178 = vrot.slane %v676, 2
      %v2179 = vsel %vm2148, %v2176, %v2178
      %v2180 = vrot.slane %v685, 2
      %v2181 = vsel %vm2148, %v2178, %v2180
      %v2182 = vrot.slane %v694, 2
      %v2183 = vsel %vm2148, %v2180, %v2182
      %v2184 = vrot.slane %v703, 2
      %v2185 = vsel %vm2148, %v2182, %v2184
      %v2186 = vrot.slane %v712, 2
      %v2187 = vsel %vm2148, %v2184, %v2186
      %v2188 = vrot.slane %v749, 2
      %v2189 = vsel %vm2148, %v2186, %v2188
      %v2227 = vunpack.c.l.b16 %v2132
      %v2228 = vunpack.c.l.b16 %v2133
      %v2229 = vunpack.c.l.b16 %v2134
      %v2230 = vunpack.c.l.b16 %v2135
      %v2231 = vunpack.c.l.b16 %v2136
      %v2232 = vunpack.c.l.b16 %v2137
      %v2233 = vunpack.c.l.b16 %v2138
      %v2234 = vunpack.c.l.b16 %v2139
      %v2235 = vunpack.c.l.b16 %v2140
      %v2236 = vunpack.c.l.b16 %v2141
      %v2237 = vunpack.c.l.b16 %v2142
      %v2238 = vunpack.c.l.b16 %v2143
      %v2239 = vunpack.c.l.b16 %v2144
      %v2240 = vunpack.c.l.b16 %v2145
      %v2241 = vunpack.c.l.b16 %v2146
      %v2242 = vunpack.c.l.b16 %v2147
      %v2243 = vpack.c.b16 %v2228, %v2227
      %v2244 = vpack.c.b16 %v2230, %v2229
      %v2245 = vpack.c.b16 %v2232, %v2231
      %v2246 = vpack.c.b16 %v2234, %v2233
      %v2247 = vpack.c.b16 %v2236, %v2235
      %v2248 = vpack.c.b16 %v2238, %v2237
      %v2249 = vpack.c.b16 %v2240, %v2239
      %v2250 = vpack.c.b16 %v2242, %v2241
      %2259 = vmatpush.bf16.msra.mxu0 %v2250
      %2260 = vmatpush.bf16.msra.mxu0 %v2249
      %2261 = vmatpush.bf16.msra.mxu0 %v2248
      %2262 = vmatpush.bf16.msra.mxu0 %v2247
      %2263 = vmatpush.bf16.msra.mxu0 %v2246
      %2264 = vmatpush.bf16.msra.mxu0 %v2245
      %2265 = vmatpush.bf16.msra.mxu0 %v2244
      %2266 = vmatpush.bf16.msra.mxu0 %v2243
      %2267 = vmatmul.bf16.gmra.mxu0 %v2151
      %v2268 = vpop.f32.mrf.mxu0
      %v2269 = vadd.f32 0.0, %v2268
      %v2270 = vpop.f32.mrf.mxu0
      %v2271 = vadd.f32 0.0, %v2270
      %2272 = vmatmul.bf16.gmra.mxu0 %v2153
      %v2273 = vpop.f32.mrf.mxu0
      %v2274 = vadd.f32 0.0, %v2273
      %v2275 = vpop.f32.mrf.mxu0
      %v2276 = vadd.f32 0.0, %v2275
      %2277 = vmatmul.bf16.gmra.mxu0 %v2155
      %v2278 = vpop.f32.mrf.mxu0
      %v2279 = vadd.f32 0.0, %v2278
      %v2280 = vpop.f32.mrf.mxu0
      %v2281 = vadd.f32 0.0, %v2280
      %2282 = vmatmul.bf16.gmra.mxu0 %v2157
      %v2283 = vpop.f32.mrf.mxu0
      %v2284 = vadd.f32 0.0, %v2283
      %v2285 = vpop.f32.mrf.mxu0
      %v2286 = vadd.f32 0.0, %v2285
      %2287 = vmatmul.bf16.gmra.mxu0 %v2159
      %v2288 = vpop.f32.mrf.mxu0
      %v2289 = vadd.f32 0.0, %v2288
      %v2290 = vpop.f32.mrf.mxu0
      %v2291 = vadd.f32 0.0, %v2290
      %2292 = vmatmul.bf16.gmra.mxu0 %v2161
      %v2293 = vpop.f32.mrf.mxu0
      %v2294 = vadd.f32 0.0, %v2293
      %v2295 = vpop.f32.mrf.mxu0
      %v2296 = vadd.f32 0.0, %v2295
      %2297 = vmatmul.bf16.gmra.mxu0 %v2163
      %v2298 = vpop.f32.mrf.mxu0
      %v2299 = vadd.f32 0.0, %v2298
      %v2300 = vpop.f32.mrf.mxu0
      %v2301 = vadd.f32 0.0, %v2300
      %2302 = vmatmul.bf16.gmra.mxu0 %v2165
      %v2303 = vpop.f32.mrf.mxu0
      %v2304 = vadd.f32 0.0, %v2303
      %v2305 = vpop.f32.mrf.mxu0
      %v2306 = vadd.f32 0.0, %v2305
      %2307 = vmatmul.bf16.gmra.mxu0 %v2167
      %v2308 = vpop.f32.mrf.mxu0
      %v2309 = vadd.f32 0.0, %v2308
      %v2310 = vpop.f32.mrf.mxu0
      %v2311 = vadd.f32 0.0, %v2310
      %2312 = vmatmul.bf16.gmra.mxu0 %v2169
      %v2313 = vpop.f32.mrf.mxu0
      %v2314 = vadd.f32 0.0, %v2313
      %v2315 = vpop.f32.mrf.mxu0
      %v2316 = vadd.f32 0.0, %v2315
      %2317 = vmatmul.bf16.gmra.mxu0 %v2171
      %v2318 = vpop.f32.mrf.mxu0
      %v2319 = vadd.f32 0.0, %v2318
      %v2320 = vpop.f32.mrf.mxu0
      %v2321 = vadd.f32 0.0, %v2320
      %2322 = vmatmul.bf16.gmra.mxu0 %v2173
      %v2323 = vpop.f32.mrf.mxu0
      %v2324 = vadd.f32 0.0, %v2323
      %v2325 = vpop.f32.mrf.mxu0
      %v2326 = vadd.f32 0.0, %v2325
      %2327 = vmatmul.bf16.gmra.mxu0 %v2175
      %v2328 = vpop.f32.mrf.mxu0
      %v2329 = vadd.f32 0.0, %v2328
      %v2330 = vpop.f32.mrf.mxu0
      %v2331 = vadd.f32 0.0, %v2330
      %2332 = vmatmul.bf16.gmra.mxu0 %v2177
      %v2333 = vpop.f32.mrf.mxu0
      %v2334 = vadd.f32 0.0, %v2333
      %v2335 = vpop.f32.mrf.mxu0
      %v2336 = vadd.f32 0.0, %v2335
      %2337 = vmatmul.bf16.gmra.mxu0 %v2179
      %v2338 = vpop.f32.mrf.mxu0
      %v2339 = vadd.f32 0.0, %v2338
      %v2340 = vpop.f32.mrf.mxu0
      %v2341 = vadd.f32 0.0, %v2340
      %2342 = vmatmul.bf16.gmra.mxu0 %v2181
      %v2343 = vpop.f32.mrf.mxu0
      %v2344 = vadd.f32 0.0, %v2343
      %v2345 = vpop.f32.mrf.mxu0
      %v2346 = vadd.f32 0.0, %v2345
      %2347 = vmatmul.bf16.gmra.mxu0 %v2183
      %v2348 = vpop.f32.mrf.mxu0
      %v2349 = vadd.f32 0.0, %v2348
      %v2350 = vpop.f32.mrf.mxu0
      %v2351 = vadd.f32 0.0, %v2350
      %2352 = vmatmul.bf16.gmra.mxu0 %v2185
      %v2353 = vpop.f32.mrf.mxu0
      %v2354 = vadd.f32 0.0, %v2353
      %v2355 = vpop.f32.mrf.mxu0
      %v2356 = vadd.f32 0.0, %v2355
      %2357 = vmatmul.bf16.gmra.mxu0 %v2187
      %v2358 = vpop.f32.mrf.mxu0
      %v2359 = vadd.f32 0.0, %v2358
      %v2360 = vpop.f32.mrf.mxu0
      %v2361 = vadd.f32 0.0, %v2360
      %2362 = vmatmul.bf16.gmra.mxu0 %v2189
      %v2363 = vpop.f32.mrf.mxu0
      %v2364 = vadd.f32 0.0, %v2363
      %v2365 = vpop.f32.mrf.mxu0
      %v2366 = vadd.f32 0.0, %v2365
      %2367 = vmatmul.bf16.gmra.mxu0 %v2188
      %v2368 = vpop.f32.mrf.mxu0
      %v2369 = vadd.f32 0.0, %v2368
      %v2370 = vpop.f32.mrf.mxu0
      %2371 = vdwg.mxu0
      %v2372 = vadd.f32 %v2090, %v2269
      %v2373 = vadd.f32 %v2091, %v2271
      %v2374 = vadd.f32 %v2092, %v2274
      %v2375 = vadd.f32 %v2093, %v2276
      %v2376 = vadd.f32 %v2094, %v2279
      %v2377 = vadd.f32 %v2095, %v2281
      %v2378 = vadd.f32 %v2096, %v2284
      %v2379 = vadd.f32 %v2097, %v2286
      %v2380 = vadd.f32 %v2098, %v2289
      %v2381 = vadd.f32 %v2099, %v2291
      %v2382 = vadd.f32 %v2100, %v2294
      %v2383 = vadd.f32 %v2101, %v2296
      %v2384 = vadd.f32 %v2102, %v2299
      %v2385 = vadd.f32 %v2103, %v2301
      %v2386 = vadd.f32 %v2104, %v2304
      %v2387 = vadd.f32 %v2105, %v2306
      %v2388 = vadd.f32 %v2106, %v2309
      %v2389 = vadd.f32 %v2107, %v2311
      %v2390 = vadd.f32 %v2108, %v2314
      %v2391 = vadd.f32 %v2109, %v2316
      %v2392 = vadd.f32 %v2110, %v2319
      %v2393 = vadd.f32 %v2111, %v2321
      %v2394 = vadd.f32 %v2112, %v2324
      %v2395 = vadd.f32 %v2113, %v2326
      %v2396 = vadd.f32 %v2114, %v2329
      %v2397 = vadd.f32 %v2115, %v2331
      %v2398 = vadd.f32 %v2116, %v2334
      %v2399 = vadd.f32 %v2117, %v2336
      %v2400 = vadd.f32 %v2118, %v2339
      %v2401 = vadd.f32 %v2119, %v2341
      %v2402 = vadd.f32 %v2120, %v2344
      %v2403 = vadd.f32 %v2121, %v2346
      %v2404 = vadd.f32 %v2122, %v2349
      %v2405 = vadd.f32 %v2123, %v2351
      %v2406 = vadd.f32 %v2124, %v2354
      %v2407 = vadd.f32 %v2125, %v2356
      %v2408 = vadd.f32 %v2126, %v2359
      %v2409 = vadd.f32 %v2127, %v2361
      %v2410 = vadd.f32 %v2128, %v2364
      %v2411 = vadd.f32 %v2129, %v2366
      %v2412 = vadd.f32 %v2130, %v2369
      %s2413 = scalar_lea.vmem %s2, 384
      %v2414 = vld [vmem:[%s2413] sm:$0xf]
      %v2415 = vld [vmem:[%s2413 + $0x4] sm:$0xf]
      %v2416 = vld [vmem:[%s2413 + $0x8] sm:$0xf]
      %v2417 = vld [vmem:[%s2413 + $0xc] sm:$0xf]
      %v2418 = vld [vmem:[%s2413 + $0x10] sm:$0xf]
      %v2419 = vld [vmem:[%s2413 + $0x14] sm:$0xf]
      %v2420 = vld [vmem:[%s2413 + $0x18] sm:$0xf]
      %v2421 = vld [vmem:[%s2413 + $0x1c] sm:$0xf]
      %v2422 = vld [vmem:[%s2413 + $0x20] sm:$0xf]
      %v2423 = vld [vmem:[%s2413 + $0x24] sm:$0xf]
      %v2424 = vld [vmem:[%s2413 + $0x28] sm:$0xf]
      %v2425 = vld [vmem:[%s2413 + $0x2c] sm:$0xf]
      %v2426 = vld [vmem:[%s2413 + $0x30] sm:$0xf]
      %v2427 = vld [vmem:[%s2413 + $0x34] sm:$0xf]
      %v2428 = vld [vmem:[%s2413 + $0x38] sm:$0xf]
      %v2429 = vld [vmem:[%s2413 + $0x3c] sm:$0xf]
      %v2430 = vrot.slane 0, 2
      %v2431 = vsel %vm2148, %v2188, %v2430
      %v2450 = vunpack.c.l.b16 %v2414
      %v2451 = vunpack.c.l.b16 %v2415
      %v2452 = vunpack.c.l.b16 %v2416
      %v2453 = vunpack.c.l.b16 %v2417
      %v2454 = vunpack.c.l.b16 %v2418
      %v2455 = vunpack.c.l.b16 %v2419
      %v2456 = vunpack.c.l.b16 %v2420
      %v2457 = vunpack.c.l.b16 %v2421
      %v2458 = vunpack.c.l.b16 %v2422
      %v2459 = vunpack.c.l.b16 %v2423
      %v2460 = vunpack.c.l.b16 %v2424
      %v2461 = vunpack.c.l.b16 %v2425
      %v2462 = vunpack.c.l.b16 %v2426
      %v2463 = vunpack.c.l.b16 %v2427
      %v2464 = vunpack.c.l.b16 %v2428
      %v2465 = vunpack.c.l.b16 %v2429
      %v2466 = vpack.c.b16 %v2451, %v2450
      %v2467 = vpack.c.b16 %v2453, %v2452
      %v2468 = vpack.c.b16 %v2455, %v2454
      %v2469 = vpack.c.b16 %v2457, %v2456
      %v2470 = vpack.c.b16 %v2459, %v2458
      %v2471 = vpack.c.b16 %v2461, %v2460
      %v2472 = vpack.c.b16 %v2463, %v2462
      %v2473 = vpack.c.b16 %v2465, %v2464
      %2482 = vmatpush.bf16.msra.mxu0 %v2473
      %2483 = vmatpush.bf16.msra.mxu0 %v2472
      %2484 = vmatpush.bf16.msra.mxu0 %v2471
      %2485 = vmatpush.bf16.msra.mxu0 %v2470
      %2486 = vmatpush.bf16.msra.mxu0 %v2469
      %2487 = vmatpush.bf16.msra.mxu0 %v2468
      %2488 = vmatpush.bf16.msra.mxu0 %v2467
      %2489 = vmatpush.bf16.msra.mxu0 %v2466
      %2490 = vmatmul.bf16.gmra.mxu0 %v2153
      %v2491 = vpop.f32.mrf.mxu0
      %v2492 = vadd.f32 0.0, %v2491
      %v2493 = vpop.f32.mrf.mxu0
      %v2494 = vadd.f32 0.0, %v2493
      %2495 = vmatmul.bf16.gmra.mxu0 %v2155
      %v2496 = vpop.f32.mrf.mxu0
      %v2497 = vadd.f32 0.0, %v2496
      %v2498 = vpop.f32.mrf.mxu0
      %v2499 = vadd.f32 0.0, %v2498
      %2500 = vmatmul.bf16.gmra.mxu0 %v2157
      %v2501 = vpop.f32.mrf.mxu0
      %v2502 = vadd.f32 0.0, %v2501
      %v2503 = vpop.f32.mrf.mxu0
      %v2504 = vadd.f32 0.0, %v2503
      %2505 = vmatmul.bf16.gmra.mxu0 %v2159
      %v2506 = vpop.f32.mrf.mxu0
      %v2507 = vadd.f32 0.0, %v2506
      %v2508 = vpop.f32.mrf.mxu0
      %v2509 = vadd.f32 0.0, %v2508
      %2510 = vmatmul.bf16.gmra.mxu0 %v2161
      %v2511 = vpop.f32.mrf.mxu0
      %v2512 = vadd.f32 0.0, %v2511
      %v2513 = vpop.f32.mrf.mxu0
      %v2514 = vadd.f32 0.0, %v2513
      %2515 = vmatmul.bf16.gmra.mxu0 %v2163
      %v2516 = vpop.f32.mrf.mxu0
      %v2517 = vadd.f32 0.0, %v2516
      %v2518 = vpop.f32.mrf.mxu0
      %v2519 = vadd.f32 0.0, %v2518
      %2520 = vmatmul.bf16.gmra.mxu0 %v2165
      %v2521 = vpop.f32.mrf.mxu0
      %v2522 = vadd.f32 0.0, %v2521
      %v2523 = vpop.f32.mrf.mxu0
      %v2524 = vadd.f32 0.0, %v2523
      %2525 = vmatmul.bf16.gmra.mxu0 %v2167
      %v2526 = vpop.f32.mrf.mxu0
      %v2527 = vadd.f32 0.0, %v2526
      %v2528 = vpop.f32.mrf.mxu0
      %v2529 = vadd.f32 0.0, %v2528
      %2530 = vmatmul.bf16.gmra.mxu0 %v2169
      %v2531 = vpop.f32.mrf.mxu0
      %v2532 = vadd.f32 0.0, %v2531
      %v2533 = vpop.f32.mrf.mxu0
      %v2534 = vadd.f32 0.0, %v2533
      %2535 = vmatmul.bf16.gmra.mxu0 %v2171
      %v2536 = vpop.f32.mrf.mxu0
      %v2537 = vadd.f32 0.0, %v2536
      %v2538 = vpop.f32.mrf.mxu0
      %v2539 = vadd.f32 0.0, %v2538
      %2540 = vmatmul.bf16.gmra.mxu0 %v2173
      %v2541 = vpop.f32.mrf.mxu0
      %v2542 = vadd.f32 0.0, %v2541
      %v2543 = vpop.f32.mrf.mxu0
      %v2544 = vadd.f32 0.0, %v2543
      %2545 = vmatmul.bf16.gmra.mxu0 %v2175
      %v2546 = vpop.f32.mrf.mxu0
      %v2547 = vadd.f32 0.0, %v2546
      %v2548 = vpop.f32.mrf.mxu0
      %v2549 = vadd.f32 0.0, %v2548
      %2550 = vmatmul.bf16.gmra.mxu0 %v2177
      %v2551 = vpop.f32.mrf.mxu0
      %v2552 = vadd.f32 0.0, %v2551
      %v2553 = vpop.f32.mrf.mxu0
      %v2554 = vadd.f32 0.0, %v2553
      %2555 = vmatmul.bf16.gmra.mxu0 %v2179
      %v2556 = vpop.f32.mrf.mxu0
      %v2557 = vadd.f32 0.0, %v2556
      %v2558 = vpop.f32.mrf.mxu0
      %v2559 = vadd.f32 0.0, %v2558
      %2560 = vmatmul.bf16.gmra.mxu0 %v2181
      %v2561 = vpop.f32.mrf.mxu0
      %v2562 = vadd.f32 0.0, %v2561
      %v2563 = vpop.f32.mrf.mxu0
      %v2564 = vadd.f32 0.0, %v2563
      %2565 = vmatmul.bf16.gmra.mxu0 %v2183
      %v2566 = vpop.f32.mrf.mxu0
      %v2567 = vadd.f32 0.0, %v2566
      %v2568 = vpop.f32.mrf.mxu0
      %v2569 = vadd.f32 0.0, %v2568
      %2570 = vmatmul.bf16.gmra.mxu0 %v2185
      %v2571 = vpop.f32.mrf.mxu0
      %v2572 = vadd.f32 0.0, %v2571
      %v2573 = vpop.f32.mrf.mxu0
      %v2574 = vadd.f32 0.0, %v2573
      %2575 = vmatmul.bf16.gmra.mxu0 %v2187
      %v2576 = vpop.f32.mrf.mxu0
      %v2577 = vadd.f32 0.0, %v2576
      %v2578 = vpop.f32.mrf.mxu0
      %v2579 = vadd.f32 0.0, %v2578
      %2580 = vmatmul.bf16.gmra.mxu0 %v2189
      %v2581 = vpop.f32.mrf.mxu0
      %v2582 = vadd.f32 0.0, %v2581
      %v2583 = vpop.f32.mrf.mxu0
      %v2584 = vadd.f32 0.0, %v2583
      %2585 = vmatmul.bf16.gmra.mxu0 %v2431
      %v2586 = vpop.f32.mrf.mxu0
      %v2587 = vadd.f32 0.0, %v2586
      %v2588 = vpop.f32.mrf.mxu0
      %v2589 = vadd.f32 0.0, %v2588
      %2590 = vmatmul.bf16.gmra.mxu0 %v2430
      %v2591 = vpop.f32.mrf.mxu0
      %v2592 = vadd.f32 0.0, %v2591
      %v2593 = vpop.f32.mrf.mxu0
      %2594 = vdwg.mxu0
      %v2595 = vadd.f32 %v2372, %v2492
      %v2596 = vadd.f32 %v2373, %v2494
      %v2597 = vadd.f32 %v2374, %v2497
      %v2598 = vadd.f32 %v2375, %v2499
      %v2599 = vadd.f32 %v2376, %v2502
      %v2600 = vadd.f32 %v2377, %v2504
      %v2601 = vadd.f32 %v2378, %v2507
      %v2602 = vadd.f32 %v2379, %v2509
      %v2603 = vadd.f32 %v2380, %v2512
      %v2604 = vadd.f32 %v2381, %v2514
      %v2605 = vadd.f32 %v2382, %v2517
      %v2606 = vadd.f32 %v2383, %v2519
      %v2607 = vadd.f32 %v2384, %v2522
      %v2608 = vadd.f32 %v2385, %v2524
      %v2609 = vadd.f32 %v2386, %v2527
      %v2610 = vadd.f32 %v2387, %v2529
      %v2611 = vadd.f32 %v2388, %v2532
      %v2612 = vadd.f32 %v2389, %v2534
      %v2613 = vadd.f32 %v2390, %v2537
      %v2614 = vadd.f32 %v2391, %v2539
      %v2615 = vadd.f32 %v2392, %v2542
      %v2616 = vadd.f32 %v2393, %v2544
      %v2617 = vadd.f32 %v2394, %v2547
      %v2618 = vadd.f32 %v2395, %v2549
      %v2619 = vadd.f32 %v2396, %v2552
      %v2620 = vadd.f32 %v2397, %v2554
      %v2621 = vadd.f32 %v2398, %v2557
      %v2622 = vadd.f32 %v2399, %v2559
      %v2623 = vadd.f32 %v2400, %v2562
      %v2624 = vadd.f32 %v2401, %v2564
      %v2625 = vadd.f32 %v2402, %v2567
      %v2626 = vadd.f32 %v2403, %v2569
      %v2627 = vadd.f32 %v2404, %v2572
      %v2628 = vadd.f32 %v2405, %v2574
      %v2629 = vadd.f32 %v2406, %v2577
      %v2630 = vadd.f32 %v2407, %v2579
      %v2631 = vadd.f32 %v2408, %v2582
      %v2632 = vadd.f32 %v2409, %v2584
      %v2633 = vadd.f32 %v2410, %v2587
      %v2634 = vadd.f32 %v2411, %v2589
      %v2635 = vadd.f32 %v2412, %v2592
      %s2636 = scalar_lea.vmem %s2, 448
      %v2637 = vld [vmem:[%s2636] sm:$0xf]
      %v2638 = vld [vmem:[%s2636 + $0x4] sm:$0xf]
      %v2639 = vld [vmem:[%s2636 + $0x8] sm:$0xf]
      %v2640 = vld [vmem:[%s2636 + $0xc] sm:$0xf]
      %v2641 = vld [vmem:[%s2636 + $0x10] sm:$0xf]
      %v2642 = vld [vmem:[%s2636 + $0x14] sm:$0xf]
      %v2643 = vld [vmem:[%s2636 + $0x18] sm:$0xf]
      %v2644 = vld [vmem:[%s2636 + $0x1c] sm:$0xf]
      %v2645 = vld [vmem:[%s2636 + $0x20] sm:$0xf]
      %v2646 = vld [vmem:[%s2636 + $0x24] sm:$0xf]
      %v2647 = vld [vmem:[%s2636 + $0x28] sm:$0xf]
      %v2648 = vld [vmem:[%s2636 + $0x2c] sm:$0xf]
      %v2649 = vld [vmem:[%s2636 + $0x30] sm:$0xf]
      %v2650 = vld [vmem:[%s2636 + $0x34] sm:$0xf]
      %v2651 = vld [vmem:[%s2636 + $0x38] sm:$0xf]
      %v2652 = vld [vmem:[%s2636 + $0x3c] sm:$0xf]
      %vm2653 = vsmask.f32 5376
      %v2654 = vrot.slane %v804, 2
      %v2655 = vrot.slane %v800, 3
      %v2656 = vor.u32 %v2654, %v2655
      %v2657 = vrot.slane %v812, 2
      %v2658 = vrot.slane %v808, 3
      %v2659 = vor.u32 %v2657, %v2658
      %v2660 = vsel %vm2653, %v2656, %v2659
      %v2661 = vrot.slane %v820, 2
      %v2662 = vrot.slane %v816, 3
      %v2663 = vor.u32 %v2661, %v2662
      %v2664 = vsel %vm2653, %v2659, %v2663
      %v2665 = vrot.slane %v828, 2
      %v2666 = vrot.slane %v824, 3
      %v2667 = vor.u32 %v2665, %v2666
      %v2668 = vsel %vm2653, %v2663, %v2667
      %v2669 = vrot.slane %v836, 2
      %v2670 = vrot.slane %v832, 3
      %v2671 = vor.u32 %v2669, %v2670
      %v2672 = vsel %vm2653, %v2667, %v2671
      %v2673 = vrot.slane %v844, 2
      %v2674 = vrot.slane %v840, 3
      %v2675 = vor.u32 %v2673, %v2674
      %v2676 = vsel %vm2653, %v2671, %v2675
      %v2677 = vrot.slane %v852, 2
      %v2678 = vrot.slane %v848, 3
      %v2679 = vor.u32 %v2677, %v2678
      %v2680 = vsel %vm2653, %v2675, %v2679
      %v2681 = vrot.slane %v860, 2
      %v2682 = vrot.slane %v856, 3
      %v2683 = vor.u32 %v2681, %v2682
      %v2684 = vsel %vm2653, %v2679, %v2683
      %v2685 = vrot.slane %v868, 2
      %v2686 = vrot.slane %v864, 3
      %v2687 = vor.u32 %v2685, %v2686
      %v2688 = vsel %vm2653, %v2683, %v2687
      %v2689 = vrot.slane %v876, 2
      %v2690 = vrot.slane %v872, 3
      %v2691 = vor.u32 %v2689, %v2690
      %v2692 = vsel %vm2653, %v2687, %v2691
      %v2693 = vrot.slane %v884, 2
      %v2694 = vrot.slane %v880, 3
      %v2695 = vor.u32 %v2693, %v2694
      %v2696 = vsel %vm2653, %v2691, %v2695
      %v2697 = vrot.slane %v892, 2
      %v2698 = vrot.slane %v888, 3
      %v2699 = vor.u32 %v2697, %v2698
      %v2700 = vsel %vm2653, %v2695, %v2699
      %v2701 = vrot.slane %v900, 2
      %v2702 = vrot.slane %v896, 3
      %v2703 = vor.u32 %v2701, %v2702
      %v2704 = vsel %vm2653, %v2699, %v2703
      %v2705 = vrot.slane %v908, 2
      %v2706 = vrot.slane %v904, 3
      %v2707 = vor.u32 %v2705, %v2706
      %v2708 = vsel %vm2653, %v2703, %v2707
      %v2709 = vrot.slane %v916, 2
      %v2710 = vrot.slane %v912, 3
      %v2711 = vor.u32 %v2709, %v2710
      %v2712 = vsel %vm2653, %v2707, %v2711
      %v2713 = vrot.slane %v924, 2
      %v2714 = vrot.slane %v920, 3
      %v2715 = vor.u32 %v2713, %v2714
      %v2716 = vsel %vm2653, %v2711, %v2715
      %v2717 = vrot.slane %v932, 2
      %v2718 = vrot.slane %v928, 3
      %v2719 = vor.u32 %v2717, %v2718
      %v2720 = vsel %vm2653, %v2715, %v2719
      %v2721 = vrot.slane %v940, 2
      %v2722 = vrot.slane %v936, 3
      %v2723 = vor.u32 %v2721, %v2722
      %v2724 = vsel %vm2653, %v2719, %v2723
      %v2725 = vrot.slane %v948, 2
      %v2726 = vrot.slane %v944, 3
      %v2727 = vor.u32 %v2725, %v2726
      %v2728 = vsel %vm2653, %v2723, %v2727
      %v2729 = vrot.slane %v1900, 2
      %v2730 = vrot.slane %v1903, 3
      %v2731 = vor.u32 %v2729, %v2730
      %v2732 = vsel %vm2653, %v2727, %v2731
      %v2733 = vrot.slane %v785, 2
      %v2734 = vrot.slane %v787, 3
      %v2735 = vor.u32 %v2733, %v2734
      %v2736 = vsel %vm2653, %v2731, %v2735
      %v2774 = vunpack.c.l.b16 %v2637
      %v2775 = vunpack.c.l.b16 %v2638
      %v2776 = vunpack.c.l.b16 %v2639
      %v2777 = vunpack.c.l.b16 %v2640
      %v2778 = vunpack.c.l.b16 %v2641
      %v2779 = vunpack.c.l.b16 %v2642
      %v2780 = vunpack.c.l.b16 %v2643
      %v2781 = vunpack.c.l.b16 %v2644
      %v2782 = vunpack.c.l.b16 %v2645
      %v2783 = vunpack.c.l.b16 %v2646
      %v2784 = vunpack.c.l.b16 %v2647
      %v2785 = vunpack.c.l.b16 %v2648
      %v2786 = vunpack.c.l.b16 %v2649
      %v2787 = vunpack.c.l.b16 %v2650
      %v2788 = vunpack.c.l.b16 %v2651
      %v2789 = vunpack.c.l.b16 %v2652
      %v2790 = vpack.c.b16 %v2775, %v2774
      %v2791 = vpack.c.b16 %v2777, %v2776
      %v2792 = vpack.c.b16 %v2779, %v2778
      %v2793 = vpack.c.b16 %v2781, %v2780
      %v2794 = vpack.c.b16 %v2783, %v2782
      %v2795 = vpack.c.b16 %v2785, %v2784
      %v2796 = vpack.c.b16 %v2787, %v2786
      %v2797 = vpack.c.b16 %v2789, %v2788
      %2806 = vmatpush.bf16.msra.mxu0 %v2797
      %2807 = vmatpush.bf16.msra.mxu0 %v2796
      %2808 = vmatpush.bf16.msra.mxu0 %v2795
      %2809 = vmatpush.bf16.msra.mxu0 %v2794
      %2810 = vmatpush.bf16.msra.mxu0 %v2793
      %2811 = vmatpush.bf16.msra.mxu0 %v2792
      %2812 = vmatpush.bf16.msra.mxu0 %v2791
      %2813 = vmatpush.bf16.msra.mxu0 %v2790
      %2814 = vmatmul.bf16.gmra.mxu0 %v2660
      %v2815 = vpop.f32.mrf.mxu0
      %v2816 = vadd.f32 0.0, %v2815
      %v2817 = vpop.f32.mrf.mxu0
      %v2818 = vadd.f32 0.0, %v2817
      %2819 = vmatmul.bf16.gmra.mxu0 %v2664
      %v2820 = vpop.f32.mrf.mxu0
      %v2821 = vadd.f32 0.0, %v2820
      %v2822 = vpop.f32.mrf.mxu0
      %v2823 = vadd.f32 0.0, %v2822
      %2824 = vmatmul.bf16.gmra.mxu0 %v2668
      %v2825 = vpop.f32.mrf.mxu0
      %v2826 = vadd.f32 0.0, %v2825
      %v2827 = vpop.f32.mrf.mxu0
      %v2828 = vadd.f32 0.0, %v2827
      %2829 = vmatmul.bf16.gmra.mxu0 %v2672
      %v2830 = vpop.f32.mrf.mxu0
      %v2831 = vadd.f32 0.0, %v2830
      %v2832 = vpop.f32.mrf.mxu0
      %v2833 = vadd.f32 0.0, %v2832
      %2834 = vmatmul.bf16.gmra.mxu0 %v2676
      %v2835 = vpop.f32.mrf.mxu0
      %v2836 = vadd.f32 0.0, %v2835
      %v2837 = vpop.f32.mrf.mxu0
      %v2838 = vadd.f32 0.0, %v2837
      %2839 = vmatmul.bf16.gmra.mxu0 %v2680
      %v2840 = vpop.f32.mrf.mxu0
      %v2841 = vadd.f32 0.0, %v2840
      %v2842 = vpop.f32.mrf.mxu0
      %v2843 = vadd.f32 0.0, %v2842
      %2844 = vmatmul.bf16.gmra.mxu0 %v2684
      %v2845 = vpop.f32.mrf.mxu0
      %v2846 = vadd.f32 0.0, %v2845
      %v2847 = vpop.f32.mrf.mxu0
      %v2848 = vadd.f32 0.0, %v2847
      %2849 = vmatmul.bf16.gmra.mxu0 %v2688
      %v2850 = vpop.f32.mrf.mxu0
      %v2851 = vadd.f32 0.0, %v2850
      %v2852 = vpop.f32.mrf.mxu0
      %v2853 = vadd.f32 0.0, %v2852
      %2854 = vmatmul.bf16.gmra.mxu0 %v2692
      %v2855 = vpop.f32.mrf.mxu0
      %v2856 = vadd.f32 0.0, %v2855
      %v2857 = vpop.f32.mrf.mxu0
      %v2858 = vadd.f32 0.0, %v2857
      %2859 = vmatmul.bf16.gmra.mxu0 %v2696
      %v2860 = vpop.f32.mrf.mxu0
      %v2861 = vadd.f32 0.0, %v2860
      %v2862 = vpop.f32.mrf.mxu0
      %v2863 = vadd.f32 0.0, %v2862
      %2864 = vmatmul.bf16.gmra.mxu0 %v2700
      %v2865 = vpop.f32.mrf.mxu0
      %v2866 = vadd.f32 0.0, %v2865
      %v2867 = vpop.f32.mrf.mxu0
      %v2868 = vadd.f32 0.0, %v2867
      %2869 = vmatmul.bf16.gmra.mxu0 %v2704
      %v2870 = vpop.f32.mrf.mxu0
      %v2871 = vadd.f32 0.0, %v2870
      %v2872 = vpop.f32.mrf.mxu0
      %v2873 = vadd.f32 0.0, %v2872
      %2874 = vmatmul.bf16.gmra.mxu0 %v2708
      %v2875 = vpop.f32.mrf.mxu0
      %v2876 = vadd.f32 0.0, %v2875
      %v2877 = vpop.f32.mrf.mxu0
      %v2878 = vadd.f32 0.0, %v2877
      %2879 = vmatmul.bf16.gmra.mxu0 %v2712
      %v2880 = vpop.f32.mrf.mxu0
      %v2881 = vadd.f32 0.0, %v2880
      %v2882 = vpop.f32.mrf.mxu0
      %v2883 = vadd.f32 0.0, %v2882
      %2884 = vmatmul.bf16.gmra.mxu0 %v2716
      %v2885 = vpop.f32.mrf.mxu0
      %v2886 = vadd.f32 0.0, %v2885
      %v2887 = vpop.f32.mrf.mxu0
      %v2888 = vadd.f32 0.0, %v2887
      %2889 = vmatmul.bf16.gmra.mxu0 %v2720
      %v2890 = vpop.f32.mrf.mxu0
      %v2891 = vadd.f32 0.0, %v2890
      %v2892 = vpop.f32.mrf.mxu0
      %v2893 = vadd.f32 0.0, %v2892
      %2894 = vmatmul.bf16.gmra.mxu0 %v2724
      %v2895 = vpop.f32.mrf.mxu0
      %v2896 = vadd.f32 0.0, %v2895
      %v2897 = vpop.f32.mrf.mxu0
      %v2898 = vadd.f32 0.0, %v2897
      %2899 = vmatmul.bf16.gmra.mxu0 %v2728
      %v2900 = vpop.f32.mrf.mxu0
      %v2901 = vadd.f32 0.0, %v2900
      %v2902 = vpop.f32.mrf.mxu0
      %v2903 = vadd.f32 0.0, %v2902
      %2904 = vmatmul.bf16.gmra.mxu0 %v2732
      %v2905 = vpop.f32.mrf.mxu0
      %v2906 = vadd.f32 0.0, %v2905
      %v2907 = vpop.f32.mrf.mxu0
      %v2908 = vadd.f32 0.0, %v2907
      %2909 = vmatmul.bf16.gmra.mxu0 %v2736
      %v2910 = vpop.f32.mrf.mxu0
      %v2911 = vadd.f32 0.0, %v2910
      %v2912 = vpop.f32.mrf.mxu0
      %v2913 = vadd.f32 0.0, %v2912
      %2914 = vmatmul.bf16.gmra.mxu0 %v2735
      %v2915 = vpop.f32.mrf.mxu0
      %v2916 = vadd.f32 0.0, %v2915
      %v2917 = vpop.f32.mrf.mxu0
      %2918 = vdwg.mxu0
      %v2919 = vadd.f32 %v2595, %v2816
      %v2920 = vadd.f32 %v2596, %v2818
      %v2921 = vadd.f32 %v2597, %v2821
      %v2922 = vadd.f32 %v2598, %v2823
      %v2923 = vadd.f32 %v2599, %v2826
      %v2924 = vadd.f32 %v2600, %v2828
      %v2925 = vadd.f32 %v2601, %v2831
      %v2926 = vadd.f32 %v2602, %v2833
      %v2927 = vadd.f32 %v2603, %v2836
      %v2928 = vadd.f32 %v2604, %v2838
      %v2929 = vadd.f32 %v2605, %v2841
      %v2930 = vadd.f32 %v2606, %v2843
      %v2931 = vadd.f32 %v2607, %v2846
      %v2932 = vadd.f32 %v2608, %v2848
      %v2933 = vadd.f32 %v2609, %v2851
      %v2934 = vadd.f32 %v2610, %v2853
      %v2935 = vadd.f32 %v2611, %v2856
      %v2936 = vadd.f32 %v2612, %v2858
      %v2937 = vadd.f32 %v2613, %v2861
      %v2938 = vadd.f32 %v2614, %v2863
      %v2939 = vadd.f32 %v2615, %v2866
      %v2940 = vadd.f32 %v2616, %v2868
      %v2941 = vadd.f32 %v2617, %v2871
      %v2942 = vadd.f32 %v2618, %v2873
      %v2943 = vadd.f32 %v2619, %v2876
      %v2944 = vadd.f32 %v2620, %v2878
      %v2945 = vadd.f32 %v2621, %v2881
      %v2946 = vadd.f32 %v2622, %v2883
      %v2947 = vadd.f32 %v2623, %v2886
      %v2948 = vadd.f32 %v2624, %v2888
      %v2949 = vadd.f32 %v2625, %v2891
      %v2950 = vadd.f32 %v2626, %v2893
      %v2951 = vadd.f32 %v2627, %v2896
      %v2952 = vadd.f32 %v2628, %v2898
      %v2953 = vadd.f32 %v2629, %v2901
      %v2954 = vadd.f32 %v2630, %v2903
      %v2955 = vadd.f32 %v2631, %v2906
      %v2956 = vadd.f32 %v2632, %v2908
      %v2957 = vadd.f32 %v2633, %v2911
      %v2958 = vadd.f32 %v2634, %v2913
      %v2959 = vadd.f32 %v2635, %v2916
      %s2960 = scalar_lea.vmem %s2, 512
      %v2961 = vld [vmem:[%s2960] sm:$0xf]
      %v2962 = vld [vmem:[%s2960 + $0x4] sm:$0xf]
      %v2963 = vld [vmem:[%s2960 + $0x8] sm:$0xf]
      %v2964 = vld [vmem:[%s2960 + $0xc] sm:$0xf]
      %v2965 = vld [vmem:[%s2960 + $0x10] sm:$0xf]
      %v2966 = vld [vmem:[%s2960 + $0x14] sm:$0xf]
      %v2967 = vld [vmem:[%s2960 + $0x18] sm:$0xf]
      %v2968 = vld [vmem:[%s2960 + $0x1c] sm:$0xf]
      %v2969 = vld [vmem:[%s2960 + $0x20] sm:$0xf]
      %v2970 = vld [vmem:[%s2960 + $0x24] sm:$0xf]
      %v2971 = vld [vmem:[%s2960 + $0x28] sm:$0xf]
      %v2972 = vld [vmem:[%s2960 + $0x2c] sm:$0xf]
      %v2973 = vld [vmem:[%s2960 + $0x30] sm:$0xf]
      %v2974 = vld [vmem:[%s2960 + $0x34] sm:$0xf]
      %v2975 = vld [vmem:[%s2960 + $0x38] sm:$0xf]
      %v2976 = vld [vmem:[%s2960 + $0x3c] sm:$0xf]
      %vm2977 = vcmask 1044480
      %v2978 = vrot.slane %v550, 3
      %v2979 = vrot.slane %v559, 3
      %v2980 = vsel %vm2977, %v2978, %v2979
      %v2981 = vrot.slane %v568, 3
      %v2982 = vsel %vm2977, %v2979, %v2981
      %v2983 = vrot.slane %v577, 3
      %v2984 = vsel %vm2977, %v2981, %v2983
      %v2985 = vrot.slane %v586, 3
      %v2986 = vsel %vm2977, %v2983, %v2985
      %v2987 = vrot.slane %v595, 3
      %v2988 = vsel %vm2977, %v2985, %v2987
      %v2989 = vrot.slane %v604, 3
      %v2990 = vsel %vm2977, %v2987, %v2989
      %v2991 = vrot.slane %v613, 3
      %v2992 = vsel %vm2977, %v2989, %v2991
      %v2993 = vrot.slane %v622, 3
      %v2994 = vsel %vm2977, %v2991, %v2993
      %v2995 = vrot.slane %v631, 3
      %v2996 = vsel %vm2977, %v2993, %v2995
      %v2997 = vrot.slane %v640, 3
      %v2998 = vsel %vm2977, %v2995, %v2997
      %v2999 = vrot.slane %v649, 3
      %v3000 = vsel %vm2977, %v2997, %v2999
      %v3001 = vrot.slane %v658, 3
      %v3002 = vsel %vm2977, %v2999, %v3001
      %v3003 = vrot.slane %v667, 3
      %v3004 = vsel %vm2977, %v3001, %v3003
      %v3005 = vrot.slane %v676, 3
      %v3006 = vsel %vm2977, %v3003, %v3005
      %v3007 = vrot.slane %v685, 3
      %v3008 = vsel %vm2977, %v3005, %v3007
      %v3009 = vrot.slane %v694, 3
      %v3010 = vsel %vm2977, %v3007, %v3009
      %v3011 = vrot.slane %v703, 3
      %v3012 = vsel %vm2977, %v3009, %v3011
      %v3013 = vrot.slane %v712, 3
      %v3014 = vsel %vm2977, %v3011, %v3013
      %v3015 = vrot.slane %v749, 3
      %v3016 = vsel %vm2977, %v3013, %v3015
      %v3017 = vrot.slane 0, 3
      %v3018 = vsel %vm2977, %v3015, %v3017
      %v3056 = vunpack.c.l.b16 %v2961
      %v3057 = vunpack.c.l.b16 %v2962
      %v3058 = vunpack.c.l.b16 %v2963
      %v3059 = vunpack.c.l.b16 %v2964
      %v3060 = vunpack.c.l.b16 %v2965
      %v3061 = vunpack.c.l.b16 %v2966
      %v3062 = vunpack.c.l.b16 %v2967
      %v3063 = vunpack.c.l.b16 %v2968
      %v3064 = vunpack.c.l.b16 %v2969
      %v3065 = vunpack.c.l.b16 %v2970
      %v3066 = vunpack.c.l.b16 %v2971
      %v3067 = vunpack.c.l.b16 %v2972
      %v3068 = vunpack.c.l.b16 %v2973
      %v3069 = vunpack.c.l.b16 %v2974
      %v3070 = vunpack.c.l.b16 %v2975
      %v3071 = vunpack.c.l.b16 %v2976
      %v3072 = vpack.c.b16 %v3057, %v3056
      %v3073 = vpack.c.b16 %v3059, %v3058
      %v3074 = vpack.c.b16 %v3061, %v3060
      %v3075 = vpack.c.b16 %v3063, %v3062
      %v3076 = vpack.c.b16 %v3065, %v3064
      %v3077 = vpack.c.b16 %v3067, %v3066
      %v3078 = vpack.c.b16 %v3069, %v3068
      %v3079 = vpack.c.b16 %v3071, %v3070
      %3088 = vmatpush.bf16.msra.mxu0 %v3079
      %3089 = vmatpush.bf16.msra.mxu0 %v3078
      %3090 = vmatpush.bf16.msra.mxu0 %v3077
      %3091 = vmatpush.bf16.msra.mxu0 %v3076
      %3092 = vmatpush.bf16.msra.mxu0 %v3075
      %3093 = vmatpush.bf16.msra.mxu0 %v3074
      %3094 = vmatpush.bf16.msra.mxu0 %v3073
      %3095 = vmatpush.bf16.msra.mxu0 %v3072
      %3096 = vmatmul.bf16.gmra.mxu0 %v2980
      %v3097 = vpop.f32.mrf.mxu0
      %v3098 = vadd.f32 0.0, %v3097
      %v3099 = vpop.f32.mrf.mxu0
      %v3100 = vadd.f32 0.0, %v3099
      %3101 = vmatmul.bf16.gmra.mxu0 %v2982
      %v3102 = vpop.f32.mrf.mxu0
      %v3103 = vadd.f32 0.0, %v3102
      %v3104 = vpop.f32.mrf.mxu0
      %v3105 = vadd.f32 0.0, %v3104
      %3106 = vmatmul.bf16.gmra.mxu0 %v2984
      %v3107 = vpop.f32.mrf.mxu0
      %v3108 = vadd.f32 0.0, %v3107
      %v3109 = vpop.f32.mrf.mxu0
      %v3110 = vadd.f32 0.0, %v3109
      %3111 = vmatmul.bf16.gmra.mxu0 %v2986
      %v3112 = vpop.f32.mrf.mxu0
      %v3113 = vadd.f32 0.0, %v3112
      %v3114 = vpop.f32.mrf.mxu0
      %v3115 = vadd.f32 0.0, %v3114
      %3116 = vmatmul.bf16.gmra.mxu0 %v2988
      %v3117 = vpop.f32.mrf.mxu0
      %v3118 = vadd.f32 0.0, %v3117
      %v3119 = vpop.f32.mrf.mxu0
      %v3120 = vadd.f32 0.0, %v3119
      %3121 = vmatmul.bf16.gmra.mxu0 %v2990
      %v3122 = vpop.f32.mrf.mxu0
      %v3123 = vadd.f32 0.0, %v3122
      %v3124 = vpop.f32.mrf.mxu0
      %v3125 = vadd.f32 0.0, %v3124
      %3126 = vmatmul.bf16.gmra.mxu0 %v2992
      %v3127 = vpop.f32.mrf.mxu0
      %v3128 = vadd.f32 0.0, %v3127
      %v3129 = vpop.f32.mrf.mxu0
      %v3130 = vadd.f32 0.0, %v3129
      %3131 = vmatmul.bf16.gmra.mxu0 %v2994
      %v3132 = vpop.f32.mrf.mxu0
      %v3133 = vadd.f32 0.0, %v3132
      %v3134 = vpop.f32.mrf.mxu0
      %v3135 = vadd.f32 0.0, %v3134
      %3136 = vmatmul.bf16.gmra.mxu0 %v2996
      %v3137 = vpop.f32.mrf.mxu0
      %v3138 = vadd.f32 0.0, %v3137
      %v3139 = vpop.f32.mrf.mxu0
      %v3140 = vadd.f32 0.0, %v3139
      %3141 = vmatmul.bf16.gmra.mxu0 %v2998
      %v3142 = vpop.f32.mrf.mxu0
      %v3143 = vadd.f32 0.0, %v3142
      %v3144 = vpop.f32.mrf.mxu0
      %v3145 = vadd.f32 0.0, %v3144
      %3146 = vmatmul.bf16.gmra.mxu0 %v3000
      %v3147 = vpop.f32.mrf.mxu0
      %v3148 = vadd.f32 0.0, %v3147
      %v3149 = vpop.f32.mrf.mxu0
      %v3150 = vadd.f32 0.0, %v3149
      %3151 = vmatmul.bf16.gmra.mxu0 %v3002
      %v3152 = vpop.f32.mrf.mxu0
      %v3153 = vadd.f32 0.0, %v3152
      %v3154 = vpop.f32.mrf.mxu0
      %v3155 = vadd.f32 0.0, %v3154
      %3156 = vmatmul.bf16.gmra.mxu0 %v3004
      %v3157 = vpop.f32.mrf.mxu0
      %v3158 = vadd.f32 0.0, %v3157
      %v3159 = vpop.f32.mrf.mxu0
      %v3160 = vadd.f32 0.0, %v3159
      %3161 = vmatmul.bf16.gmra.mxu0 %v3006
      %v3162 = vpop.f32.mrf.mxu0
      %v3163 = vadd.f32 0.0, %v3162
      %v3164 = vpop.f32.mrf.mxu0
      %v3165 = vadd.f32 0.0, %v3164
      %3166 = vmatmul.bf16.gmra.mxu0 %v3008
      %v3167 = vpop.f32.mrf.mxu0
      %v3168 = vadd.f32 0.0, %v3167
      %v3169 = vpop.f32.mrf.mxu0
      %v3170 = vadd.f32 0.0, %v3169
      %3171 = vmatmul.bf16.gmra.mxu0 %v3010
      %v3172 = vpop.f32.mrf.mxu0
      %v3173 = vadd.f32 0.0, %v3172
      %v3174 = vpop.f32.mrf.mxu0
      %v3175 = vadd.f32 0.0, %v3174
      %3176 = vmatmul.bf16.gmra.mxu0 %v3012
      %v3177 = vpop.f32.mrf.mxu0
      %v3178 = vadd.f32 0.0, %v3177
      %v3179 = vpop.f32.mrf.mxu0
      %v3180 = vadd.f32 0.0, %v3179
      %3181 = vmatmul.bf16.gmra.mxu0 %v3014
      %v3182 = vpop.f32.mrf.mxu0
      %v3183 = vadd.f32 0.0, %v3182
      %v3184 = vpop.f32.mrf.mxu0
      %v3185 = vadd.f32 0.0, %v3184
      %3186 = vmatmul.bf16.gmra.mxu0 %v3016
      %v3187 = vpop.f32.mrf.mxu0
      %v3188 = vadd.f32 0.0, %v3187
      %v3189 = vpop.f32.mrf.mxu0
      %v3190 = vadd.f32 0.0, %v3189
      %3191 = vmatmul.bf16.gmra.mxu0 %v3018
      %v3192 = vpop.f32.mrf.mxu0
      %v3193 = vadd.f32 0.0, %v3192
      %v3194 = vpop.f32.mrf.mxu0
      %v3195 = vadd.f32 0.0, %v3194
      %3196 = vmatmul.bf16.gmra.mxu0 %v3017
      %v3197 = vpop.f32.mrf.mxu0
      %v3198 = vadd.f32 0.0, %v3197
      %v3199 = vpop.f32.mrf.mxu0
      %3200 = vdwg.mxu0
      %v3201 = vadd.f32 %v2919, %v3098
      %v3202 = vadd.f32 %v2920, %v3100
      %v3203 = vadd.f32 %v2921, %v3103
      %v3204 = vadd.f32 %v2922, %v3105
      %v3205 = vadd.f32 %v2923, %v3108
      %v3206 = vadd.f32 %v2924, %v3110
      %v3207 = vadd.f32 %v2925, %v3113
      %v3208 = vadd.f32 %v2926, %v3115
      %v3209 = vadd.f32 %v2927, %v3118
      %v3210 = vadd.f32 %v2928, %v3120
      %v3211 = vadd.f32 %v2929, %v3123
      %v3212 = vadd.f32 %v2930, %v3125
      %v3213 = vadd.f32 %v2931, %v3128
      %v3214 = vadd.f32 %v2932, %v3130
      %v3215 = vadd.f32 %v2933, %v3133
      %v3216 = vadd.f32 %v2934, %v3135
      %v3217 = vadd.f32 %v2935, %v3138
      %v3218 = vadd.f32 %v2936, %v3140
      %v3219 = vadd.f32 %v2937, %v3143
      %v3220 = vadd.f32 %v2938, %v3145
      %v3221 = vadd.f32 %v2939, %v3148
      %v3222 = vadd.f32 %v2940, %v3150
      %v3223 = vadd.f32 %v2941, %v3153
      %v3224 = vadd.f32 %v2942, %v3155
      %v3225 = vadd.f32 %v2943, %v3158
      %v3226 = vadd.f32 %v2944, %v3160
      %v3227 = vadd.f32 %v2945, %v3163
      %v3228 = vadd.f32 %v2946, %v3165
      %v3229 = vadd.f32 %v2947, %v3168
      %v3230 = vadd.f32 %v2948, %v3170
      %v3231 = vadd.f32 %v2949, %v3173
      %v3232 = vadd.f32 %v2950, %v3175
      %v3233 = vadd.f32 %v2951, %v3178
      %v3234 = vadd.f32 %v2952, %v3180
      %v3235 = vadd.f32 %v2953, %v3183
      %v3236 = vadd.f32 %v2954, %v3185
      %v3237 = vadd.f32 %v2955, %v3188
      %v3238 = vadd.f32 %v2956, %v3190
      %v3239 = vadd.f32 %v2957, %v3193
      %v3240 = vadd.f32 %v2958, %v3195
      %v3241 = vadd.f32 %v2959, %v3198
      %v3242 = vld [vmem:[%s3] sm:$0x1]
      %v3244 = vperm.slane %v3242, 0
      %v3246 = vmul.f32 %v3201, %v3244
      %v3247 = vmul.f32 %v3202, %v3244
      %v3248 = vmul.f32 %v3203, %v3244
      %v3249 = vmul.f32 %v3204, %v3244
      %v3250 = vmul.f32 %v3205, %v3244
      %v3251 = vmul.f32 %v3206, %v3244
      %v3252 = vmul.f32 %v3207, %v3244
      %v3253 = vmul.f32 %v3208, %v3244
      %v3254 = vmul.f32 %v3209, %v3244
      %v3255 = vmul.f32 %v3210, %v3244
      %v3256 = vmul.f32 %v3211, %v3244
      %v3257 = vmul.f32 %v3212, %v3244
      %v3258 = vmul.f32 %v3213, %v3244
      %v3259 = vmul.f32 %v3214, %v3244
      %v3260 = vmul.f32 %v3215, %v3244
      %v3261 = vmul.f32 %v3216, %v3244
      %v3262 = vmul.f32 %v3217, %v3244
      %v3263 = vmul.f32 %v3218, %v3244
      %v3264 = vmul.f32 %v3219, %v3244
      %v3265 = vmul.f32 %v3220, %v3244
      %v3266 = vmul.f32 %v3221, %v3244
      %v3267 = vmul.f32 %v3222, %v3244
      %v3268 = vmul.f32 %v3223, %v3244
      %v3269 = vmul.f32 %v3224, %v3244
      %v3270 = vmul.f32 %v3225, %v3244
      %v3271 = vmul.f32 %v3226, %v3244
      %v3272 = vmul.f32 %v3227, %v3244
      %v3273 = vmul.f32 %v3228, %v3244
      %v3274 = vmul.f32 %v3229, %v3244
      %v3275 = vmul.f32 %v3230, %v3244
      %v3276 = vmul.f32 %v3231, %v3244
      %v3277 = vmul.f32 %v3232, %v3244
      %v3278 = vmul.f32 %v3233, %v3244
      %v3279 = vmul.f32 %v3234, %v3244
      %v3280 = vmul.f32 %v3235, %v3244
      %v3281 = vmul.f32 %v3236, %v3244
      %v3282 = vmul.f32 %v3237, %v3244
      %v3283 = vmul.f32 %v3238, %v3244
      %v3284 = vmul.f32 %v3239, %v3244
      %v3285 = vmul.f32 %v3240, %v3244
      %v3286 = vmul.f32 %v3241, %v3244
      %v3287 = vld [vmem:[%s4] sm:$0x1]
      %v3289 = vperm.slane %v3287, 0
      %v3291 = vadd.f32 %v3246, %v3289
      %v3292 = vadd.f32 %v3247, %v3289
      %v3293 = vadd.f32 %v3248, %v3289
      %v3294 = vadd.f32 %v3249, %v3289
      %v3295 = vadd.f32 %v3250, %v3289
      %v3296 = vadd.f32 %v3251, %v3289
      %v3297 = vadd.f32 %v3252, %v3289
      %v3298 = vadd.f32 %v3253, %v3289
      %v3299 = vadd.f32 %v3254, %v3289
      %v3300 = vadd.f32 %v3255, %v3289
      %v3301 = vadd.f32 %v3256, %v3289
      %v3302 = vadd.f32 %v3257, %v3289
      %v3303 = vadd.f32 %v3258, %v3289
      %v3304 = vadd.f32 %v3259, %v3289
      %v3305 = vadd.f32 %v3260, %v3289
      %v3306 = vadd.f32 %v3261, %v3289
      %v3307 = vadd.f32 %v3262, %v3289
      %v3308 = vadd.f32 %v3263, %v3289
      %v3309 = vadd.f32 %v3264, %v3289
      %v3310 = vadd.f32 %v3265, %v3289
      %v3311 = vadd.f32 %v3266, %v3289
      %v3312 = vadd.f32 %v3267, %v3289
      %v3313 = vadd.f32 %v3268, %v3289
      %v3314 = vadd.f32 %v3269, %v3289
      %v3315 = vadd.f32 %v3270, %v3289
      %v3316 = vadd.f32 %v3271, %v3289
      %v3317 = vadd.f32 %v3272, %v3289
      %v3318 = vadd.f32 %v3273, %v3289
      %v3319 = vadd.f32 %v3274, %v3289
      %v3320 = vadd.f32 %v3275, %v3289
      %v3321 = vadd.f32 %v3276, %v3289
      %v3322 = vadd.f32 %v3277, %v3289
      %v3323 = vadd.f32 %v3278, %v3289
      %v3324 = vadd.f32 %v3279, %v3289
      %v3325 = vadd.f32 %v3280, %v3289
      %v3326 = vadd.f32 %v3281, %v3289
      %v3327 = vadd.f32 %v3282, %v3289
      %v3328 = vadd.f32 %v3283, %v3289
      %v3329 = vadd.f32 %v3284, %v3289
      %v3330 = vadd.f32 %v3285, %v3289
      %v3331 = vadd.f32 %v3286, %v3289
      %v3332 = vmax.f32 %v3291, 0.0
      %v3333 = vmax.f32 %v3292, 0.0
      %v3334 = vmax.f32 %v3293, 0.0
      %v3335 = vmax.f32 %v3294, 0.0
      %v3336 = vmax.f32 %v3295, 0.0
      %v3337 = vmax.f32 %v3296, 0.0
      %v3338 = vmax.f32 %v3297, 0.0
      %v3339 = vmax.f32 %v3298, 0.0
      %v3340 = vmax.f32 %v3299, 0.0
      %v3341 = vmax.f32 %v3300, 0.0
      %v3342 = vmax.f32 %v3301, 0.0
      %v3343 = vmax.f32 %v3302, 0.0
      %v3344 = vmax.f32 %v3303, 0.0
      %v3345 = vmax.f32 %v3304, 0.0
      %v3346 = vmax.f32 %v3305, 0.0
      %v3347 = vmax.f32 %v3306, 0.0
      %v3348 = vmax.f32 %v3307, 0.0
      %v3349 = vmax.f32 %v3308, 0.0
      %v3350 = vmax.f32 %v3309, 0.0
      %v3351 = vmax.f32 %v3310, 0.0
      %v3352 = vmax.f32 %v3311, 0.0
      %v3353 = vmax.f32 %v3312, 0.0
      %v3354 = vmax.f32 %v3313, 0.0
      %v3355 = vmax.f32 %v3314, 0.0
      %v3356 = vmax.f32 %v3315, 0.0
      %v3357 = vmax.f32 %v3316, 0.0
      %v3358 = vmax.f32 %v3317, 0.0
      %v3359 = vmax.f32 %v3318, 0.0
      %v3360 = vmax.f32 %v3319, 0.0
      %v3361 = vmax.f32 %v3320, 0.0
      %v3362 = vmax.f32 %v3321, 0.0
      %v3363 = vmax.f32 %v3322, 0.0
      %v3364 = vmax.f32 %v3323, 0.0
      %v3365 = vmax.f32 %v3324, 0.0
      %v3366 = vmax.f32 %v3325, 0.0
      %v3367 = vmax.f32 %v3326, 0.0
      %v3368 = vmax.f32 %v3327, 0.0
      %v3369 = vmax.f32 %v3328, 0.0
      %v3370 = vmax.f32 %v3329, 0.0
      %v3371 = vmax.f32 %v3330, 0.0
      %v3372 = vmax.f32 %v3331, 0.0
      %3374 = vset.pattern.permute.xlu0 0
      %3375 = vperm.xlu0 %3374, %v348
      %v3376 = vpop.permute.xlu0 %3375
      %3379 = vset.pattern.permute.xlu0 0
      %3380 = vperm.xlu0 %3379, %v349
      %v3381 = vpop.permute.xlu0 %3380
      %3384 = vset.pattern.permute.xlu0 0
      %3385 = vperm.xlu0 %3384, %v350
      %v3386 = vpop.permute.xlu0 %3385
      %3389 = vset.pattern.permute.xlu0 0
      %3390 = vperm.xlu0 %3389, %v351
      %v3391 = vpop.permute.xlu0 %3390
      %3394 = vset.pattern.permute.xlu0 0
      %3395 = vperm.xlu0 %3394, %v352
      %v3396 = vpop.permute.xlu0 %3395
      %3399 = vset.pattern.permute.xlu0 0
      %3400 = vperm.xlu0 %3399, %v353
      %v3401 = vpop.permute.xlu0 %3400
      %3404 = vset.pattern.permute.xlu0 0
      %3405 = vperm.xlu0 %3404, %v354
      %v3406 = vpop.permute.xlu0 %3405
      %3409 = vset.pattern.permute.xlu0 0
      %3410 = vperm.xlu0 %3409, %v355
      %v3411 = vpop.permute.xlu0 %3410
      %3414 = vset.pattern.permute.xlu0 0
      %3415 = vperm.xlu0 %3414, %v356
      %v3416 = vpop.permute.xlu0 %3415
      %3419 = vset.pattern.permute.xlu0 0
      %3420 = vperm.xlu0 %3419, %v357
      %v3421 = vpop.permute.xlu0 %3420
      %3424 = vset.pattern.permute.xlu0 0
      %3425 = vperm.xlu0 %3424, %v358
      %v3426 = vpop.permute.xlu0 %3425
      %3429 = vset.pattern.permute.xlu0 0
      %3430 = vperm.xlu0 %3429, %v359
      %v3431 = vpop.permute.xlu0 %3430
      %3434 = vset.pattern.permute.xlu0 0
      %3435 = vperm.xlu0 %3434, %v360
      %v3436 = vpop.permute.xlu0 %3435
      %3439 = vset.pattern.permute.xlu0 0
      %3440 = vperm.xlu0 %3439, %v361
      %v3441 = vpop.permute.xlu0 %3440
      %3444 = vset.pattern.permute.xlu0 0
      %3445 = vperm.xlu0 %3444, %v362
      %v3446 = vpop.permute.xlu0 %3445
      %3449 = vset.pattern.permute.xlu0 0
      %3450 = vperm.xlu0 %3449, %v363
      %v3451 = vpop.permute.xlu0 %3450
      %3454 = vset.pattern.permute.xlu0 0
      %3455 = vperm.xlu0 %3454, %v364
      %v3456 = vpop.permute.xlu0 %3455
      %3459 = vset.pattern.permute.xlu0 0
      %3460 = vperm.xlu0 %3459, %v365
      %v3461 = vpop.permute.xlu0 %3460
      %3464 = vset.pattern.permute.xlu0 0
      %3465 = vperm.xlu0 %3464, %v366
      %v3466 = vpop.permute.xlu0 %3465
      %3469 = vset.pattern.permute.xlu0 0
      %3470 = vperm.xlu0 %3469, %v367
      %v3471 = vpop.permute.xlu0 %3470
      %3474 = vset.pattern.permute.xlu0 0
      %3475 = vperm.xlu0 %3474, %v368
      %v3476 = vpop.permute.xlu0 %3475
      %3479 = vset.pattern.permute.xlu0 0
      %3480 = vperm.xlu0 %3479, %v369
      %v3481 = vpop.permute.xlu0 %3480
      %3484 = vset.pattern.permute.xlu0 0
      %3485 = vperm.xlu0 %3484, %v370
      %v3486 = vpop.permute.xlu0 %3485
      %3489 = vset.pattern.permute.xlu0 0
      %3490 = vperm.xlu0 %3489, %v371
      %v3491 = vpop.permute.xlu0 %3490
      %3494 = vset.pattern.permute.xlu0 0
      %3495 = vperm.xlu0 %3494, %v372
      %v3496 = vpop.permute.xlu0 %3495
      %3499 = vset.pattern.permute.xlu0 0
      %3500 = vperm.xlu0 %3499, %v373
      %v3501 = vpop.permute.xlu0 %3500
      %3504 = vset.pattern.permute.xlu0 0
      %3505 = vperm.xlu0 %3504, %v374
      %v3506 = vpop.permute.xlu0 %3505
      %3509 = vset.pattern.permute.xlu0 0
      %3510 = vperm.xlu0 %3509, %v375
      %v3511 = vpop.permute.xlu0 %3510
      %3514 = vset.pattern.permute.xlu0 0
      %3515 = vperm.xlu0 %3514, %v376
      %v3516 = vpop.permute.xlu0 %3515
      %3519 = vset.pattern.permute.xlu0 0
      %3520 = vperm.xlu0 %3519, %v377
      %v3521 = vpop.permute.xlu0 %3520
      %3524 = vset.pattern.permute.xlu0 0
      %3525 = vperm.xlu0 %3524, %v378
      %v3526 = vpop.permute.xlu0 %3525
      %3529 = vset.pattern.permute.xlu0 0
      %3530 = vperm.xlu0 %3529, %v379
      %v3531 = vpop.permute.xlu0 %3530
      %3534 = vset.pattern.permute.xlu0 0
      %3535 = vperm.xlu0 %3534, %v380
      %v3536 = vpop.permute.xlu0 %3535
      %3539 = vset.pattern.permute.xlu0 0
      %3540 = vperm.xlu0 %3539, %v381
      %v3541 = vpop.permute.xlu0 %3540
      %3544 = vset.pattern.permute.xlu0 0
      %3545 = vperm.xlu0 %3544, %v382
      %v3546 = vpop.permute.xlu0 %3545
      %3549 = vset.pattern.permute.xlu0 0
      %3550 = vperm.xlu0 %3549, %v383
      %v3551 = vpop.permute.xlu0 %3550
      %3554 = vset.pattern.permute.xlu0 0
      %3555 = vperm.xlu0 %3554, %v384
      %v3556 = vpop.permute.xlu0 %3555
      %3559 = vset.pattern.permute.xlu0 0
      %3560 = vperm.xlu0 %3559, %v385
      %v3561 = vpop.permute.xlu0 %3560
      %3564 = vset.pattern.permute.xlu0 0
      %3565 = vperm.xlu0 %3564, %v386
      %v3566 = vpop.permute.xlu0 %3565
      %3569 = vset.pattern.permute.xlu0 0
      %3570 = vperm.xlu0 %3569, %v387
      %v3571 = vpop.permute.xlu0 %3570
      %3574 = vset.pattern.permute.xlu0 0
      %3575 = vperm.xlu0 %3574, %v388
      %v3576 = vpop.permute.xlu0 %3575
      %v3578 = vmul.f32 %v3332, %v3376
      %v3579 = vmul.f32 %v3333, %v3381
      %v3580 = vmul.f32 %v3334, %v3386
      %v3581 = vmul.f32 %v3335, %v3391
      %v3582 = vmul.f32 %v3336, %v3396
      %v3583 = vmul.f32 %v3337, %v3401
      %v3584 = vmul.f32 %v3338, %v3406
      %v3585 = vmul.f32 %v3339, %v3411
      %v3586 = vmul.f32 %v3340, %v3416
      %v3587 = vmul.f32 %v3341, %v3421
      %v3588 = vmul.f32 %v3342, %v3426
      %v3589 = vmul.f32 %v3343, %v3431
      %v3590 = vmul.f32 %v3344, %v3436
      %v3591 = vmul.f32 %v3345, %v3441
      %v3592 = vmul.f32 %v3346, %v3446
      %v3593 = vmul.f32 %v3347, %v3451
      %v3594 = vmul.f32 %v3348, %v3456
      %v3595 = vmul.f32 %v3349, %v3461
      %v3596 = vmul.f32 %v3350, %v3466
      %v3597 = vmul.f32 %v3351, %v3471
      %v3598 = vmul.f32 %v3352, %v3476
      %v3599 = vmul.f32 %v3353, %v3481
      %v3600 = vmul.f32 %v3354, %v3486
      %v3601 = vmul.f32 %v3355, %v3491
      %v3602 = vmul.f32 %v3356, %v3496
      %v3603 = vmul.f32 %v3357, %v3501
      %v3604 = vmul.f32 %v3358, %v3506
      %v3605 = vmul.f32 %v3359, %v3511
      %v3606 = vmul.f32 %v3360, %v3516
      %v3607 = vmul.f32 %v3361, %v3521
      %v3608 = vmul.f32 %v3362, %v3526
      %v3609 = vmul.f32 %v3363, %v3531
      %v3610 = vmul.f32 %v3364, %v3536
      %v3611 = vmul.f32 %v3365, %v3541
      %v3612 = vmul.f32 %v3366, %v3546
      %v3613 = vmul.f32 %v3367, %v3551
      %v3614 = vmul.f32 %v3368, %v3556
      %v3615 = vmul.f32 %v3369, %v3561
      %v3616 = vmul.f32 %v3370, %v3566
      %v3617 = vmul.f32 %v3371, %v3571
      %v3618 = vmul.f32 %v3372, %v3576
      %v3619 = vpack.c.bf16 %v3578, %v3578
      %v3620 = vpack.c.bf16 %v3579, %v3579
      %v3621 = vpack.c.bf16 %v3580, %v3580
      %v3622 = vpack.c.bf16 %v3581, %v3581
      %v3623 = vpack.c.bf16 %v3582, %v3582
      %v3624 = vpack.c.bf16 %v3583, %v3583
      %v3625 = vpack.c.bf16 %v3584, %v3584
      %v3626 = vpack.c.bf16 %v3585, %v3585
      %v3627 = vpack.c.bf16 %v3586, %v3586
      %v3628 = vpack.c.bf16 %v3587, %v3587
      %v3629 = vpack.c.bf16 %v3588, %v3588
      %v3630 = vpack.c.bf16 %v3589, %v3589
      %v3631 = vpack.c.bf16 %v3590, %v3590
      %v3632 = vpack.c.bf16 %v3591, %v3591
      %v3633 = vpack.c.bf16 %v3592, %v3592
      %v3634 = vpack.c.bf16 %v3593, %v3593
      %v3635 = vpack.c.bf16 %v3594, %v3594
      %v3636 = vpack.c.bf16 %v3595, %v3595
      %v3637 = vpack.c.bf16 %v3596, %v3596
      %v3638 = vpack.c.bf16 %v3597, %v3597
      %v3639 = vpack.c.bf16 %v3598, %v3598
      %v3640 = vpack.c.bf16 %v3599, %v3599
      %v3641 = vpack.c.bf16 %v3600, %v3600
      %v3642 = vpack.c.bf16 %v3601, %v3601
      %v3643 = vpack.c.bf16 %v3602, %v3602
      %v3644 = vpack.c.bf16 %v3603, %v3603
      %v3645 = vpack.c.bf16 %v3604, %v3604
      %v3646 = vpack.c.bf16 %v3605, %v3605
      %v3647 = vpack.c.bf16 %v3606, %v3606
      %v3648 = vpack.c.bf16 %v3607, %v3607
      %v3649 = vpack.c.bf16 %v3608, %v3608
      %v3650 = vpack.c.bf16 %v3609, %v3609
      %v3651 = vpack.c.bf16 %v3610, %v3610
      %v3652 = vpack.c.bf16 %v3611, %v3611
      %v3653 = vpack.c.bf16 %v3612, %v3612
      %v3654 = vpack.c.bf16 %v3613, %v3613
      %v3655 = vpack.c.bf16 %v3614, %v3614
      %v3656 = vpack.c.bf16 %v3615, %v3615
      %v3657 = vpack.c.bf16 %v3616, %v3616
      %v3658 = vpack.c.bf16 %v3617, %v3617
      %v3659 = vpack.c.bf16 %v3618, %v3618
      %v3701 = vunpack.c.l.b16 %v3619
      %v3702 = vunpack.c.l.b16 %v3620
      %v3703 = vunpack.c.l.b16 %v3621
      %v3704 = vunpack.c.l.b16 %v3622
      %v3705 = vunpack.c.l.b16 %v3623
      %v3706 = vunpack.c.l.b16 %v3624
      %v3707 = vunpack.c.l.b16 %v3625
      %v3708 = vunpack.c.l.b16 %v3626
      %v3709 = vunpack.c.l.b16 %v3627
      %v3710 = vunpack.c.l.b16 %v3628
      %v3711 = vunpack.c.l.b16 %v3629
      %v3712 = vunpack.c.l.b16 %v3630
      %v3713 = vunpack.c.l.b16 %v3631
      %v3714 = vunpack.c.l.b16 %v3632
      %v3715 = vunpack.c.l.b16 %v3633
      %v3716 = vunpack.c.l.b16 %v3634
      %v3717 = vunpack.c.l.b16 %v3635
      %v3718 = vunpack.c.l.b16 %v3636
      %v3719 = vunpack.c.l.b16 %v3637
      %v3720 = vunpack.c.l.b16 %v3638
      %v3721 = vunpack.c.l.b16 %v3639
      %v3722 = vunpack.c.l.b16 %v3640
      %v3723 = vunpack.c.l.b16 %v3641
      %v3724 = vunpack.c.l.b16 %v3642
      %v3725 = vunpack.c.l.b16 %v3643
      %v3726 = vunpack.c.l.b16 %v3644
      %v3727 = vunpack.c.l.b16 %v3645
      %v3728 = vunpack.c.l.b16 %v3646
      %v3729 = vunpack.c.l.b16 %v3647
      %v3730 = vunpack.c.l.b16 %v3648
      %v3731 = vunpack.c.l.b16 %v3649
      %v3732 = vunpack.c.l.b16 %v3650
      %v3733 = vunpack.c.l.b16 %v3651
      %v3734 = vunpack.c.l.b16 %v3652
      %v3735 = vunpack.c.l.b16 %v3653
      %v3736 = vunpack.c.l.b16 %v3654
      %v3737 = vunpack.c.l.b16 %v3655
      %v3738 = vunpack.c.l.b16 %v3656
      %v3739 = vunpack.c.l.b16 %v3657
      %v3740 = vunpack.c.l.b16 %v3658
      %v3741 = vunpack.c.l.b16 %v3659
      %v3742 = vpack.c.b16 %v3702, %v3701
      %v3743 = vpack.c.b16 %v3704, %v3703
      %v3744 = vpack.c.b16 %v3706, %v3705
      %v3745 = vpack.c.b16 %v3708, %v3707
      %v3746 = vpack.c.b16 %v3710, %v3709
      %v3747 = vpack.c.b16 %v3712, %v3711
      %v3748 = vpack.c.b16 %v3714, %v3713
      %v3749 = vpack.c.b16 %v3716, %v3715
      %v3750 = vpack.c.b16 %v3718, %v3717
      %v3751 = vpack.c.b16 %v3720, %v3719
      %v3752 = vpack.c.b16 %v3722, %v3721
      %v3753 = vpack.c.b16 %v3724, %v3723
      %v3754 = vpack.c.b16 %v3726, %v3725
      %v3755 = vpack.c.b16 %v3728, %v3727
      %v3756 = vpack.c.b16 %v3730, %v3729
      %v3757 = vpack.c.b16 %v3732, %v3731
      %v3758 = vpack.c.b16 %v3734, %v3733
      %v3759 = vpack.c.b16 %v3736, %v3735
      %v3760 = vpack.c.b16 %v3738, %v3737
      %v3761 = vpack.c.b16 %v3740, %v3739
      %v3762 = vpack.c.b16 %v3741, %v3741
      %v3764 = vshrl.u32 %v3742, 16
      %v3766 = vrot.slane %v3764, 6
      %v3767 = vshll.u32 %v3742, 16
      %v3769 = vrot.slane %v3767, 7
      %v3770 = vor.u32 %v3766, %v3769
      %v3772 = vshrl.u32 %v3743, 16
      %v3774 = vrot.slane %v3772, 6
      %v3775 = vshll.u32 %v3743, 16
      %v3777 = vrot.slane %v3775, 7
      %v3778 = vor.u32 %v3774, %v3777
      %v3779 = vsel %vm533, %v3770, %v3778
      %v3781 = vshrl.u32 %v3744, 16
      %v3783 = vrot.slane %v3781, 6
      %v3784 = vshll.u32 %v3744, 16
      %v3786 = vrot.slane %v3784, 7
      %v3787 = vor.u32 %v3783, %v3786
      %v3788 = vsel %vm533, %v3778, %v3787
      %v3790 = vshrl.u32 %v3745, 16
      %v3792 = vrot.slane %v3790, 6
      %v3793 = vshll.u32 %v3745, 16
      %v3795 = vrot.slane %v3793, 7
      %v3796 = vor.u32 %v3792, %v3795
      %v3797 = vsel %vm533, %v3787, %v3796
      %v3799 = vshrl.u32 %v3746, 16
      %v3801 = vrot.slane %v3799, 6
      %v3802 = vshll.u32 %v3746, 16
      %v3804 = vrot.slane %v3802, 7
      %v3805 = vor.u32 %v3801, %v3804
      %v3806 = vsel %vm533, %v3796, %v3805
      %v3808 = vshrl.u32 %v3747, 16
      %v3810 = vrot.slane %v3808, 6
      %v3811 = vshll.u32 %v3747, 16
      %v3813 = vrot.slane %v3811, 7
      %v3814 = vor.u32 %v3810, %v3813
      %v3815 = vsel %vm533, %v3805, %v3814
      %v3817 = vshrl.u32 %v3748, 16
      %v3819 = vrot.slane %v3817, 6
      %v3820 = vshll.u32 %v3748, 16
      %v3822 = vrot.slane %v3820, 7
      %v3823 = vor.u32 %v3819, %v3822
      %v3824 = vsel %vm533, %v3814, %v3823
      %v3826 = vshrl.u32 %v3749, 16
      %v3828 = vrot.slane %v3826, 6
      %v3829 = vshll.u32 %v3749, 16
      %v3831 = vrot.slane %v3829, 7
      %v3832 = vor.u32 %v3828, %v3831
      %v3833 = vsel %vm533, %v3823, %v3832
      %v3835 = vshrl.u32 %v3750, 16
      %v3837 = vrot.slane %v3835, 6
      %v3838 = vshll.u32 %v3750, 16
      %v3840 = vrot.slane %v3838, 7
      %v3841 = vor.u32 %v3837, %v3840
      %v3842 = vsel %vm533, %v3832, %v3841
      %v3844 = vshrl.u32 %v3751, 16
      %v3846 = vrot.slane %v3844, 6
      %v3847 = vshll.u32 %v3751, 16
      %v3849 = vrot.slane %v3847, 7
      %v3850 = vor.u32 %v3846, %v3849
      %v3851 = vsel %vm533, %v3841, %v3850
      %v3853 = vshrl.u32 %v3752, 16
      %v3855 = vrot.slane %v3853, 6
      %v3856 = vshll.u32 %v3752, 16
      %v3858 = vrot.slane %v3856, 7
      %v3859 = vor.u32 %v3855, %v3858
      %v3860 = vsel %vm533, %v3850, %v3859
      %v3862 = vshrl.u32 %v3753, 16
      %v3864 = vrot.slane %v3862, 6
      %v3865 = vshll.u32 %v3753, 16
      %v3867 = vrot.slane %v3865, 7
      %v3868 = vor.u32 %v3864, %v3867
      %v3869 = vsel %vm533, %v3859, %v3868
      %v3871 = vshrl.u32 %v3754, 16
      %v3873 = vrot.slane %v3871, 6
      %v3874 = vshll.u32 %v3754, 16
      %v3876 = vrot.slane %v3874, 7
      %v3877 = vor.u32 %v3873, %v3876
      %v3878 = vsel %vm533, %v3868, %v3877
      %v3880 = vshrl.u32 %v3755, 16
      %v3882 = vrot.slane %v3880, 6
      %v3883 = vshll.u32 %v3755, 16
      %v3885 = vrot.slane %v3883, 7
      %v3886 = vor.u32 %v3882, %v3885
      %v3887 = vsel %vm533, %v3877, %v3886
      %v3889 = vshrl.u32 %v3756, 16
      %v3891 = vrot.slane %v3889, 6
      %v3892 = vshll.u32 %v3756, 16
      %v3894 = vrot.slane %v3892, 7
      %v3895 = vor.u32 %v3891, %v3894
      %v3896 = vsel %vm533, %v3886, %v3895
      %v3898 = vshrl.u32 %v3757, 16
      %v3900 = vrot.slane %v3898, 6
      %v3901 = vshll.u32 %v3757, 16
      %v3903 = vrot.slane %v3901, 7
      %v3904 = vor.u32 %v3900, %v3903
      %v3905 = vsel %vm533, %v3895, %v3904
      %v3907 = vshrl.u32 %v3758, 16
      %v3909 = vrot.slane %v3907, 6
      %v3910 = vshll.u32 %v3758, 16
      %v3912 = vrot.slane %v3910, 7
      %v3913 = vor.u32 %v3909, %v3912
      %v3914 = vsel %vm533, %v3904, %v3913
      %v3916 = vshrl.u32 %v3759, 16
      %v3918 = vrot.slane %v3916, 6
      %v3919 = vshll.u32 %v3759, 16
      %v3921 = vrot.slane %v3919, 7
      %v3922 = vor.u32 %v3918, %v3921
      %v3923 = vsel %vm533, %v3913, %v3922
      %v3925 = vshrl.u32 %v3760, 16
      %v3927 = vrot.slane %v3925, 6
      %v3928 = vshll.u32 %v3760, 16
      %v3930 = vrot.slane %v3928, 7
      %v3931 = vor.u32 %v3927, %v3930
      %v3932 = vsel %vm533, %v3922, %v3931
      %v3934 = vshrl.u32 %v3761, 16
      %v3936 = vrot.slane %v3934, 6
      %v3937 = vshll.u32 %v3761, 16
      %v3939 = vrot.slane %v3937, 7
      %v3940 = vor.u32 %v3936, %v3939
      %v3941 = vsel %vm533, %v3931, %v3940
      %v3943 = vshrl.u32 %v3762, 16
      %v3945 = vrot.slane %v3943, 6
      %v3946 = vshll.u32 %v3762, 16
      %v3948 = vrot.slane %v3946, 7
      %v3949 = vor.u32 %v3945, %v3948
      %v3950 = vsel %vm533, %v3940, %v3949
      %v3972 = vsel %vm744, 0, %v3770
      %v3973 = vsel %vm748, %v3950, 0
      %v3974 = vld [vmem:[%s5] sm:$0xf]
      %v3975 = vld [vmem:[%s5 + $0x4] sm:$0xf]
      %v3976 = vld [vmem:[%s5 + $0x8] sm:$0xf]
      %v3977 = vld [vmem:[%s5 + $0xc] sm:$0xf]
      %v3978 = vld [vmem:[%s5 + $0x10] sm:$0xf]
      %v3979 = vld [vmem:[%s5 + $0x14] sm:$0xf]
      %v3980 = vld [vmem:[%s5 + $0x18] sm:$0xf]
      %v3981 = vld [vmem:[%s5 + $0x1c] sm:$0xf]
      %v3982 = vld [vmem:[%s5 + $0x20] sm:$0xf]
      %v3983 = vld [vmem:[%s5 + $0x24] sm:$0xf]
      %v3984 = vld [vmem:[%s5 + $0x28] sm:$0xf]
      %v3985 = vld [vmem:[%s5 + $0x2c] sm:$0xf]
      %v3986 = vld [vmem:[%s5 + $0x30] sm:$0xf]
      %v3987 = vld [vmem:[%s5 + $0x34] sm:$0xf]
      %v3988 = vld [vmem:[%s5 + $0x38] sm:$0xf]
      %v3989 = vld [vmem:[%s5 + $0x3c] sm:$0xf]
      %s3990 = scalar_lea.vmem %s5, 64
      %v3991 = vld [vmem:[%s3990] sm:$0xf]
      %v3992 = vld [vmem:[%s3990 + $0x4] sm:$0xf]
      %v3993 = vld [vmem:[%s3990 + $0x8] sm:$0xf]
      %v3994 = vld [vmem:[%s3990 + $0xc] sm:$0xf]
      %v3995 = vld [vmem:[%s3990 + $0x10] sm:$0xf]
      %v3996 = vld [vmem:[%s3990 + $0x14] sm:$0xf]
      %v3997 = vld [vmem:[%s3990 + $0x18] sm:$0xf]
      %v3998 = vld [vmem:[%s3990 + $0x1c] sm:$0xf]
      %v3999 = vld [vmem:[%s3990 + $0x20] sm:$0xf]
      %v4000 = vld [vmem:[%s3990 + $0x24] sm:$0xf]
      %v4001 = vld [vmem:[%s3990 + $0x28] sm:$0xf]
      %v4002 = vld [vmem:[%s3990 + $0x2c] sm:$0xf]
      %v4003 = vld [vmem:[%s3990 + $0x30] sm:$0xf]
      %v4004 = vld [vmem:[%s3990 + $0x34] sm:$0xf]
      %v4005 = vld [vmem:[%s3990 + $0x38] sm:$0xf]
      %v4006 = vld [vmem:[%s3990 + $0x3c] sm:$0xf]
      %v4008 = vshll.u32 %v3972, 16
      %v4010 = vrot.slane %v4008, 1
      %v4011 = vsel %vm783, %v790, %v4010
      %v4012 = vshrl.u32 %v3972, 16
      %v4014 = vor.u32 %v4012, %v4010
      %v4016 = vshll.u32 %v3779, 16
      %v4018 = vrot.slane %v4016, 1
      %v4019 = vsel %vm783, %v4014, %v4018
      %v4020 = vshrl.u32 %v3779, 16
      %v4022 = vor.u32 %v4020, %v4018
      %v4024 = vshll.u32 %v3788, 16
      %v4026 = vrot.slane %v4024, 1
      %v4027 = vsel %vm783, %v4022, %v4026
      %v4028 = vshrl.u32 %v3788, 16
      %v4030 = vor.u32 %v4028, %v4026
      %v4032 = vshll.u32 %v3797, 16
      %v4034 = vrot.slane %v4032, 1
      %v4035 = vsel %vm783, %v4030, %v4034
      %v4036 = vshrl.u32 %v3797, 16
      %v4038 = vor.u32 %v4036, %v4034
      %v4040 = vshll.u32 %v3806, 16
      %v4042 = vrot.slane %v4040, 1
      %v4043 = vsel %vm783, %v4038, %v4042
      %v4044 = vshrl.u32 %v3806, 16
      %v4046 = vor.u32 %v4044, %v4042
      %v4048 = vshll.u32 %v3815, 16
      %v4050 = vrot.slane %v4048, 1
      %v4051 = vsel %vm783, %v4046, %v4050
      %v4052 = vshrl.u32 %v3815, 16
      %v4054 = vor.u32 %v4052, %v4050
      %v4056 = vshll.u32 %v3824, 16
      %v4058 = vrot.slane %v4056, 1
      %v4059 = vsel %vm783, %v4054, %v4058
      %v4060 = vshrl.u32 %v3824, 16
      %v4062 = vor.u32 %v4060, %v4058
      %v4064 = vshll.u32 %v3833, 16
      %v4066 = vrot.slane %v4064, 1
      %v4067 = vsel %vm783, %v4062, %v4066
      %v4068 = vshrl.u32 %v3833, 16
      %v4070 = vor.u32 %v4068, %v4066
      %v4072 = vshll.u32 %v3842, 16
      %v4074 = vrot.slane %v4072, 1
      %v4075 = vsel %vm783, %v4070, %v4074
      %v4076 = vshrl.u32 %v3842, 16
      %v4078 = vor.u32 %v4076, %v4074
      %v4080 = vshll.u32 %v3851, 16
      %v4082 = vrot.slane %v4080, 1
      %v4083 = vsel %vm783, %v4078, %v4082
      %v4084 = vshrl.u32 %v3851, 16
      %v4086 = vor.u32 %v4084, %v4082
      %v4088 = vshll.u32 %v3860, 16
      %v4090 = vrot.slane %v4088, 1
      %v4091 = vsel %vm783, %v4086, %v4090
      %v4092 = vshrl.u32 %v3860, 16
      %v4094 = vor.u32 %v4092, %v4090
      %v4096 = vshll.u32 %v3869, 16
      %v4098 = vrot.slane %v4096, 1
      %v4099 = vsel %vm783, %v4094, %v4098
      %v4100 = vshrl.u32 %v3869, 16
      %v4102 = vor.u32 %v4100, %v4098
      %v4104 = vshll.u32 %v3878, 16
      %v4106 = vrot.slane %v4104, 1
      %v4107 = vsel %vm783, %v4102, %v4106
      %v4108 = vshrl.u32 %v3878, 16
      %v4110 = vor.u32 %v4108, %v4106
      %v4112 = vshll.u32 %v3887, 16
      %v4114 = vrot.slane %v4112, 1
      %v4115 = vsel %vm783, %v4110, %v4114
      %v4116 = vshrl.u32 %v3887, 16
      %v4118 = vor.u32 %v4116, %v4114
      %v4120 = vshll.u32 %v3896, 16
      %v4122 = vrot.slane %v4120, 1
      %v4123 = vsel %vm783, %v4118, %v4122
      %v4124 = vshrl.u32 %v3896, 16
      %v4126 = vor.u32 %v4124, %v4122
      %v4128 = vshll.u32 %v3905, 16
      %v4130 = vrot.slane %v4128, 1
      %v4131 = vsel %vm783, %v4126, %v4130
      %v4132 = vshrl.u32 %v3905, 16
      %v4134 = vor.u32 %v4132, %v4130
      %v4136 = vshll.u32 %v3914, 16
      %v4138 = vrot.slane %v4136, 1
      %v4139 = vsel %vm783, %v4134, %v4138
      %v4140 = vshrl.u32 %v3914, 16
      %v4142 = vor.u32 %v4140, %v4138
      %v4144 = vshll.u32 %v3923, 16
      %v4146 = vrot.slane %v4144, 1
      %v4147 = vsel %vm783, %v4142, %v4146
      %v4148 = vshrl.u32 %v3923, 16
      %v4150 = vor.u32 %v4148, %v4146
      %v4152 = vshll.u32 %v3932, 16
      %v4154 = vrot.slane %v4152, 1
      %v4155 = vsel %vm783, %v4150, %v4154
      %v4156 = vshrl.u32 %v3932, 16
      %v4158 = vor.u32 %v4156, %v4154
      %v4160 = vshll.u32 %v3941, 16
      %v4162 = vrot.slane %v4160, 1
      %v4163 = vsel %vm783, %v4158, %v4162
      %v4164 = vshrl.u32 %v3941, 16
      %v4166 = vor.u32 %v4164, %v4162
      %v4204 = vunpack.c.l.b16 %v3991
      %v4205 = vunpack.c.l.b16 %v3992
      %v4206 = vunpack.c.l.b16 %v3993
      %v4207 = vunpack.c.l.b16 %v3994
      %v4208 = vunpack.c.l.b16 %v3995
      %v4209 = vunpack.c.l.b16 %v3996
      %v4210 = vunpack.c.l.b16 %v3997
      %v4211 = vunpack.c.l.b16 %v3998
      %v4212 = vunpack.c.l.b16 %v3999
      %v4213 = vunpack.c.l.b16 %v4000
      %v4214 = vunpack.c.l.b16 %v4001
      %v4215 = vunpack.c.l.b16 %v4002
      %v4216 = vunpack.c.l.b16 %v4003
      %v4217 = vunpack.c.l.b16 %v4004
      %v4218 = vunpack.c.l.b16 %v4005
      %v4219 = vunpack.c.l.b16 %v4006
      %v4220 = vpack.c.b16 %v4205, %v4204
      %v4221 = vpack.c.b16 %v4207, %v4206
      %v4222 = vpack.c.b16 %v4209, %v4208
      %v4223 = vpack.c.b16 %v4211, %v4210
      %v4224 = vpack.c.b16 %v4213, %v4212
      %v4225 = vpack.c.b16 %v4215, %v4214
      %v4226 = vpack.c.b16 %v4217, %v4216
      %v4227 = vpack.c.b16 %v4219, %v4218
      %4236 = vmatpush.bf16.msra.mxu0 %v4227
      %4237 = vmatpush.bf16.msra.mxu0 %v4226
      %4238 = vmatpush.bf16.msra.mxu0 %v4225
      %4239 = vmatpush.bf16.msra.mxu0 %v4224
      %4240 = vmatpush.bf16.msra.mxu0 %v4223
      %4241 = vmatpush.bf16.msra.mxu0 %v4222
      %4242 = vmatpush.bf16.msra.mxu0 %v4221
      %4243 = vmatpush.bf16.msra.mxu0 %v4220
      %4244 = vmatmul.bf16.gmra.mxu0 %v4011
      %v4245 = vpop.f32.mrf.mxu0
      %v4246 = vadd.f32 0.0, %v4245
      %v4247 = vpop.f32.mrf.mxu0
      %v4248 = vadd.f32 0.0, %v4247
      %4249 = vmatmul.bf16.gmra.mxu0 %v4019
      %v4250 = vpop.f32.mrf.mxu0
      %v4251 = vadd.f32 0.0, %v4250
      %v4252 = vpop.f32.mrf.mxu0
      %v4253 = vadd.f32 0.0, %v4252
      %4254 = vmatmul.bf16.gmra.mxu0 %v4027
      %v4255 = vpop.f32.mrf.mxu0
      %v4256 = vadd.f32 0.0, %v4255
      %v4257 = vpop.f32.mrf.mxu0
      %v4258 = vadd.f32 0.0, %v4257
      %4259 = vmatmul.bf16.gmra.mxu0 %v4035
      %v4260 = vpop.f32.mrf.mxu0
      %v4261 = vadd.f32 0.0, %v4260
      %v4262 = vpop.f32.mrf.mxu0
      %v4263 = vadd.f32 0.0, %v4262
      %4264 = vmatmul.bf16.gmra.mxu0 %v4043
      %v4265 = vpop.f32.mrf.mxu0
      %v4266 = vadd.f32 0.0, %v4265
      %v4267 = vpop.f32.mrf.mxu0
      %v4268 = vadd.f32 0.0, %v4267
      %4269 = vmatmul.bf16.gmra.mxu0 %v4051
      %v4270 = vpop.f32.mrf.mxu0
      %v4271 = vadd.f32 0.0, %v4270
      %v4272 = vpop.f32.mrf.mxu0
      %v4273 = vadd.f32 0.0, %v4272
      %4274 = vmatmul.bf16.gmra.mxu0 %v4059
      %v4275 = vpop.f32.mrf.mxu0
      %v4276 = vadd.f32 0.0, %v4275
      %v4277 = vpop.f32.mrf.mxu0
      %v4278 = vadd.f32 0.0, %v4277
      %4279 = vmatmul.bf16.gmra.mxu0 %v4067
      %v4280 = vpop.f32.mrf.mxu0
      %v4281 = vadd.f32 0.0, %v4280
      %v4282 = vpop.f32.mrf.mxu0
      %v4283 = vadd.f32 0.0, %v4282
      %4284 = vmatmul.bf16.gmra.mxu0 %v4075
      %v4285 = vpop.f32.mrf.mxu0
      %v4286 = vadd.f32 0.0, %v4285
      %v4287 = vpop.f32.mrf.mxu0
      %v4288 = vadd.f32 0.0, %v4287
      %4289 = vmatmul.bf16.gmra.mxu0 %v4083
      %v4290 = vpop.f32.mrf.mxu0
      %v4291 = vadd.f32 0.0, %v4290
      %v4292 = vpop.f32.mrf.mxu0
      %v4293 = vadd.f32 0.0, %v4292
      %4294 = vmatmul.bf16.gmra.mxu0 %v4091
      %v4295 = vpop.f32.mrf.mxu0
      %v4296 = vadd.f32 0.0, %v4295
      %v4297 = vpop.f32.mrf.mxu0
      %v4298 = vadd.f32 0.0, %v4297
      %4299 = vmatmul.bf16.gmra.mxu0 %v4099
      %v4300 = vpop.f32.mrf.mxu0
      %v4301 = vadd.f32 0.0, %v4300
      %v4302 = vpop.f32.mrf.mxu0
      %v4303 = vadd.f32 0.0, %v4302
      %4304 = vmatmul.bf16.gmra.mxu0 %v4107
      %v4305 = vpop.f32.mrf.mxu0
      %v4306 = vadd.f32 0.0, %v4305
      %v4307 = vpop.f32.mrf.mxu0
      %v4308 = vadd.f32 0.0, %v4307
      %4309 = vmatmul.bf16.gmra.mxu0 %v4115
      %v4310 = vpop.f32.mrf.mxu0
      %v4311 = vadd.f32 0.0, %v4310
      %v4312 = vpop.f32.mrf.mxu0
      %v4313 = vadd.f32 0.0, %v4312
      %4314 = vmatmul.bf16.gmra.mxu0 %v4123
      %v4315 = vpop.f32.mrf.mxu0
      %v4316 = vadd.f32 0.0, %v4315
      %v4317 = vpop.f32.mrf.mxu0
      %v4318 = vadd.f32 0.0, %v4317
      %4319 = vmatmul.bf16.gmra.mxu0 %v4131
      %v4320 = vpop.f32.mrf.mxu0
      %v4321 = vadd.f32 0.0, %v4320
      %v4322 = vpop.f32.mrf.mxu0
      %v4323 = vadd.f32 0.0, %v4322
      %4324 = vmatmul.bf16.gmra.mxu0 %v4139
      %v4325 = vpop.f32.mrf.mxu0
      %v4326 = vadd.f32 0.0, %v4325
      %v4327 = vpop.f32.mrf.mxu0
      %v4328 = vadd.f32 0.0, %v4327
      %4329 = vmatmul.bf16.gmra.mxu0 %v4147
      %v4330 = vpop.f32.mrf.mxu0
      %v4331 = vadd.f32 0.0, %v4330
      %v4332 = vpop.f32.mrf.mxu0
      %v4333 = vadd.f32 0.0, %v4332
      %4334 = vmatmul.bf16.gmra.mxu0 %v4155
      %v4335 = vpop.f32.mrf.mxu0
      %v4336 = vadd.f32 0.0, %v4335
      %v4337 = vpop.f32.mrf.mxu0
      %v4338 = vadd.f32 0.0, %v4337
      %4339 = vmatmul.bf16.gmra.mxu0 %v4163
      %v4340 = vpop.f32.mrf.mxu0
      %v4341 = vadd.f32 0.0, %v4340
      %v4342 = vpop.f32.mrf.mxu0
      %v4343 = vadd.f32 0.0, %v4342
      %4344 = vmatmul.bf16.gmra.mxu0 %v4166
      %v4345 = vpop.f32.mrf.mxu0
      %v4346 = vadd.f32 0.0, %v4345
      %v4347 = vpop.f32.mrf.mxu0
      %4348 = vdwg.mxu0
      %v4365 = vunpack.c.l.b16 %v3974
      %v4366 = vunpack.c.l.b16 %v3975
      %v4367 = vunpack.c.l.b16 %v3976
      %v4368 = vunpack.c.l.b16 %v3977
      %v4369 = vunpack.c.l.b16 %v3978
      %v4370 = vunpack.c.l.b16 %v3979
      %v4371 = vunpack.c.l.b16 %v3980
      %v4372 = vunpack.c.l.b16 %v3981
      %v4373 = vunpack.c.l.b16 %v3982
      %v4374 = vunpack.c.l.b16 %v3983
      %v4375 = vunpack.c.l.b16 %v3984
      %v4376 = vunpack.c.l.b16 %v3985
      %v4377 = vunpack.c.l.b16 %v3986
      %v4378 = vunpack.c.l.b16 %v3987
      %v4379 = vunpack.c.l.b16 %v3988
      %v4380 = vunpack.c.l.b16 %v3989
      %v4381 = vpack.c.b16 %v4366, %v4365
      %v4382 = vpack.c.b16 %v4368, %v4367
      %v4383 = vpack.c.b16 %v4370, %v4369
      %v4384 = vpack.c.b16 %v4372, %v4371
      %v4385 = vpack.c.b16 %v4374, %v4373
      %v4386 = vpack.c.b16 %v4376, %v4375
      %v4387 = vpack.c.b16 %v4378, %v4377
      %v4388 = vpack.c.b16 %v4380, %v4379
      %4397 = vmatpush.bf16.msra.mxu0 %v4388
      %4398 = vmatpush.bf16.msra.mxu0 %v4387
      %4399 = vmatpush.bf16.msra.mxu0 %v4386
      %4400 = vmatpush.bf16.msra.mxu0 %v4385
      %4401 = vmatpush.bf16.msra.mxu0 %v4384
      %4402 = vmatpush.bf16.msra.mxu0 %v4383
      %4403 = vmatpush.bf16.msra.mxu0 %v4382
      %4404 = vmatpush.bf16.msra.mxu0 %v4381
      %4405 = vmatmul.bf16.gmra.mxu0 0
      %v4406 = vpop.f32.mrf.mxu0
      %v4407 = vadd.f32 %v4246, %v4406
      %v4408 = vpop.f32.mrf.mxu0
      %v4409 = vadd.f32 %v4248, %v4408
      %4410 = vmatmul.bf16.gmra.mxu0 %v3972
      %v4411 = vpop.f32.mrf.mxu0
      %v4412 = vadd.f32 %v4251, %v4411
      %v4413 = vpop.f32.mrf.mxu0
      %v4414 = vadd.f32 %v4253, %v4413
      %4415 = vmatmul.bf16.gmra.mxu0 %v3779
      %v4416 = vpop.f32.mrf.mxu0
      %v4417 = vadd.f32 %v4256, %v4416
      %v4418 = vpop.f32.mrf.mxu0
      %v4419 = vadd.f32 %v4258, %v4418
      %4420 = vmatmul.bf16.gmra.mxu0 %v3788
      %v4421 = vpop.f32.mrf.mxu0
      %v4422 = vadd.f32 %v4261, %v4421
      %v4423 = vpop.f32.mrf.mxu0
      %v4424 = vadd.f32 %v4263, %v4423
      %4425 = vmatmul.bf16.gmra.mxu0 %v3797
      %v4426 = vpop.f32.mrf.mxu0
      %v4427 = vadd.f32 %v4266, %v4426
      %v4428 = vpop.f32.mrf.mxu0
      %v4429 = vadd.f32 %v4268, %v4428
      %4430 = vmatmul.bf16.gmra.mxu0 %v3806
      %v4431 = vpop.f32.mrf.mxu0
      %v4432 = vadd.f32 %v4271, %v4431
      %v4433 = vpop.f32.mrf.mxu0
      %v4434 = vadd.f32 %v4273, %v4433
      %4435 = vmatmul.bf16.gmra.mxu0 %v3815
      %v4436 = vpop.f32.mrf.mxu0
      %v4437 = vadd.f32 %v4276, %v4436
      %v4438 = vpop.f32.mrf.mxu0
      %v4439 = vadd.f32 %v4278, %v4438
      %4440 = vmatmul.bf16.gmra.mxu0 %v3824
      %v4441 = vpop.f32.mrf.mxu0
      %v4442 = vadd.f32 %v4281, %v4441
      %v4443 = vpop.f32.mrf.mxu0
      %v4444 = vadd.f32 %v4283, %v4443
      %4445 = vmatmul.bf16.gmra.mxu0 %v3833
      %v4446 = vpop.f32.mrf.mxu0
      %v4447 = vadd.f32 %v4286, %v4446
      %v4448 = vpop.f32.mrf.mxu0
      %v4449 = vadd.f32 %v4288, %v4448
      %4450 = vmatmul.bf16.gmra.mxu0 %v3842
      %v4451 = vpop.f32.mrf.mxu0
      %v4452 = vadd.f32 %v4291, %v4451
      %v4453 = vpop.f32.mrf.mxu0
      %v4454 = vadd.f32 %v4293, %v4453
      %4455 = vmatmul.bf16.gmra.mxu0 %v3851
      %v4456 = vpop.f32.mrf.mxu0
      %v4457 = vadd.f32 %v4296, %v4456
      %v4458 = vpop.f32.mrf.mxu0
      %v4459 = vadd.f32 %v4298, %v4458
      %4460 = vmatmul.bf16.gmra.mxu0 %v3860
      %v4461 = vpop.f32.mrf.mxu0
      %v4462 = vadd.f32 %v4301, %v4461
      %v4463 = vpop.f32.mrf.mxu0
      %v4464 = vadd.f32 %v4303, %v4463
      %4465 = vmatmul.bf16.gmra.mxu0 %v3869
      %v4466 = vpop.f32.mrf.mxu0
      %v4467 = vadd.f32 %v4306, %v4466
      %v4468 = vpop.f32.mrf.mxu0
      %v4469 = vadd.f32 %v4308, %v4468
      %4470 = vmatmul.bf16.gmra.mxu0 %v3878
      %v4471 = vpop.f32.mrf.mxu0
      %v4472 = vadd.f32 %v4311, %v4471
      %v4473 = vpop.f32.mrf.mxu0
      %v4474 = vadd.f32 %v4313, %v4473
      %4475 = vmatmul.bf16.gmra.mxu0 %v3887
      %v4476 = vpop.f32.mrf.mxu0
      %v4477 = vadd.f32 %v4316, %v4476
      %v4478 = vpop.f32.mrf.mxu0
      %v4479 = vadd.f32 %v4318, %v4478
      %4480 = vmatmul.bf16.gmra.mxu0 %v3896
      %v4481 = vpop.f32.mrf.mxu0
      %v4482 = vadd.f32 %v4321, %v4481
      %v4483 = vpop.f32.mrf.mxu0
      %v4484 = vadd.f32 %v4323, %v4483
      %4485 = vmatmul.bf16.gmra.mxu0 %v3905
      %v4486 = vpop.f32.mrf.mxu0
      %v4487 = vadd.f32 %v4326, %v4486
      %v4488 = vpop.f32.mrf.mxu0
      %v4489 = vadd.f32 %v4328, %v4488
      %4490 = vmatmul.bf16.gmra.mxu0 %v3914
      %v4491 = vpop.f32.mrf.mxu0
      %v4492 = vadd.f32 %v4331, %v4491
      %v4493 = vpop.f32.mrf.mxu0
      %v4494 = vadd.f32 %v4333, %v4493
      %4495 = vmatmul.bf16.gmra.mxu0 %v3923
      %v4496 = vpop.f32.mrf.mxu0
      %v4497 = vadd.f32 %v4336, %v4496
      %v4498 = vpop.f32.mrf.mxu0
      %v4499 = vadd.f32 %v4338, %v4498
      %4500 = vmatmul.bf16.gmra.mxu0 %v3932
      %v4501 = vpop.f32.mrf.mxu0
      %v4502 = vadd.f32 %v4341, %v4501
      %v4503 = vpop.f32.mrf.mxu0
      %v4504 = vadd.f32 %v4343, %v4503
      %4505 = vmatmul.bf16.gmra.mxu0 %v3941
      %v4506 = vpop.f32.mrf.mxu0
      %v4507 = vadd.f32 %v4346, %v4506
      %v4508 = vpop.f32.mrf.mxu0
      %4509 = vdwg.mxu0
      %s4510 = scalar_lea.vmem %s5, 128
      %v4511 = vld [vmem:[%s4510] sm:$0xf]
      %v4512 = vld [vmem:[%s4510 + $0x4] sm:$0xf]
      %v4513 = vld [vmem:[%s4510 + $0x8] sm:$0xf]
      %v4514 = vld [vmem:[%s4510 + $0xc] sm:$0xf]
      %v4515 = vld [vmem:[%s4510 + $0x10] sm:$0xf]
      %v4516 = vld [vmem:[%s4510 + $0x14] sm:$0xf]
      %v4517 = vld [vmem:[%s4510 + $0x18] sm:$0xf]
      %v4518 = vld [vmem:[%s4510 + $0x1c] sm:$0xf]
      %v4519 = vld [vmem:[%s4510 + $0x20] sm:$0xf]
      %v4520 = vld [vmem:[%s4510 + $0x24] sm:$0xf]
      %v4521 = vld [vmem:[%s4510 + $0x28] sm:$0xf]
      %v4522 = vld [vmem:[%s4510 + $0x2c] sm:$0xf]
      %v4523 = vld [vmem:[%s4510 + $0x30] sm:$0xf]
      %v4524 = vld [vmem:[%s4510 + $0x34] sm:$0xf]
      %v4525 = vld [vmem:[%s4510 + $0x38] sm:$0xf]
      %v4526 = vld [vmem:[%s4510 + $0x3c] sm:$0xf]
      %v4528 = vrot.slane %v3972, 1
      %v4529 = vsel %vm1313, %v1314, %v4528
      %v4530 = vrot.slane %v3779, 1
      %v4531 = vsel %vm1313, %v4528, %v4530
      %v4532 = vrot.slane %v3788, 1
      %v4533 = vsel %vm1313, %v4530, %v4532
      %v4534 = vrot.slane %v3797, 1
      %v4535 = vsel %vm1313, %v4532, %v4534
      %v4536 = vrot.slane %v3806, 1
      %v4537 = vsel %vm1313, %v4534, %v4536
      %v4538 = vrot.slane %v3815, 1
      %v4539 = vsel %vm1313, %v4536, %v4538
      %v4540 = vrot.slane %v3824, 1
      %v4541 = vsel %vm1313, %v4538, %v4540
      %v4542 = vrot.slane %v3833, 1
      %v4543 = vsel %vm1313, %v4540, %v4542
      %v4544 = vrot.slane %v3842, 1
      %v4545 = vsel %vm1313, %v4542, %v4544
      %v4546 = vrot.slane %v3851, 1
      %v4547 = vsel %vm1313, %v4544, %v4546
      %v4548 = vrot.slane %v3860, 1
      %v4549 = vsel %vm1313, %v4546, %v4548
      %v4550 = vrot.slane %v3869, 1
      %v4551 = vsel %vm1313, %v4548, %v4550
      %v4552 = vrot.slane %v3878, 1
      %v4553 = vsel %vm1313, %v4550, %v4552
      %v4554 = vrot.slane %v3887, 1
      %v4555 = vsel %vm1313, %v4552, %v4554
      %v4556 = vrot.slane %v3896, 1
      %v4557 = vsel %vm1313, %v4554, %v4556
      %v4558 = vrot.slane %v3905, 1
      %v4559 = vsel %vm1313, %v4556, %v4558
      %v4560 = vrot.slane %v3914, 1
      %v4561 = vsel %vm1313, %v4558, %v4560
      %v4562 = vrot.slane %v3923, 1
      %v4563 = vsel %vm1313, %v4560, %v4562
      %v4564 = vrot.slane %v3932, 1
      %v4565 = vsel %vm1313, %v4562, %v4564
      %v4566 = vrot.slane %v3941, 1
      %v4567 = vsel %vm1313, %v4564, %v4566
      %v4605 = vunpack.c.l.b16 %v4511
      %v4606 = vunpack.c.l.b16 %v4512
      %v4607 = vunpack.c.l.b16 %v4513
      %v4608 = vunpack.c.l.b16 %v4514
      %v4609 = vunpack.c.l.b16 %v4515
      %v4610 = vunpack.c.l.b16 %v4516
      %v4611 = vunpack.c.l.b16 %v4517
      %v4612 = vunpack.c.l.b16 %v4518
      %v4613 = vunpack.c.l.b16 %v4519
      %v4614 = vunpack.c.l.b16 %v4520
      %v4615 = vunpack.c.l.b16 %v4521
      %v4616 = vunpack.c.l.b16 %v4522
      %v4617 = vunpack.c.l.b16 %v4523
      %v4618 = vunpack.c.l.b16 %v4524
      %v4619 = vunpack.c.l.b16 %v4525
      %v4620 = vunpack.c.l.b16 %v4526
      %v4621 = vpack.c.b16 %v4606, %v4605
      %v4622 = vpack.c.b16 %v4608, %v4607
      %v4623 = vpack.c.b16 %v4610, %v4609
      %v4624 = vpack.c.b16 %v4612, %v4611
      %v4625 = vpack.c.b16 %v4614, %v4613
      %v4626 = vpack.c.b16 %v4616, %v4615
      %v4627 = vpack.c.b16 %v4618, %v4617
      %v4628 = vpack.c.b16 %v4620, %v4619
      %4637 = vmatpush.bf16.msra.mxu0 %v4628
      %4638 = vmatpush.bf16.msra.mxu0 %v4627
      %4639 = vmatpush.bf16.msra.mxu0 %v4626
      %4640 = vmatpush.bf16.msra.mxu0 %v4625
      %4641 = vmatpush.bf16.msra.mxu0 %v4624
      %4642 = vmatpush.bf16.msra.mxu0 %v4623
      %4643 = vmatpush.bf16.msra.mxu0 %v4622
      %4644 = vmatpush.bf16.msra.mxu0 %v4621
      %4645 = vmatmul.bf16.gmra.mxu0 %v4529
      %v4646 = vpop.f32.mrf.mxu0
      %v4647 = vadd.f32 0.0, %v4646
      %v4648 = vpop.f32.mrf.mxu0
      %v4649 = vadd.f32 0.0, %v4648
      %4650 = vmatmul.bf16.gmra.mxu0 %v4531
      %v4651 = vpop.f32.mrf.mxu0
      %v4652 = vadd.f32 0.0, %v4651
      %v4653 = vpop.f32.mrf.mxu0
      %v4654 = vadd.f32 0.0, %v4653
      %4655 = vmatmul.bf16.gmra.mxu0 %v4533
      %v4656 = vpop.f32.mrf.mxu0
      %v4657 = vadd.f32 0.0, %v4656
      %v4658 = vpop.f32.mrf.mxu0
      %v4659 = vadd.f32 0.0, %v4658
      %4660 = vmatmul.bf16.gmra.mxu0 %v4535
      %v4661 = vpop.f32.mrf.mxu0
      %v4662 = vadd.f32 0.0, %v4661
      %v4663 = vpop.f32.mrf.mxu0
      %v4664 = vadd.f32 0.0, %v4663
      %4665 = vmatmul.bf16.gmra.mxu0 %v4537
      %v4666 = vpop.f32.mrf.mxu0
      %v4667 = vadd.f32 0.0, %v4666
      %v4668 = vpop.f32.mrf.mxu0
      %v4669 = vadd.f32 0.0, %v4668
      %4670 = vmatmul.bf16.gmra.mxu0 %v4539
      %v4671 = vpop.f32.mrf.mxu0
      %v4672 = vadd.f32 0.0, %v4671
      %v4673 = vpop.f32.mrf.mxu0
      %v4674 = vadd.f32 0.0, %v4673
      %4675 = vmatmul.bf16.gmra.mxu0 %v4541
      %v4676 = vpop.f32.mrf.mxu0
      %v4677 = vadd.f32 0.0, %v4676
      %v4678 = vpop.f32.mrf.mxu0
      %v4679 = vadd.f32 0.0, %v4678
      %4680 = vmatmul.bf16.gmra.mxu0 %v4543
      %v4681 = vpop.f32.mrf.mxu0
      %v4682 = vadd.f32 0.0, %v4681
      %v4683 = vpop.f32.mrf.mxu0
      %v4684 = vadd.f32 0.0, %v4683
      %4685 = vmatmul.bf16.gmra.mxu0 %v4545
      %v4686 = vpop.f32.mrf.mxu0
      %v4687 = vadd.f32 0.0, %v4686
      %v4688 = vpop.f32.mrf.mxu0
      %v4689 = vadd.f32 0.0, %v4688
      %4690 = vmatmul.bf16.gmra.mxu0 %v4547
      %v4691 = vpop.f32.mrf.mxu0
      %v4692 = vadd.f32 0.0, %v4691
      %v4693 = vpop.f32.mrf.mxu0
      %v4694 = vadd.f32 0.0, %v4693
      %4695 = vmatmul.bf16.gmra.mxu0 %v4549
      %v4696 = vpop.f32.mrf.mxu0
      %v4697 = vadd.f32 0.0, %v4696
      %v4698 = vpop.f32.mrf.mxu0
      %v4699 = vadd.f32 0.0, %v4698
      %4700 = vmatmul.bf16.gmra.mxu0 %v4551
      %v4701 = vpop.f32.mrf.mxu0
      %v4702 = vadd.f32 0.0, %v4701
      %v4703 = vpop.f32.mrf.mxu0
      %v4704 = vadd.f32 0.0, %v4703
      %4705 = vmatmul.bf16.gmra.mxu0 %v4553
      %v4706 = vpop.f32.mrf.mxu0
      %v4707 = vadd.f32 0.0, %v4706
      %v4708 = vpop.f32.mrf.mxu0
      %v4709 = vadd.f32 0.0, %v4708
      %4710 = vmatmul.bf16.gmra.mxu0 %v4555
      %v4711 = vpop.f32.mrf.mxu0
      %v4712 = vadd.f32 0.0, %v4711
      %v4713 = vpop.f32.mrf.mxu0
      %v4714 = vadd.f32 0.0, %v4713
      %4715 = vmatmul.bf16.gmra.mxu0 %v4557
      %v4716 = vpop.f32.mrf.mxu0
      %v4717 = vadd.f32 0.0, %v4716
      %v4718 = vpop.f32.mrf.mxu0
      %v4719 = vadd.f32 0.0, %v4718
      %4720 = vmatmul.bf16.gmra.mxu0 %v4559
      %v4721 = vpop.f32.mrf.mxu0
      %v4722 = vadd.f32 0.0, %v4721
      %v4723 = vpop.f32.mrf.mxu0
      %v4724 = vadd.f32 0.0, %v4723
      %4725 = vmatmul.bf16.gmra.mxu0 %v4561
      %v4726 = vpop.f32.mrf.mxu0
      %v4727 = vadd.f32 0.0, %v4726
      %v4728 = vpop.f32.mrf.mxu0
      %v4729 = vadd.f32 0.0, %v4728
      %4730 = vmatmul.bf16.gmra.mxu0 %v4563
      %v4731 = vpop.f32.mrf.mxu0
      %v4732 = vadd.f32 0.0, %v4731
      %v4733 = vpop.f32.mrf.mxu0
      %v4734 = vadd.f32 0.0, %v4733
      %4735 = vmatmul.bf16.gmra.mxu0 %v4565
      %v4736 = vpop.f32.mrf.mxu0
      %v4737 = vadd.f32 0.0, %v4736
      %v4738 = vpop.f32.mrf.mxu0
      %v4739 = vadd.f32 0.0, %v4738
      %4740 = vmatmul.bf16.gmra.mxu0 %v4567
      %v4741 = vpop.f32.mrf.mxu0
      %v4742 = vadd.f32 0.0, %v4741
      %v4743 = vpop.f32.mrf.mxu0
      %v4744 = vadd.f32 0.0, %v4743
      %4745 = vmatmul.bf16.gmra.mxu0 %v4566
      %v4746 = vpop.f32.mrf.mxu0
      %v4747 = vadd.f32 0.0, %v4746
      %v4748 = vpop.f32.mrf.mxu0
      %4749 = vdwg.mxu0
      %v4750 = vadd.f32 %v4407, %v4647
      %v4751 = vadd.f32 %v4409, %v4649
      %v4752 = vadd.f32 %v4412, %v4652
      %v4753 = vadd.f32 %v4414, %v4654
      %v4754 = vadd.f32 %v4417, %v4657
      %v4755 = vadd.f32 %v4419, %v4659
      %v4756 = vadd.f32 %v4422, %v4662
      %v4757 = vadd.f32 %v4424, %v4664
      %v4758 = vadd.f32 %v4427, %v4667
      %v4759 = vadd.f32 %v4429, %v4669
      %v4760 = vadd.f32 %v4432, %v4672
      %v4761 = vadd.f32 %v4434, %v4674
      %v4762 = vadd.f32 %v4437, %v4677
      %v4763 = vadd.f32 %v4439, %v4679
      %v4764 = vadd.f32 %v4442, %v4682
      %v4765 = vadd.f32 %v4444, %v4684
      %v4766 = vadd.f32 %v4447, %v4687
      %v4767 = vadd.f32 %v4449, %v4689
      %v4768 = vadd.f32 %v4452, %v4692
      %v4769 = vadd.f32 %v4454, %v4694
      %v4770 = vadd.f32 %v4457, %v4697
      %v4771 = vadd.f32 %v4459, %v4699
      %v4772 = vadd.f32 %v4462, %v4702
      %v4773 = vadd.f32 %v4464, %v4704
      %v4774 = vadd.f32 %v4467, %v4707
      %v4775 = vadd.f32 %v4469, %v4709
      %v4776 = vadd.f32 %v4472, %v4712
      %v4777 = vadd.f32 %v4474, %v4714
      %v4778 = vadd.f32 %v4477, %v4717
      %v4779 = vadd.f32 %v4479, %v4719
      %v4780 = vadd.f32 %v4482, %v4722
      %v4781 = vadd.f32 %v4484, %v4724
      %v4782 = vadd.f32 %v4487, %v4727
      %v4783 = vadd.f32 %v4489, %v4729
      %v4784 = vadd.f32 %v4492, %v4732
      %v4785 = vadd.f32 %v4494, %v4734
      %v4786 = vadd.f32 %v4497, %v4737
      %v4787 = vadd.f32 %v4499, %v4739
      %v4788 = vadd.f32 %v4502, %v4742
      %v4789 = vadd.f32 %v4504, %v4744
      %v4790 = vadd.f32 %v4507, %v4747
      %s4791 = scalar_lea.vmem %s5, 192
      %v4792 = vld [vmem:[%s4791] sm:$0xf]
      %v4793 = vld [vmem:[%s4791 + $0x4] sm:$0xf]
      %v4794 = vld [vmem:[%s4791 + $0x8] sm:$0xf]
      %v4795 = vld [vmem:[%s4791 + $0xc] sm:$0xf]
      %v4796 = vld [vmem:[%s4791 + $0x10] sm:$0xf]
      %v4797 = vld [vmem:[%s4791 + $0x14] sm:$0xf]
      %v4798 = vld [vmem:[%s4791 + $0x18] sm:$0xf]
      %v4799 = vld [vmem:[%s4791 + $0x1c] sm:$0xf]
      %v4800 = vld [vmem:[%s4791 + $0x20] sm:$0xf]
      %v4801 = vld [vmem:[%s4791 + $0x24] sm:$0xf]
      %v4802 = vld [vmem:[%s4791 + $0x28] sm:$0xf]
      %v4803 = vld [vmem:[%s4791 + $0x2c] sm:$0xf]
      %v4804 = vld [vmem:[%s4791 + $0x30] sm:$0xf]
      %v4805 = vld [vmem:[%s4791 + $0x34] sm:$0xf]
      %v4806 = vld [vmem:[%s4791 + $0x38] sm:$0xf]
      %v4807 = vld [vmem:[%s4791 + $0x3c] sm:$0xf]
      %v4809 = vrot.slane %v3973, 1
      %v4810 = vsel %vm1313, %v4566, %v4809
      %v4829 = vunpack.c.l.b16 %v4792
      %v4830 = vunpack.c.l.b16 %v4793
      %v4831 = vunpack.c.l.b16 %v4794
      %v4832 = vunpack.c.l.b16 %v4795
      %v4833 = vunpack.c.l.b16 %v4796
      %v4834 = vunpack.c.l.b16 %v4797
      %v4835 = vunpack.c.l.b16 %v4798
      %v4836 = vunpack.c.l.b16 %v4799
      %v4837 = vunpack.c.l.b16 %v4800
      %v4838 = vunpack.c.l.b16 %v4801
      %v4839 = vunpack.c.l.b16 %v4802
      %v4840 = vunpack.c.l.b16 %v4803
      %v4841 = vunpack.c.l.b16 %v4804
      %v4842 = vunpack.c.l.b16 %v4805
      %v4843 = vunpack.c.l.b16 %v4806
      %v4844 = vunpack.c.l.b16 %v4807
      %v4845 = vpack.c.b16 %v4830, %v4829
      %v4846 = vpack.c.b16 %v4832, %v4831
      %v4847 = vpack.c.b16 %v4834, %v4833
      %v4848 = vpack.c.b16 %v4836, %v4835
      %v4849 = vpack.c.b16 %v4838, %v4837
      %v4850 = vpack.c.b16 %v4840, %v4839
      %v4851 = vpack.c.b16 %v4842, %v4841
      %v4852 = vpack.c.b16 %v4844, %v4843
      %4861 = vmatpush.bf16.msra.mxu0 %v4852
      %4862 = vmatpush.bf16.msra.mxu0 %v4851
      %4863 = vmatpush.bf16.msra.mxu0 %v4850
      %4864 = vmatpush.bf16.msra.mxu0 %v4849
      %4865 = vmatpush.bf16.msra.mxu0 %v4848
      %4866 = vmatpush.bf16.msra.mxu0 %v4847
      %4867 = vmatpush.bf16.msra.mxu0 %v4846
      %4868 = vmatpush.bf16.msra.mxu0 %v4845
      %4869 = vmatmul.bf16.gmra.mxu0 %v4531
      %v4870 = vpop.f32.mrf.mxu0
      %v4871 = vadd.f32 0.0, %v4870
      %v4872 = vpop.f32.mrf.mxu0
      %v4873 = vadd.f32 0.0, %v4872
      %4874 = vmatmul.bf16.gmra.mxu0 %v4533
      %v4875 = vpop.f32.mrf.mxu0
      %v4876 = vadd.f32 0.0, %v4875
      %v4877 = vpop.f32.mrf.mxu0
      %v4878 = vadd.f32 0.0, %v4877
      %4879 = vmatmul.bf16.gmra.mxu0 %v4535
      %v4880 = vpop.f32.mrf.mxu0
      %v4881 = vadd.f32 0.0, %v4880
      %v4882 = vpop.f32.mrf.mxu0
      %v4883 = vadd.f32 0.0, %v4882
      %4884 = vmatmul.bf16.gmra.mxu0 %v4537
      %v4885 = vpop.f32.mrf.mxu0
      %v4886 = vadd.f32 0.0, %v4885
      %v4887 = vpop.f32.mrf.mxu0
      %v4888 = vadd.f32 0.0, %v4887
      %4889 = vmatmul.bf16.gmra.mxu0 %v4539
      %v4890 = vpop.f32.mrf.mxu0
      %v4891 = vadd.f32 0.0, %v4890
      %v4892 = vpop.f32.mrf.mxu0
      %v4893 = vadd.f32 0.0, %v4892
      %4894 = vmatmul.bf16.gmra.mxu0 %v4541
      %v4895 = vpop.f32.mrf.mxu0
      %v4896 = vadd.f32 0.0, %v4895
      %v4897 = vpop.f32.mrf.mxu0
      %v4898 = vadd.f32 0.0, %v4897
      %4899 = vmatmul.bf16.gmra.mxu0 %v4543
      %v4900 = vpop.f32.mrf.mxu0
      %v4901 = vadd.f32 0.0, %v4900
      %v4902 = vpop.f32.mrf.mxu0
      %v4903 = vadd.f32 0.0, %v4902
      %4904 = vmatmul.bf16.gmra.mxu0 %v4545
      %v4905 = vpop.f32.mrf.mxu0
      %v4906 = vadd.f32 0.0, %v4905
      %v4907 = vpop.f32.mrf.mxu0
      %v4908 = vadd.f32 0.0, %v4907
      %4909 = vmatmul.bf16.gmra.mxu0 %v4547
      %v4910 = vpop.f32.mrf.mxu0
      %v4911 = vadd.f32 0.0, %v4910
      %v4912 = vpop.f32.mrf.mxu0
      %v4913 = vadd.f32 0.0, %v4912
      %4914 = vmatmul.bf16.gmra.mxu0 %v4549
      %v4915 = vpop.f32.mrf.mxu0
      %v4916 = vadd.f32 0.0, %v4915
      %v4917 = vpop.f32.mrf.mxu0
      %v4918 = vadd.f32 0.0, %v4917
      %4919 = vmatmul.bf16.gmra.mxu0 %v4551
      %v4920 = vpop.f32.mrf.mxu0
      %v4921 = vadd.f32 0.0, %v4920
      %v4922 = vpop.f32.mrf.mxu0
      %v4923 = vadd.f32 0.0, %v4922
      %4924 = vmatmul.bf16.gmra.mxu0 %v4553
      %v4925 = vpop.f32.mrf.mxu0
      %v4926 = vadd.f32 0.0, %v4925
      %v4927 = vpop.f32.mrf.mxu0
      %v4928 = vadd.f32 0.0, %v4927
      %4929 = vmatmul.bf16.gmra.mxu0 %v4555
      %v4930 = vpop.f32.mrf.mxu0
      %v4931 = vadd.f32 0.0, %v4930
      %v4932 = vpop.f32.mrf.mxu0
      %v4933 = vadd.f32 0.0, %v4932
      %4934 = vmatmul.bf16.gmra.mxu0 %v4557
      %v4935 = vpop.f32.mrf.mxu0
      %v4936 = vadd.f32 0.0, %v4935
      %v4937 = vpop.f32.mrf.mxu0
      %v4938 = vadd.f32 0.0, %v4937
      %4939 = vmatmul.bf16.gmra.mxu0 %v4559
      %v4940 = vpop.f32.mrf.mxu0
      %v4941 = vadd.f32 0.0, %v4940
      %v4942 = vpop.f32.mrf.mxu0
      %v4943 = vadd.f32 0.0, %v4942
      %4944 = vmatmul.bf16.gmra.mxu0 %v4561
      %v4945 = vpop.f32.mrf.mxu0
      %v4946 = vadd.f32 0.0, %v4945
      %v4947 = vpop.f32.mrf.mxu0
      %v4948 = vadd.f32 0.0, %v4947
      %4949 = vmatmul.bf16.gmra.mxu0 %v4563
      %v4950 = vpop.f32.mrf.mxu0
      %v4951 = vadd.f32 0.0, %v4950
      %v4952 = vpop.f32.mrf.mxu0
      %v4953 = vadd.f32 0.0, %v4952
      %4954 = vmatmul.bf16.gmra.mxu0 %v4565
      %v4955 = vpop.f32.mrf.mxu0
      %v4956 = vadd.f32 0.0, %v4955
      %v4957 = vpop.f32.mrf.mxu0
      %v4958 = vadd.f32 0.0, %v4957
      %4959 = vmatmul.bf16.gmra.mxu0 %v4567
      %v4960 = vpop.f32.mrf.mxu0
      %v4961 = vadd.f32 0.0, %v4960
      %v4962 = vpop.f32.mrf.mxu0
      %v4963 = vadd.f32 0.0, %v4962
      %4964 = vmatmul.bf16.gmra.mxu0 %v4810
      %v4965 = vpop.f32.mrf.mxu0
      %v4966 = vadd.f32 0.0, %v4965
      %v4967 = vpop.f32.mrf.mxu0
      %v4968 = vadd.f32 0.0, %v4967
      %4969 = vmatmul.bf16.gmra.mxu0 %v4809
      %v4970 = vpop.f32.mrf.mxu0
      %v4971 = vadd.f32 0.0, %v4970
      %v4972 = vpop.f32.mrf.mxu0
      %4973 = vdwg.mxu0
      %v4974 = vadd.f32 %v4750, %v4871
      %v4975 = vadd.f32 %v4751, %v4873
      %v4976 = vadd.f32 %v4752, %v4876
      %v4977 = vadd.f32 %v4753, %v4878
      %v4978 = vadd.f32 %v4754, %v4881
      %v4979 = vadd.f32 %v4755, %v4883
      %v4980 = vadd.f32 %v4756, %v4886
      %v4981 = vadd.f32 %v4757, %v4888
      %v4982 = vadd.f32 %v4758, %v4891
      %v4983 = vadd.f32 %v4759, %v4893
      %v4984 = vadd.f32 %v4760, %v4896
      %v4985 = vadd.f32 %v4761, %v4898
      %v4986 = vadd.f32 %v4762, %v4901
      %v4987 = vadd.f32 %v4763, %v4903
      %v4988 = vadd.f32 %v4764, %v4906
      %v4989 = vadd.f32 %v4765, %v4908
      %v4990 = vadd.f32 %v4766, %v4911
      %v4991 = vadd.f32 %v4767, %v4913
      %v4992 = vadd.f32 %v4768, %v4916
      %v4993 = vadd.f32 %v4769, %v4918
      %v4994 = vadd.f32 %v4770, %v4921
      %v4995 = vadd.f32 %v4771, %v4923
      %v4996 = vadd.f32 %v4772, %v4926
      %v4997 = vadd.f32 %v4773, %v4928
      %v4998 = vadd.f32 %v4774, %v4931
      %v4999 = vadd.f32 %v4775, %v4933
      %v5000 = vadd.f32 %v4776, %v4936
      %v5001 = vadd.f32 %v4777, %v4938
      %v5002 = vadd.f32 %v4778, %v4941
      %v5003 = vadd.f32 %v4779, %v4943
      %v5004 = vadd.f32 %v4780, %v4946
      %v5005 = vadd.f32 %v4781, %v4948
      %v5006 = vadd.f32 %v4782, %v4951
      %v5007 = vadd.f32 %v4783, %v4953
      %v5008 = vadd.f32 %v4784, %v4956
      %v5009 = vadd.f32 %v4785, %v4958
      %v5010 = vadd.f32 %v4786, %v4961
      %v5011 = vadd.f32 %v4787, %v4963
      %v5012 = vadd.f32 %v4788, %v4966
      %v5013 = vadd.f32 %v4789, %v4968
      %v5014 = vadd.f32 %v4790, %v4971
      %s5015 = scalar_lea.vmem %s5, 256
      %v5016 = vld [vmem:[%s5015] sm:$0xf]
      %v5017 = vld [vmem:[%s5015 + $0x4] sm:$0xf]
      %v5018 = vld [vmem:[%s5015 + $0x8] sm:$0xf]
      %v5019 = vld [vmem:[%s5015 + $0xc] sm:$0xf]
      %v5020 = vld [vmem:[%s5015 + $0x10] sm:$0xf]
      %v5021 = vld [vmem:[%s5015 + $0x14] sm:$0xf]
      %v5022 = vld [vmem:[%s5015 + $0x18] sm:$0xf]
      %v5023 = vld [vmem:[%s5015 + $0x1c] sm:$0xf]
      %v5024 = vld [vmem:[%s5015 + $0x20] sm:$0xf]
      %v5025 = vld [vmem:[%s5015 + $0x24] sm:$0xf]
      %v5026 = vld [vmem:[%s5015 + $0x28] sm:$0xf]
      %v5027 = vld [vmem:[%s5015 + $0x2c] sm:$0xf]
      %v5028 = vld [vmem:[%s5015 + $0x30] sm:$0xf]
      %v5029 = vld [vmem:[%s5015 + $0x34] sm:$0xf]
      %v5030 = vld [vmem:[%s5015 + $0x38] sm:$0xf]
      %v5031 = vld [vmem:[%s5015 + $0x3c] sm:$0xf]
      %v5032 = vrot.slane %v4012, 1
      %v5033 = vrot.slane %v4008, 2
      %v5034 = vor.u32 %v5032, %v5033
      %v5035 = vrot.slane %v4020, 1
      %v5036 = vrot.slane %v4016, 2
      %v5037 = vor.u32 %v5035, %v5036
      %v5038 = vsel %vm1819, %v5034, %v5037
      %v5039 = vrot.slane %v4028, 1
      %v5040 = vrot.slane %v4024, 2
      %v5041 = vor.u32 %v5039, %v5040
      %v5042 = vsel %vm1819, %v5037, %v5041
      %v5043 = vrot.slane %v4036, 1
      %v5044 = vrot.slane %v4032, 2
      %v5045 = vor.u32 %v5043, %v5044
      %v5046 = vsel %vm1819, %v5041, %v5045
      %v5047 = vrot.slane %v4044, 1
      %v5048 = vrot.slane %v4040, 2
      %v5049 = vor.u32 %v5047, %v5048
      %v5050 = vsel %vm1819, %v5045, %v5049
      %v5051 = vrot.slane %v4052, 1
      %v5052 = vrot.slane %v4048, 2
      %v5053 = vor.u32 %v5051, %v5052
      %v5054 = vsel %vm1819, %v5049, %v5053
      %v5055 = vrot.slane %v4060, 1
      %v5056 = vrot.slane %v4056, 2
      %v5057 = vor.u32 %v5055, %v5056
      %v5058 = vsel %vm1819, %v5053, %v5057
      %v5059 = vrot.slane %v4068, 1
      %v5060 = vrot.slane %v4064, 2
      %v5061 = vor.u32 %v5059, %v5060
      %v5062 = vsel %vm1819, %v5057, %v5061
      %v5063 = vrot.slane %v4076, 1
      %v5064 = vrot.slane %v4072, 2
      %v5065 = vor.u32 %v5063, %v5064
      %v5066 = vsel %vm1819, %v5061, %v5065
      %v5067 = vrot.slane %v4084, 1
      %v5068 = vrot.slane %v4080, 2
      %v5069 = vor.u32 %v5067, %v5068
      %v5070 = vsel %vm1819, %v5065, %v5069
      %v5071 = vrot.slane %v4092, 1
      %v5072 = vrot.slane %v4088, 2
      %v5073 = vor.u32 %v5071, %v5072
      %v5074 = vsel %vm1819, %v5069, %v5073
      %v5075 = vrot.slane %v4100, 1
      %v5076 = vrot.slane %v4096, 2
      %v5077 = vor.u32 %v5075, %v5076
      %v5078 = vsel %vm1819, %v5073, %v5077
      %v5079 = vrot.slane %v4108, 1
      %v5080 = vrot.slane %v4104, 2
      %v5081 = vor.u32 %v5079, %v5080
      %v5082 = vsel %vm1819, %v5077, %v5081
      %v5083 = vrot.slane %v4116, 1
      %v5084 = vrot.slane %v4112, 2
      %v5085 = vor.u32 %v5083, %v5084
      %v5086 = vsel %vm1819, %v5081, %v5085
      %v5087 = vrot.slane %v4124, 1
      %v5088 = vrot.slane %v4120, 2
      %v5089 = vor.u32 %v5087, %v5088
      %v5090 = vsel %vm1819, %v5085, %v5089
      %v5091 = vrot.slane %v4132, 1
      %v5092 = vrot.slane %v4128, 2
      %v5093 = vor.u32 %v5091, %v5092
      %v5094 = vsel %vm1819, %v5089, %v5093
      %v5095 = vrot.slane %v4140, 1
      %v5096 = vrot.slane %v4136, 2
      %v5097 = vor.u32 %v5095, %v5096
      %v5098 = vsel %vm1819, %v5093, %v5097
      %v5099 = vrot.slane %v4148, 1
      %v5100 = vrot.slane %v4144, 2
      %v5101 = vor.u32 %v5099, %v5100
      %v5102 = vsel %vm1819, %v5097, %v5101
      %v5103 = vrot.slane %v4156, 1
      %v5104 = vrot.slane %v4152, 2
      %v5105 = vor.u32 %v5103, %v5104
      %v5106 = vsel %vm1819, %v5101, %v5105
      %v5107 = vrot.slane %v4164, 1
      %v5108 = vrot.slane %v4160, 2
      %v5109 = vor.u32 %v5107, %v5108
      %v5110 = vsel %vm1819, %v5105, %v5109
      %v5112 = vshrl.u32 %v3973, 16
      %v5114 = vrot.slane %v5112, 1
      %v5115 = vshll.u32 %v3973, 16
      %v5117 = vrot.slane %v5115, 2
      %v5118 = vor.u32 %v5114, %v5117
      %v5119 = vsel %vm1819, %v5109, %v5118
      %v5157 = vunpack.c.l.b16 %v5016
      %v5158 = vunpack.c.l.b16 %v5017
      %v5159 = vunpack.c.l.b16 %v5018
      %v5160 = vunpack.c.l.b16 %v5019
      %v5161 = vunpack.c.l.b16 %v5020
      %v5162 = vunpack.c.l.b16 %v5021
      %v5163 = vunpack.c.l.b16 %v5022
      %v5164 = vunpack.c.l.b16 %v5023
      %v5165 = vunpack.c.l.b16 %v5024
      %v5166 = vunpack.c.l.b16 %v5025
      %v5167 = vunpack.c.l.b16 %v5026
      %v5168 = vunpack.c.l.b16 %v5027
      %v5169 = vunpack.c.l.b16 %v5028
      %v5170 = vunpack.c.l.b16 %v5029
      %v5171 = vunpack.c.l.b16 %v5030
      %v5172 = vunpack.c.l.b16 %v5031
      %v5173 = vpack.c.b16 %v5158, %v5157
      %v5174 = vpack.c.b16 %v5160, %v5159
      %v5175 = vpack.c.b16 %v5162, %v5161
      %v5176 = vpack.c.b16 %v5164, %v5163
      %v5177 = vpack.c.b16 %v5166, %v5165
      %v5178 = vpack.c.b16 %v5168, %v5167
      %v5179 = vpack.c.b16 %v5170, %v5169
      %v5180 = vpack.c.b16 %v5172, %v5171
      %5189 = vmatpush.bf16.msra.mxu0 %v5180
      %5190 = vmatpush.bf16.msra.mxu0 %v5179
      %5191 = vmatpush.bf16.msra.mxu0 %v5178
      %5192 = vmatpush.bf16.msra.mxu0 %v5177
      %5193 = vmatpush.bf16.msra.mxu0 %v5176
      %5194 = vmatpush.bf16.msra.mxu0 %v5175
      %5195 = vmatpush.bf16.msra.mxu0 %v5174
      %5196 = vmatpush.bf16.msra.mxu0 %v5173
      %5197 = vmatmul.bf16.gmra.mxu0 %v5038
      %v5198 = vpop.f32.mrf.mxu0
      %v5199 = vadd.f32 0.0, %v5198
      %v5200 = vpop.f32.mrf.mxu0
      %v5201 = vadd.f32 0.0, %v5200
      %5202 = vmatmul.bf16.gmra.mxu0 %v5042
      %v5203 = vpop.f32.mrf.mxu0
      %v5204 = vadd.f32 0.0, %v5203
      %v5205 = vpop.f32.mrf.mxu0
      %v5206 = vadd.f32 0.0, %v5205
      %5207 = vmatmul.bf16.gmra.mxu0 %v5046
      %v5208 = vpop.f32.mrf.mxu0
      %v5209 = vadd.f32 0.0, %v5208
      %v5210 = vpop.f32.mrf.mxu0
      %v5211 = vadd.f32 0.0, %v5210
      %5212 = vmatmul.bf16.gmra.mxu0 %v5050
      %v5213 = vpop.f32.mrf.mxu0
      %v5214 = vadd.f32 0.0, %v5213
      %v5215 = vpop.f32.mrf.mxu0
      %v5216 = vadd.f32 0.0, %v5215
      %5217 = vmatmul.bf16.gmra.mxu0 %v5054
      %v5218 = vpop.f32.mrf.mxu0
      %v5219 = vadd.f32 0.0, %v5218
      %v5220 = vpop.f32.mrf.mxu0
      %v5221 = vadd.f32 0.0, %v5220
      %5222 = vmatmul.bf16.gmra.mxu0 %v5058
      %v5223 = vpop.f32.mrf.mxu0
      %v5224 = vadd.f32 0.0, %v5223
      %v5225 = vpop.f32.mrf.mxu0
      %v5226 = vadd.f32 0.0, %v5225
      %5227 = vmatmul.bf16.gmra.mxu0 %v5062
      %v5228 = vpop.f32.mrf.mxu0
      %v5229 = vadd.f32 0.0, %v5228
      %v5230 = vpop.f32.mrf.mxu0
      %v5231 = vadd.f32 0.0, %v5230
      %5232 = vmatmul.bf16.gmra.mxu0 %v5066
      %v5233 = vpop.f32.mrf.mxu0
      %v5234 = vadd.f32 0.0, %v5233
      %v5235 = vpop.f32.mrf.mxu0
      %v5236 = vadd.f32 0.0, %v5235
      %5237 = vmatmul.bf16.gmra.mxu0 %v5070
      %v5238 = vpop.f32.mrf.mxu0
      %v5239 = vadd.f32 0.0, %v5238
      %v5240 = vpop.f32.mrf.mxu0
      %v5241 = vadd.f32 0.0, %v5240
      %5242 = vmatmul.bf16.gmra.mxu0 %v5074
      %v5243 = vpop.f32.mrf.mxu0
      %v5244 = vadd.f32 0.0, %v5243
      %v5245 = vpop.f32.mrf.mxu0
      %v5246 = vadd.f32 0.0, %v5245
      %5247 = vmatmul.bf16.gmra.mxu0 %v5078
      %v5248 = vpop.f32.mrf.mxu0
      %v5249 = vadd.f32 0.0, %v5248
      %v5250 = vpop.f32.mrf.mxu0
      %v5251 = vadd.f32 0.0, %v5250
      %5252 = vmatmul.bf16.gmra.mxu0 %v5082
      %v5253 = vpop.f32.mrf.mxu0
      %v5254 = vadd.f32 0.0, %v5253
      %v5255 = vpop.f32.mrf.mxu0
      %v5256 = vadd.f32 0.0, %v5255
      %5257 = vmatmul.bf16.gmra.mxu0 %v5086
      %v5258 = vpop.f32.mrf.mxu0
      %v5259 = vadd.f32 0.0, %v5258
      %v5260 = vpop.f32.mrf.mxu0
      %v5261 = vadd.f32 0.0, %v5260
      %5262 = vmatmul.bf16.gmra.mxu0 %v5090
      %v5263 = vpop.f32.mrf.mxu0
      %v5264 = vadd.f32 0.0, %v5263
      %v5265 = vpop.f32.mrf.mxu0
      %v5266 = vadd.f32 0.0, %v5265
      %5267 = vmatmul.bf16.gmra.mxu0 %v5094
      %v5268 = vpop.f32.mrf.mxu0
      %v5269 = vadd.f32 0.0, %v5268
      %v5270 = vpop.f32.mrf.mxu0
      %v5271 = vadd.f32 0.0, %v5270
      %5272 = vmatmul.bf16.gmra.mxu0 %v5098
      %v5273 = vpop.f32.mrf.mxu0
      %v5274 = vadd.f32 0.0, %v5273
      %v5275 = vpop.f32.mrf.mxu0
      %v5276 = vadd.f32 0.0, %v5275
      %5277 = vmatmul.bf16.gmra.mxu0 %v5102
      %v5278 = vpop.f32.mrf.mxu0
      %v5279 = vadd.f32 0.0, %v5278
      %v5280 = vpop.f32.mrf.mxu0
      %v5281 = vadd.f32 0.0, %v5280
      %5282 = vmatmul.bf16.gmra.mxu0 %v5106
      %v5283 = vpop.f32.mrf.mxu0
      %v5284 = vadd.f32 0.0, %v5283
      %v5285 = vpop.f32.mrf.mxu0
      %v5286 = vadd.f32 0.0, %v5285
      %5287 = vmatmul.bf16.gmra.mxu0 %v5110
      %v5288 = vpop.f32.mrf.mxu0
      %v5289 = vadd.f32 0.0, %v5288
      %v5290 = vpop.f32.mrf.mxu0
      %v5291 = vadd.f32 0.0, %v5290
      %5292 = vmatmul.bf16.gmra.mxu0 %v5119
      %v5293 = vpop.f32.mrf.mxu0
      %v5294 = vadd.f32 0.0, %v5293
      %v5295 = vpop.f32.mrf.mxu0
      %v5296 = vadd.f32 0.0, %v5295
      %5297 = vmatmul.bf16.gmra.mxu0 %v5118
      %v5298 = vpop.f32.mrf.mxu0
      %v5299 = vadd.f32 0.0, %v5298
      %v5300 = vpop.f32.mrf.mxu0
      %5301 = vdwg.mxu0
      %v5302 = vadd.f32 %v4974, %v5199
      %v5303 = vadd.f32 %v4975, %v5201
      %v5304 = vadd.f32 %v4976, %v5204
      %v5305 = vadd.f32 %v4977, %v5206
      %v5306 = vadd.f32 %v4978, %v5209
      %v5307 = vadd.f32 %v4979, %v5211
      %v5308 = vadd.f32 %v4980, %v5214
      %v5309 = vadd.f32 %v4981, %v5216
      %v5310 = vadd.f32 %v4982, %v5219
      %v5311 = vadd.f32 %v4983, %v5221
      %v5312 = vadd.f32 %v4984, %v5224
      %v5313 = vadd.f32 %v4985, %v5226
      %v5314 = vadd.f32 %v4986, %v5229
      %v5315 = vadd.f32 %v4987, %v5231
      %v5316 = vadd.f32 %v4988, %v5234
      %v5317 = vadd.f32 %v4989, %v5236
      %v5318 = vadd.f32 %v4990, %v5239
      %v5319 = vadd.f32 %v4991, %v5241
      %v5320 = vadd.f32 %v4992, %v5244
      %v5321 = vadd.f32 %v4993, %v5246
      %v5322 = vadd.f32 %v4994, %v5249
      %v5323 = vadd.f32 %v4995, %v5251
      %v5324 = vadd.f32 %v4996, %v5254
      %v5325 = vadd.f32 %v4997, %v5256
      %v5326 = vadd.f32 %v4998, %v5259
      %v5327 = vadd.f32 %v4999, %v5261
      %v5328 = vadd.f32 %v5000, %v5264
      %v5329 = vadd.f32 %v5001, %v5266
      %v5330 = vadd.f32 %v5002, %v5269
      %v5331 = vadd.f32 %v5003, %v5271
      %v5332 = vadd.f32 %v5004, %v5274
      %v5333 = vadd.f32 %v5005, %v5276
      %v5334 = vadd.f32 %v5006, %v5279
      %v5335 = vadd.f32 %v5007, %v5281
      %v5336 = vadd.f32 %v5008, %v5284
      %v5337 = vadd.f32 %v5009, %v5286
      %v5338 = vadd.f32 %v5010, %v5289
      %v5339 = vadd.f32 %v5011, %v5291
      %v5340 = vadd.f32 %v5012, %v5294
      %v5341 = vadd.f32 %v5013, %v5296
      %v5342 = vadd.f32 %v5014, %v5299
      %s5343 = scalar_lea.vmem %s5, 320
      %v5344 = vld [vmem:[%s5343] sm:$0xf]
      %v5345 = vld [vmem:[%s5343 + $0x4] sm:$0xf]
      %v5346 = vld [vmem:[%s5343 + $0x8] sm:$0xf]
      %v5347 = vld [vmem:[%s5343 + $0xc] sm:$0xf]
      %v5348 = vld [vmem:[%s5343 + $0x10] sm:$0xf]
      %v5349 = vld [vmem:[%s5343 + $0x14] sm:$0xf]
      %v5350 = vld [vmem:[%s5343 + $0x18] sm:$0xf]
      %v5351 = vld [vmem:[%s5343 + $0x1c] sm:$0xf]
      %v5352 = vld [vmem:[%s5343 + $0x20] sm:$0xf]
      %v5353 = vld [vmem:[%s5343 + $0x24] sm:$0xf]
      %v5354 = vld [vmem:[%s5343 + $0x28] sm:$0xf]
      %v5355 = vld [vmem:[%s5343 + $0x2c] sm:$0xf]
      %v5356 = vld [vmem:[%s5343 + $0x30] sm:$0xf]
      %v5357 = vld [vmem:[%s5343 + $0x34] sm:$0xf]
      %v5358 = vld [vmem:[%s5343 + $0x38] sm:$0xf]
      %v5359 = vld [vmem:[%s5343 + $0x3c] sm:$0xf]
      %v5360 = vrot.slane %v3972, 2
      %v5361 = vrot.slane %v3779, 2
      %v5362 = vsel %vm2148, %v5360, %v5361
      %v5363 = vrot.slane %v3788, 2
      %v5364 = vsel %vm2148, %v5361, %v5363
      %v5365 = vrot.slane %v3797, 2
      %v5366 = vsel %vm2148, %v5363, %v5365
      %v5367 = vrot.slane %v3806, 2
      %v5368 = vsel %vm2148, %v5365, %v5367
      %v5369 = vrot.slane %v3815, 2
      %v5370 = vsel %vm2148, %v5367, %v5369
      %v5371 = vrot.slane %v3824, 2
      %v5372 = vsel %vm2148, %v5369, %v5371
      %v5373 = vrot.slane %v3833, 2
      %v5374 = vsel %vm2148, %v5371, %v5373
      %v5375 = vrot.slane %v3842, 2
      %v5376 = vsel %vm2148, %v5373, %v5375
      %v5377 = vrot.slane %v3851, 2
      %v5378 = vsel %vm2148, %v5375, %v5377
      %v5379 = vrot.slane %v3860, 2
      %v5380 = vsel %vm2148, %v5377, %v5379
      %v5381 = vrot.slane %v3869, 2
      %v5382 = vsel %vm2148, %v5379, %v5381
      %v5383 = vrot.slane %v3878, 2
      %v5384 = vsel %vm2148, %v5381, %v5383
      %v5385 = vrot.slane %v3887, 2
      %v5386 = vsel %vm2148, %v5383, %v5385
      %v5387 = vrot.slane %v3896, 2
      %v5388 = vsel %vm2148, %v5385, %v5387
      %v5389 = vrot.slane %v3905, 2
      %v5390 = vsel %vm2148, %v5387, %v5389
      %v5391 = vrot.slane %v3914, 2
      %v5392 = vsel %vm2148, %v5389, %v5391
      %v5393 = vrot.slane %v3923, 2
      %v5394 = vsel %vm2148, %v5391, %v5393
      %v5395 = vrot.slane %v3932, 2
      %v5396 = vsel %vm2148, %v5393, %v5395
      %v5397 = vrot.slane %v3941, 2
      %v5398 = vsel %vm2148, %v5395, %v5397
      %v5399 = vrot.slane %v3973, 2
      %v5400 = vsel %vm2148, %v5397, %v5399
      %v5438 = vunpack.c.l.b16 %v5344
      %v5439 = vunpack.c.l.b16 %v5345
      %v5440 = vunpack.c.l.b16 %v5346
      %v5441 = vunpack.c.l.b16 %v5347
      %v5442 = vunpack.c.l.b16 %v5348
      %v5443 = vunpack.c.l.b16 %v5349
      %v5444 = vunpack.c.l.b16 %v5350
      %v5445 = vunpack.c.l.b16 %v5351
      %v5446 = vunpack.c.l.b16 %v5352
      %v5447 = vunpack.c.l.b16 %v5353
      %v5448 = vunpack.c.l.b16 %v5354
      %v5449 = vunpack.c.l.b16 %v5355
      %v5450 = vunpack.c.l.b16 %v5356
      %v5451 = vunpack.c.l.b16 %v5357
      %v5452 = vunpack.c.l.b16 %v5358
      %v5453 = vunpack.c.l.b16 %v5359
      %v5454 = vpack.c.b16 %v5439, %v5438
      %v5455 = vpack.c.b16 %v5441, %v5440
      %v5456 = vpack.c.b16 %v5443, %v5442
      %v5457 = vpack.c.b16 %v5445, %v5444
      %v5458 = vpack.c.b16 %v5447, %v5446
      %v5459 = vpack.c.b16 %v5449, %v5448
      %v5460 = vpack.c.b16 %v5451, %v5450
      %v5461 = vpack.c.b16 %v5453, %v5452
      %5470 = vmatpush.bf16.msra.mxu0 %v5461
      %5471 = vmatpush.bf16.msra.mxu0 %v5460
      %5472 = vmatpush.bf16.msra.mxu0 %v5459
      %5473 = vmatpush.bf16.msra.mxu0 %v5458
      %5474 = vmatpush.bf16.msra.mxu0 %v5457
      %5475 = vmatpush.bf16.msra.mxu0 %v5456
      %5476 = vmatpush.bf16.msra.mxu0 %v5455
      %5477 = vmatpush.bf16.msra.mxu0 %v5454
      %5478 = vmatmul.bf16.gmra.mxu0 %v5362
      %v5479 = vpop.f32.mrf.mxu0
      %v5480 = vadd.f32 0.0, %v5479
      %v5481 = vpop.f32.mrf.mxu0
      %v5482 = vadd.f32 0.0, %v5481
      %5483 = vmatmul.bf16.gmra.mxu0 %v5364
      %v5484 = vpop.f32.mrf.mxu0
      %v5485 = vadd.f32 0.0, %v5484
      %v5486 = vpop.f32.mrf.mxu0
      %v5487 = vadd.f32 0.0, %v5486
      %5488 = vmatmul.bf16.gmra.mxu0 %v5366
      %v5489 = vpop.f32.mrf.mxu0
      %v5490 = vadd.f32 0.0, %v5489
      %v5491 = vpop.f32.mrf.mxu0
      %v5492 = vadd.f32 0.0, %v5491
      %5493 = vmatmul.bf16.gmra.mxu0 %v5368
      %v5494 = vpop.f32.mrf.mxu0
      %v5495 = vadd.f32 0.0, %v5494
      %v5496 = vpop.f32.mrf.mxu0
      %v5497 = vadd.f32 0.0, %v5496
      %5498 = vmatmul.bf16.gmra.mxu0 %v5370
      %v5499 = vpop.f32.mrf.mxu0
      %v5500 = vadd.f32 0.0, %v5499
      %v5501 = vpop.f32.mrf.mxu0
      %v5502 = vadd.f32 0.0, %v5501
      %5503 = vmatmul.bf16.gmra.mxu0 %v5372
      %v5504 = vpop.f32.mrf.mxu0
      %v5505 = vadd.f32 0.0, %v5504
      %v5506 = vpop.f32.mrf.mxu0
      %v5507 = vadd.f32 0.0, %v5506
      %5508 = vmatmul.bf16.gmra.mxu0 %v5374
      %v5509 = vpop.f32.mrf.mxu0
      %v5510 = vadd.f32 0.0, %v5509
      %v5511 = vpop.f32.mrf.mxu0
      %v5512 = vadd.f32 0.0, %v5511
      %5513 = vmatmul.bf16.gmra.mxu0 %v5376
      %v5514 = vpop.f32.mrf.mxu0
      %v5515 = vadd.f32 0.0, %v5514
      %v5516 = vpop.f32.mrf.mxu0
      %v5517 = vadd.f32 0.0, %v5516
      %5518 = vmatmul.bf16.gmra.mxu0 %v5378
      %v5519 = vpop.f32.mrf.mxu0
      %v5520 = vadd.f32 0.0, %v5519
      %v5521 = vpop.f32.mrf.mxu0
      %v5522 = vadd.f32 0.0, %v5521
      %5523 = vmatmul.bf16.gmra.mxu0 %v5380
      %v5524 = vpop.f32.mrf.mxu0
      %v5525 = vadd.f32 0.0, %v5524
      %v5526 = vpop.f32.mrf.mxu0
      %v5527 = vadd.f32 0.0, %v5526
      %5528 = vmatmul.bf16.gmra.mxu0 %v5382
      %v5529 = vpop.f32.mrf.mxu0
      %v5530 = vadd.f32 0.0, %v5529
      %v5531 = vpop.f32.mrf.mxu0
      %v5532 = vadd.f32 0.0, %v5531
      %5533 = vmatmul.bf16.gmra.mxu0 %v5384
      %v5534 = vpop.f32.mrf.mxu0
      %v5535 = vadd.f32 0.0, %v5534
      %v5536 = vpop.f32.mrf.mxu0
      %v5537 = vadd.f32 0.0, %v5536
      %5538 = vmatmul.bf16.gmra.mxu0 %v5386
      %v5539 = vpop.f32.mrf.mxu0
      %v5540 = vadd.f32 0.0, %v5539
      %v5541 = vpop.f32.mrf.mxu0
      %v5542 = vadd.f32 0.0, %v5541
      %5543 = vmatmul.bf16.gmra.mxu0 %v5388
      %v5544 = vpop.f32.mrf.mxu0
      %v5545 = vadd.f32 0.0, %v5544
      %v5546 = vpop.f32.mrf.mxu0
      %v5547 = vadd.f32 0.0, %v5546
      %5548 = vmatmul.bf16.gmra.mxu0 %v5390
      %v5549 = vpop.f32.mrf.mxu0
      %v5550 = vadd.f32 0.0, %v5549
      %v5551 = vpop.f32.mrf.mxu0
      %v5552 = vadd.f32 0.0, %v5551
      %5553 = vmatmul.bf16.gmra.mxu0 %v5392
      %v5554 = vpop.f32.mrf.mxu0
      %v5555 = vadd.f32 0.0, %v5554
      %v5556 = vpop.f32.mrf.mxu0
      %v5557 = vadd.f32 0.0, %v5556
      %5558 = vmatmul.bf16.gmra.mxu0 %v5394
      %v5559 = vpop.f32.mrf.mxu0
      %v5560 = vadd.f32 0.0, %v5559
      %v5561 = vpop.f32.mrf.mxu0
      %v5562 = vadd.f32 0.0, %v5561
      %5563 = vmatmul.bf16.gmra.mxu0 %v5396
      %v5564 = vpop.f32.mrf.mxu0
      %v5565 = vadd.f32 0.0, %v5564
      %v5566 = vpop.f32.mrf.mxu0
      %v5567 = vadd.f32 0.0, %v5566
      %5568 = vmatmul.bf16.gmra.mxu0 %v5398
      %v5569 = vpop.f32.mrf.mxu0
      %v5570 = vadd.f32 0.0, %v5569
      %v5571 = vpop.f32.mrf.mxu0
      %v5572 = vadd.f32 0.0, %v5571
      %5573 = vmatmul.bf16.gmra.mxu0 %v5400
      %v5574 = vpop.f32.mrf.mxu0
      %v5575 = vadd.f32 0.0, %v5574
      %v5576 = vpop.f32.mrf.mxu0
      %v5577 = vadd.f32 0.0, %v5576
      %5578 = vmatmul.bf16.gmra.mxu0 %v5399
      %v5579 = vpop.f32.mrf.mxu0
      %v5580 = vadd.f32 0.0, %v5579
      %v5581 = vpop.f32.mrf.mxu0
      %5582 = vdwg.mxu0
      %v5583 = vadd.f32 %v5302, %v5480
      %v5584 = vadd.f32 %v5303, %v5482
      %v5585 = vadd.f32 %v5304, %v5485
      %v5586 = vadd.f32 %v5305, %v5487
      %v5587 = vadd.f32 %v5306, %v5490
      %v5588 = vadd.f32 %v5307, %v5492
      %v5589 = vadd.f32 %v5308, %v5495
      %v5590 = vadd.f32 %v5309, %v5497
      %v5591 = vadd.f32 %v5310, %v5500
      %v5592 = vadd.f32 %v5311, %v5502
      %v5593 = vadd.f32 %v5312, %v5505
      %v5594 = vadd.f32 %v5313, %v5507
      %v5595 = vadd.f32 %v5314, %v5510
      %v5596 = vadd.f32 %v5315, %v5512
      %v5597 = vadd.f32 %v5316, %v5515
      %v5598 = vadd.f32 %v5317, %v5517
      %v5599 = vadd.f32 %v5318, %v5520
      %v5600 = vadd.f32 %v5319, %v5522
      %v5601 = vadd.f32 %v5320, %v5525
      %v5602 = vadd.f32 %v5321, %v5527
      %v5603 = vadd.f32 %v5322, %v5530
      %v5604 = vadd.f32 %v5323, %v5532
      %v5605 = vadd.f32 %v5324, %v5535
      %v5606 = vadd.f32 %v5325, %v5537
      %v5607 = vadd.f32 %v5326, %v5540
      %v5608 = vadd.f32 %v5327, %v5542
      %v5609 = vadd.f32 %v5328, %v5545
      %v5610 = vadd.f32 %v5329, %v5547
      %v5611 = vadd.f32 %v5330, %v5550
      %v5612 = vadd.f32 %v5331, %v5552
      %v5613 = vadd.f32 %v5332, %v5555
      %v5614 = vadd.f32 %v5333, %v5557
      %v5615 = vadd.f32 %v5334, %v5560
      %v5616 = vadd.f32 %v5335, %v5562
      %v5617 = vadd.f32 %v5336, %v5565
      %v5618 = vadd.f32 %v5337, %v5567
      %v5619 = vadd.f32 %v5338, %v5570
      %v5620 = vadd.f32 %v5339, %v5572
      %v5621 = vadd.f32 %v5340, %v5575
      %v5622 = vadd.f32 %v5341, %v5577
      %v5623 = vadd.f32 %v5342, %v5580
      %s5624 = scalar_lea.vmem %s5, 384
      %v5625 = vld [vmem:[%s5624] sm:$0xf]
      %v5626 = vld [vmem:[%s5624 + $0x4] sm:$0xf]
      %v5627 = vld [vmem:[%s5624 + $0x8] sm:$0xf]
      %v5628 = vld [vmem:[%s5624 + $0xc] sm:$0xf]
      %v5629 = vld [vmem:[%s5624 + $0x10] sm:$0xf]
      %v5630 = vld [vmem:[%s5624 + $0x14] sm:$0xf]
      %v5631 = vld [vmem:[%s5624 + $0x18] sm:$0xf]
      %v5632 = vld [vmem:[%s5624 + $0x1c] sm:$0xf]
      %v5633 = vld [vmem:[%s5624 + $0x20] sm:$0xf]
      %v5634 = vld [vmem:[%s5624 + $0x24] sm:$0xf]
      %v5635 = vld [vmem:[%s5624 + $0x28] sm:$0xf]
      %v5636 = vld [vmem:[%s5624 + $0x2c] sm:$0xf]
      %v5637 = vld [vmem:[%s5624 + $0x30] sm:$0xf]
      %v5638 = vld [vmem:[%s5624 + $0x34] sm:$0xf]
      %v5639 = vld [vmem:[%s5624 + $0x38] sm:$0xf]
      %v5640 = vld [vmem:[%s5624 + $0x3c] sm:$0xf]
      %v5641 = vsel %vm2148, %v5399, %v2430
      %v5659 = vunpack.c.l.b16 %v5625
      %v5660 = vunpack.c.l.b16 %v5626
      %v5661 = vunpack.c.l.b16 %v5627
      %v5662 = vunpack.c.l.b16 %v5628
      %v5663 = vunpack.c.l.b16 %v5629
      %v5664 = vunpack.c.l.b16 %v5630
      %v5665 = vunpack.c.l.b16 %v5631
      %v5666 = vunpack.c.l.b16 %v5632
      %v5667 = vunpack.c.l.b16 %v5633
      %v5668 = vunpack.c.l.b16 %v5634
      %v5669 = vunpack.c.l.b16 %v5635
      %v5670 = vunpack.c.l.b16 %v5636
      %v5671 = vunpack.c.l.b16 %v5637
      %v5672 = vunpack.c.l.b16 %v5638
      %v5673 = vunpack.c.l.b16 %v5639
      %v5674 = vunpack.c.l.b16 %v5640
      %v5675 = vpack.c.b16 %v5660, %v5659
      %v5676 = vpack.c.b16 %v5662, %v5661
      %v5677 = vpack.c.b16 %v5664, %v5663
      %v5678 = vpack.c.b16 %v5666, %v5665
      %v5679 = vpack.c.b16 %v5668, %v5667
      %v5680 = vpack.c.b16 %v5670, %v5669
      %v5681 = vpack.c.b16 %v5672, %v5671
      %v5682 = vpack.c.b16 %v5674, %v5673
      %5691 = vmatpush.bf16.msra.mxu0 %v5682
      %5692 = vmatpush.bf16.msra.mxu0 %v5681
      %5693 = vmatpush.bf16.msra.mxu0 %v5680
      %5694 = vmatpush.bf16.msra.mxu0 %v5679
      %5695 = vmatpush.bf16.msra.mxu0 %v5678
      %5696 = vmatpush.bf16.msra.mxu0 %v5677
      %5697 = vmatpush.bf16.msra.mxu0 %v5676
      %5698 = vmatpush.bf16.msra.mxu0 %v5675
      %5699 = vmatmul.bf16.gmra.mxu0 %v5364
      %v5700 = vpop.f32.mrf.mxu0
      %v5701 = vadd.f32 0.0, %v5700
      %v5702 = vpop.f32.mrf.mxu0
      %v5703 = vadd.f32 0.0, %v5702
      %5704 = vmatmul.bf16.gmra.mxu0 %v5366
      %v5705 = vpop.f32.mrf.mxu0
      %v5706 = vadd.f32 0.0, %v5705
      %v5707 = vpop.f32.mrf.mxu0
      %v5708 = vadd.f32 0.0, %v5707
      %5709 = vmatmul.bf16.gmra.mxu0 %v5368
      %v5710 = vpop.f32.mrf.mxu0
      %v5711 = vadd.f32 0.0, %v5710
      %v5712 = vpop.f32.mrf.mxu0
      %v5713 = vadd.f32 0.0, %v5712
      %5714 = vmatmul.bf16.gmra.mxu0 %v5370
      %v5715 = vpop.f32.mrf.mxu0
      %v5716 = vadd.f32 0.0, %v5715
      %v5717 = vpop.f32.mrf.mxu0
      %v5718 = vadd.f32 0.0, %v5717
      %5719 = vmatmul.bf16.gmra.mxu0 %v5372
      %v5720 = vpop.f32.mrf.mxu0
      %v5721 = vadd.f32 0.0, %v5720
      %v5722 = vpop.f32.mrf.mxu0
      %v5723 = vadd.f32 0.0, %v5722
      %5724 = vmatmul.bf16.gmra.mxu0 %v5374
      %v5725 = vpop.f32.mrf.mxu0
      %v5726 = vadd.f32 0.0, %v5725
      %v5727 = vpop.f32.mrf.mxu0
      %v5728 = vadd.f32 0.0, %v5727
      %5729 = vmatmul.bf16.gmra.mxu0 %v5376
      %v5730 = vpop.f32.mrf.mxu0
      %v5731 = vadd.f32 0.0, %v5730
      %v5732 = vpop.f32.mrf.mxu0
      %v5733 = vadd.f32 0.0, %v5732
      %5734 = vmatmul.bf16.gmra.mxu0 %v5378
      %v5735 = vpop.f32.mrf.mxu0
      %v5736 = vadd.f32 0.0, %v5735
      %v5737 = vpop.f32.mrf.mxu0
      %v5738 = vadd.f32 0.0, %v5737
      %5739 = vmatmul.bf16.gmra.mxu0 %v5380
      %v5740 = vpop.f32.mrf.mxu0
      %v5741 = vadd.f32 0.0, %v5740
      %v5742 = vpop.f32.mrf.mxu0
      %v5743 = vadd.f32 0.0, %v5742
      %5744 = vmatmul.bf16.gmra.mxu0 %v5382
      %v5745 = vpop.f32.mrf.mxu0
      %v5746 = vadd.f32 0.0, %v5745
      %v5747 = vpop.f32.mrf.mxu0
      %v5748 = vadd.f32 0.0, %v5747
      %5749 = vmatmul.bf16.gmra.mxu0 %v5384
      %v5750 = vpop.f32.mrf.mxu0
      %v5751 = vadd.f32 0.0, %v5750
      %v5752 = vpop.f32.mrf.mxu0
      %v5753 = vadd.f32 0.0, %v5752
      %5754 = vmatmul.bf16.gmra.mxu0 %v5386
      %v5755 = vpop.f32.mrf.mxu0
      %v5756 = vadd.f32 0.0, %v5755
      %v5757 = vpop.f32.mrf.mxu0
      %v5758 = vadd.f32 0.0, %v5757
      %5759 = vmatmul.bf16.gmra.mxu0 %v5388
      %v5760 = vpop.f32.mrf.mxu0
      %v5761 = vadd.f32 0.0, %v5760
      %v5762 = vpop.f32.mrf.mxu0
      %v5763 = vadd.f32 0.0, %v5762
      %5764 = vmatmul.bf16.gmra.mxu0 %v5390
      %v5765 = vpop.f32.mrf.mxu0
      %v5766 = vadd.f32 0.0, %v5765
      %v5767 = vpop.f32.mrf.mxu0
      %v5768 = vadd.f32 0.0, %v5767
      %5769 = vmatmul.bf16.gmra.mxu0 %v5392
      %v5770 = vpop.f32.mrf.mxu0
      %v5771 = vadd.f32 0.0, %v5770
      %v5772 = vpop.f32.mrf.mxu0
      %v5773 = vadd.f32 0.0, %v5772
      %5774 = vmatmul.bf16.gmra.mxu0 %v5394
      %v5775 = vpop.f32.mrf.mxu0
      %v5776 = vadd.f32 0.0, %v5775
      %v5777 = vpop.f32.mrf.mxu0
      %v5778 = vadd.f32 0.0, %v5777
      %5779 = vmatmul.bf16.gmra.mxu0 %v5396
      %v5780 = vpop.f32.mrf.mxu0
      %v5781 = vadd.f32 0.0, %v5780
      %v5782 = vpop.f32.mrf.mxu0
      %v5783 = vadd.f32 0.0, %v5782
      %5784 = vmatmul.bf16.gmra.mxu0 %v5398
      %v5785 = vpop.f32.mrf.mxu0
      %v5786 = vadd.f32 0.0, %v5785
      %v5787 = vpop.f32.mrf.mxu0
      %v5788 = vadd.f32 0.0, %v5787
      %5789 = vmatmul.bf16.gmra.mxu0 %v5400
      %v5790 = vpop.f32.mrf.mxu0
      %v5791 = vadd.f32 0.0, %v5790
      %v5792 = vpop.f32.mrf.mxu0
      %v5793 = vadd.f32 0.0, %v5792
      %5794 = vmatmul.bf16.gmra.mxu0 %v5641
      %v5795 = vpop.f32.mrf.mxu0
      %v5796 = vadd.f32 0.0, %v5795
      %v5797 = vpop.f32.mrf.mxu0
      %v5798 = vadd.f32 0.0, %v5797
      %5799 = vmatmul.bf16.gmra.mxu0 %v2430
      %v5800 = vpop.f32.mrf.mxu0
      %v5801 = vadd.f32 0.0, %v5800
      %v5802 = vpop.f32.mrf.mxu0
      %5803 = vdwg.mxu0
      %v5804 = vadd.f32 %v5583, %v5701
      %v5805 = vadd.f32 %v5584, %v5703
      %v5806 = vadd.f32 %v5585, %v5706
      %v5807 = vadd.f32 %v5586, %v5708
      %v5808 = vadd.f32 %v5587, %v5711
      %v5809 = vadd.f32 %v5588, %v5713
      %v5810 = vadd.f32 %v5589, %v5716
      %v5811 = vadd.f32 %v5590, %v5718
      %v5812 = vadd.f32 %v5591, %v5721
      %v5813 = vadd.f32 %v5592, %v5723
      %v5814 = vadd.f32 %v5593, %v5726
      %v5815 = vadd.f32 %v5594, %v5728
      %v5816 = vadd.f32 %v5595, %v5731
      %v5817 = vadd.f32 %v5596, %v5733
      %v5818 = vadd.f32 %v5597, %v5736
      %v5819 = vadd.f32 %v5598, %v5738
      %v5820 = vadd.f32 %v5599, %v5741
      %v5821 = vadd.f32 %v5600, %v5743
      %v5822 = vadd.f32 %v5601, %v5746
      %v5823 = vadd.f32 %v5602, %v5748
      %v5824 = vadd.f32 %v5603, %v5751
      %v5825 = vadd.f32 %v5604, %v5753
      %v5826 = vadd.f32 %v5605, %v5756
      %v5827 = vadd.f32 %v5606, %v5758
      %v5828 = vadd.f32 %v5607, %v5761
      %v5829 = vadd.f32 %v5608, %v5763
      %v5830 = vadd.f32 %v5609, %v5766
      %v5831 = vadd.f32 %v5610, %v5768
      %v5832 = vadd.f32 %v5611, %v5771
      %v5833 = vadd.f32 %v5612, %v5773
      %v5834 = vadd.f32 %v5613, %v5776
      %v5835 = vadd.f32 %v5614, %v5778
      %v5836 = vadd.f32 %v5615, %v5781
      %v5837 = vadd.f32 %v5616, %v5783
      %v5838 = vadd.f32 %v5617, %v5786
      %v5839 = vadd.f32 %v5618, %v5788
      %v5840 = vadd.f32 %v5619, %v5791
      %v5841 = vadd.f32 %v5620, %v5793
      %v5842 = vadd.f32 %v5621, %v5796
      %v5843 = vadd.f32 %v5622, %v5798
      %v5844 = vadd.f32 %v5623, %v5801
      %s5845 = scalar_lea.vmem %s5, 448
      %v5846 = vld [vmem:[%s5845] sm:$0xf]
      %v5847 = vld [vmem:[%s5845 + $0x4] sm:$0xf]
      %v5848 = vld [vmem:[%s5845 + $0x8] sm:$0xf]
      %v5849 = vld [vmem:[%s5845 + $0xc] sm:$0xf]
      %v5850 = vld [vmem:[%s5845 + $0x10] sm:$0xf]
      %v5851 = vld [vmem:[%s5845 + $0x14] sm:$0xf]
      %v5852 = vld [vmem:[%s5845 + $0x18] sm:$0xf]
      %v5853 = vld [vmem:[%s5845 + $0x1c] sm:$0xf]
      %v5854 = vld [vmem:[%s5845 + $0x20] sm:$0xf]
      %v5855 = vld [vmem:[%s5845 + $0x24] sm:$0xf]
      %v5856 = vld [vmem:[%s5845 + $0x28] sm:$0xf]
      %v5857 = vld [vmem:[%s5845 + $0x2c] sm:$0xf]
      %v5858 = vld [vmem:[%s5845 + $0x30] sm:$0xf]
      %v5859 = vld [vmem:[%s5845 + $0x34] sm:$0xf]
      %v5860 = vld [vmem:[%s5845 + $0x38] sm:$0xf]
      %v5861 = vld [vmem:[%s5845 + $0x3c] sm:$0xf]
      %v5862 = vrot.slane %v4020, 2
      %v5863 = vrot.slane %v4016, 3
      %v5864 = vor.u32 %v5862, %v5863
      %v5865 = vrot.slane %v4028, 2
      %v5866 = vrot.slane %v4024, 3
      %v5867 = vor.u32 %v5865, %v5866
      %v5868 = vsel %vm2653, %v5864, %v5867
      %v5869 = vrot.slane %v4036, 2
      %v5870 = vrot.slane %v4032, 3
      %v5871 = vor.u32 %v5869, %v5870
      %v5872 = vsel %vm2653, %v5867, %v5871
      %v5873 = vrot.slane %v4044, 2
      %v5874 = vrot.slane %v4040, 3
      %v5875 = vor.u32 %v5873, %v5874
      %v5876 = vsel %vm2653, %v5871, %v5875
      %v5877 = vrot.slane %v4052, 2
      %v5878 = vrot.slane %v4048, 3
      %v5879 = vor.u32 %v5877, %v5878
      %v5880 = vsel %vm2653, %v5875, %v5879
      %v5881 = vrot.slane %v4060, 2
      %v5882 = vrot.slane %v4056, 3
      %v5883 = vor.u32 %v5881, %v5882
      %v5884 = vsel %vm2653, %v5879, %v5883
      %v5885 = vrot.slane %v4068, 2
      %v5886 = vrot.slane %v4064, 3
      %v5887 = vor.u32 %v5885, %v5886
      %v5888 = vsel %vm2653, %v5883, %v5887
      %v5889 = vrot.slane %v4076, 2
      %v5890 = vrot.slane %v4072, 3
      %v5891 = vor.u32 %v5889, %v5890
      %v5892 = vsel %vm2653, %v5887, %v5891
      %v5893 = vrot.slane %v4084, 2
      %v5894 = vrot.slane %v4080, 3
      %v5895 = vor.u32 %v5893, %v5894
      %v5896 = vsel %vm2653, %v5891, %v5895
      %v5897 = vrot.slane %v4092, 2
      %v5898 = vrot.slane %v4088, 3
      %v5899 = vor.u32 %v5897, %v5898
      %v5900 = vsel %vm2653, %v5895, %v5899
      %v5901 = vrot.slane %v4100, 2
      %v5902 = vrot.slane %v4096, 3
      %v5903 = vor.u32 %v5901, %v5902
      %v5904 = vsel %vm2653, %v5899, %v5903
      %v5905 = vrot.slane %v4108, 2
      %v5906 = vrot.slane %v4104, 3
      %v5907 = vor.u32 %v5905, %v5906
      %v5908 = vsel %vm2653, %v5903, %v5907
      %v5909 = vrot.slane %v4116, 2
      %v5910 = vrot.slane %v4112, 3
      %v5911 = vor.u32 %v5909, %v5910
      %v5912 = vsel %vm2653, %v5907, %v5911
      %v5913 = vrot.slane %v4124, 2
      %v5914 = vrot.slane %v4120, 3
      %v5915 = vor.u32 %v5913, %v5914
      %v5916 = vsel %vm2653, %v5911, %v5915
      %v5917 = vrot.slane %v4132, 2
      %v5918 = vrot.slane %v4128, 3
      %v5919 = vor.u32 %v5917, %v5918
      %v5920 = vsel %vm2653, %v5915, %v5919
      %v5921 = vrot.slane %v4140, 2
      %v5922 = vrot.slane %v4136, 3
      %v5923 = vor.u32 %v5921, %v5922
      %v5924 = vsel %vm2653, %v5919, %v5923
      %v5925 = vrot.slane %v4148, 2
      %v5926 = vrot.slane %v4144, 3
      %v5927 = vor.u32 %v5925, %v5926
      %v5928 = vsel %vm2653, %v5923, %v5927
      %v5929 = vrot.slane %v4156, 2
      %v5930 = vrot.slane %v4152, 3
      %v5931 = vor.u32 %v5929, %v5930
      %v5932 = vsel %vm2653, %v5927, %v5931
      %v5933 = vrot.slane %v4164, 2
      %v5934 = vrot.slane %v4160, 3
      %v5935 = vor.u32 %v5933, %v5934
      %v5936 = vsel %vm2653, %v5931, %v5935
      %v5937 = vrot.slane %v5112, 2
      %v5938 = vrot.slane %v5115, 3
      %v5939 = vor.u32 %v5937, %v5938
      %v5940 = vsel %vm2653, %v5935, %v5939
      %v5941 = vsel %vm2653, %v5939, %v2735
      %v5978 = vunpack.c.l.b16 %v5846
      %v5979 = vunpack.c.l.b16 %v5847
      %v5980 = vunpack.c.l.b16 %v5848
      %v5981 = vunpack.c.l.b16 %v5849
      %v5982 = vunpack.c.l.b16 %v5850
      %v5983 = vunpack.c.l.b16 %v5851
      %v5984 = vunpack.c.l.b16 %v5852
      %v5985 = vunpack.c.l.b16 %v5853
      %v5986 = vunpack.c.l.b16 %v5854
      %v5987 = vunpack.c.l.b16 %v5855
      %v5988 = vunpack.c.l.b16 %v5856
      %v5989 = vunpack.c.l.b16 %v5857
      %v5990 = vunpack.c.l.b16 %v5858
      %v5991 = vunpack.c.l.b16 %v5859
      %v5992 = vunpack.c.l.b16 %v5860
      %v5993 = vunpack.c.l.b16 %v5861
      %v5994 = vpack.c.b16 %v5979, %v5978
      %v5995 = vpack.c.b16 %v5981, %v5980
      %v5996 = vpack.c.b16 %v5983, %v5982
      %v5997 = vpack.c.b16 %v5985, %v5984
      %v5998 = vpack.c.b16 %v5987, %v5986
      %v5999 = vpack.c.b16 %v5989, %v5988
      %v6000 = vpack.c.b16 %v5991, %v5990
      %v6001 = vpack.c.b16 %v5993, %v5992
      %6010 = vmatpush.bf16.msra.mxu0 %v6001
      %6011 = vmatpush.bf16.msra.mxu0 %v6000
      %6012 = vmatpush.bf16.msra.mxu0 %v5999
      %6013 = vmatpush.bf16.msra.mxu0 %v5998
      %6014 = vmatpush.bf16.msra.mxu0 %v5997
      %6015 = vmatpush.bf16.msra.mxu0 %v5996
      %6016 = vmatpush.bf16.msra.mxu0 %v5995
      %6017 = vmatpush.bf16.msra.mxu0 %v5994
      %6018 = vmatmul.bf16.gmra.mxu0 %v5868
      %v6019 = vpop.f32.mrf.mxu0
      %v6020 = vadd.f32 0.0, %v6019
      %v6021 = vpop.f32.mrf.mxu0
      %v6022 = vadd.f32 0.0, %v6021
      %6023 = vmatmul.bf16.gmra.mxu0 %v5872
      %v6024 = vpop.f32.mrf.mxu0
      %v6025 = vadd.f32 0.0, %v6024
      %v6026 = vpop.f32.mrf.mxu0
      %v6027 = vadd.f32 0.0, %v6026
      %6028 = vmatmul.bf16.gmra.mxu0 %v5876
      %v6029 = vpop.f32.mrf.mxu0
      %v6030 = vadd.f32 0.0, %v6029
      %v6031 = vpop.f32.mrf.mxu0
      %v6032 = vadd.f32 0.0, %v6031
      %6033 = vmatmul.bf16.gmra.mxu0 %v5880
      %v6034 = vpop.f32.mrf.mxu0
      %v6035 = vadd.f32 0.0, %v6034
      %v6036 = vpop.f32.mrf.mxu0
      %v6037 = vadd.f32 0.0, %v6036
      %6038 = vmatmul.bf16.gmra.mxu0 %v5884
      %v6039 = vpop.f32.mrf.mxu0
      %v6040 = vadd.f32 0.0, %v6039
      %v6041 = vpop.f32.mrf.mxu0
      %v6042 = vadd.f32 0.0, %v6041
      %6043 = vmatmul.bf16.gmra.mxu0 %v5888
      %v6044 = vpop.f32.mrf.mxu0
      %v6045 = vadd.f32 0.0, %v6044
      %v6046 = vpop.f32.mrf.mxu0
      %v6047 = vadd.f32 0.0, %v6046
      %6048 = vmatmul.bf16.gmra.mxu0 %v5892
      %v6049 = vpop.f32.mrf.mxu0
      %v6050 = vadd.f32 0.0, %v6049
      %v6051 = vpop.f32.mrf.mxu0
      %v6052 = vadd.f32 0.0, %v6051
      %6053 = vmatmul.bf16.gmra.mxu0 %v5896
      %v6054 = vpop.f32.mrf.mxu0
      %v6055 = vadd.f32 0.0, %v6054
      %v6056 = vpop.f32.mrf.mxu0
      %v6057 = vadd.f32 0.0, %v6056
      %6058 = vmatmul.bf16.gmra.mxu0 %v5900
      %v6059 = vpop.f32.mrf.mxu0
      %v6060 = vadd.f32 0.0, %v6059
      %v6061 = vpop.f32.mrf.mxu0
      %v6062 = vadd.f32 0.0, %v6061
      %6063 = vmatmul.bf16.gmra.mxu0 %v5904
      %v6064 = vpop.f32.mrf.mxu0
      %v6065 = vadd.f32 0.0, %v6064
      %v6066 = vpop.f32.mrf.mxu0
      %v6067 = vadd.f32 0.0, %v6066
      %6068 = vmatmul.bf16.gmra.mxu0 %v5908
      %v6069 = vpop.f32.mrf.mxu0
      %v6070 = vadd.f32 0.0, %v6069
      %v6071 = vpop.f32.mrf.mxu0
      %v6072 = vadd.f32 0.0, %v6071
      %6073 = vmatmul.bf16.gmra.mxu0 %v5912
      %v6074 = vpop.f32.mrf.mxu0
      %v6075 = vadd.f32 0.0, %v6074
      %v6076 = vpop.f32.mrf.mxu0
      %v6077 = vadd.f32 0.0, %v6076
      %6078 = vmatmul.bf16.gmra.mxu0 %v5916
      %v6079 = vpop.f32.mrf.mxu0
      %v6080 = vadd.f32 0.0, %v6079
      %v6081 = vpop.f32.mrf.mxu0
      %v6082 = vadd.f32 0.0, %v6081
      %6083 = vmatmul.bf16.gmra.mxu0 %v5920
      %v6084 = vpop.f32.mrf.mxu0
      %v6085 = vadd.f32 0.0, %v6084
      %v6086 = vpop.f32.mrf.mxu0
      %v6087 = vadd.f32 0.0, %v6086
      %6088 = vmatmul.bf16.gmra.mxu0 %v5924
      %v6089 = vpop.f32.mrf.mxu0
      %v6090 = vadd.f32 0.0, %v6089
      %v6091 = vpop.f32.mrf.mxu0
      %v6092 = vadd.f32 0.0, %v6091
      %6093 = vmatmul.bf16.gmra.mxu0 %v5928
      %v6094 = vpop.f32.mrf.mxu0
      %v6095 = vadd.f32 0.0, %v6094
      %v6096 = vpop.f32.mrf.mxu0
      %v6097 = vadd.f32 0.0, %v6096
      %6098 = vmatmul.bf16.gmra.mxu0 %v5932
      %v6099 = vpop.f32.mrf.mxu0
      %v6100 = vadd.f32 0.0, %v6099
      %v6101 = vpop.f32.mrf.mxu0
      %v6102 = vadd.f32 0.0, %v6101
      %6103 = vmatmul.bf16.gmra.mxu0 %v5936
      %v6104 = vpop.f32.mrf.mxu0
      %v6105 = vadd.f32 0.0, %v6104
      %v6106 = vpop.f32.mrf.mxu0
      %v6107 = vadd.f32 0.0, %v6106
      %6108 = vmatmul.bf16.gmra.mxu0 %v5940
      %v6109 = vpop.f32.mrf.mxu0
      %v6110 = vadd.f32 0.0, %v6109
      %v6111 = vpop.f32.mrf.mxu0
      %v6112 = vadd.f32 0.0, %v6111
      %6113 = vmatmul.bf16.gmra.mxu0 %v5941
      %v6114 = vpop.f32.mrf.mxu0
      %v6115 = vadd.f32 0.0, %v6114
      %v6116 = vpop.f32.mrf.mxu0
      %v6117 = vadd.f32 0.0, %v6116
      %6118 = vmatmul.bf16.gmra.mxu0 %v2735
      %v6119 = vpop.f32.mrf.mxu0
      %v6120 = vadd.f32 0.0, %v6119
      %v6121 = vpop.f32.mrf.mxu0
      %6122 = vdwg.mxu0
      %v6123 = vadd.f32 %v5804, %v6020
      %v6124 = vadd.f32 %v5805, %v6022
      %v6125 = vadd.f32 %v5806, %v6025
      %v6126 = vadd.f32 %v5807, %v6027
      %v6127 = vadd.f32 %v5808, %v6030
      %v6128 = vadd.f32 %v5809, %v6032
      %v6129 = vadd.f32 %v5810, %v6035
      %v6130 = vadd.f32 %v5811, %v6037
      %v6131 = vadd.f32 %v5812, %v6040
      %v6132 = vadd.f32 %v5813, %v6042
      %v6133 = vadd.f32 %v5814, %v6045
      %v6134 = vadd.f32 %v5815, %v6047
      %v6135 = vadd.f32 %v5816, %v6050
      %v6136 = vadd.f32 %v5817, %v6052
      %v6137 = vadd.f32 %v5818, %v6055
      %v6138 = vadd.f32 %v5819, %v6057
      %v6139 = vadd.f32 %v5820, %v6060
      %v6140 = vadd.f32 %v5821, %v6062
      %v6141 = vadd.f32 %v5822, %v6065
      %v6142 = vadd.f32 %v5823, %v6067
      %v6143 = vadd.f32 %v5824, %v6070
      %v6144 = vadd.f32 %v5825, %v6072
      %v6145 = vadd.f32 %v5826, %v6075
      %v6146 = vadd.f32 %v5827, %v6077
      %v6147 = vadd.f32 %v5828, %v6080
      %v6148 = vadd.f32 %v5829, %v6082
      %v6149 = vadd.f32 %v5830, %v6085
      %v6150 = vadd.f32 %v5831, %v6087
      %v6151 = vadd.f32 %v5832, %v6090
      %v6152 = vadd.f32 %v5833, %v6092
      %v6153 = vadd.f32 %v5834, %v6095
      %v6154 = vadd.f32 %v5835, %v6097
      %v6155 = vadd.f32 %v5836, %v6100
      %v6156 = vadd.f32 %v5837, %v6102
      %v6157 = vadd.f32 %v5838, %v6105
      %v6158 = vadd.f32 %v5839, %v6107
      %v6159 = vadd.f32 %v5840, %v6110
      %v6160 = vadd.f32 %v5841, %v6112
      %v6161 = vadd.f32 %v5842, %v6115
      %v6162 = vadd.f32 %v5843, %v6117
      %v6163 = vadd.f32 %v5844, %v6120
      %s6164 = scalar_lea.vmem %s5, 512
      %v6165 = vld [vmem:[%s6164] sm:$0xf]
      %v6166 = vld [vmem:[%s6164 + $0x4] sm:$0xf]
      %v6167 = vld [vmem:[%s6164 + $0x8] sm:$0xf]
      %v6168 = vld [vmem:[%s6164 + $0xc] sm:$0xf]
      %v6169 = vld [vmem:[%s6164 + $0x10] sm:$0xf]
      %v6170 = vld [vmem:[%s6164 + $0x14] sm:$0xf]
      %v6171 = vld [vmem:[%s6164 + $0x18] sm:$0xf]
      %v6172 = vld [vmem:[%s6164 + $0x1c] sm:$0xf]
      %v6173 = vld [vmem:[%s6164 + $0x20] sm:$0xf]
      %v6174 = vld [vmem:[%s6164 + $0x24] sm:$0xf]
      %v6175 = vld [vmem:[%s6164 + $0x28] sm:$0xf]
      %v6176 = vld [vmem:[%s6164 + $0x2c] sm:$0xf]
      %v6177 = vld [vmem:[%s6164 + $0x30] sm:$0xf]
      %v6178 = vld [vmem:[%s6164 + $0x34] sm:$0xf]
      %v6179 = vld [vmem:[%s6164 + $0x38] sm:$0xf]
      %v6180 = vld [vmem:[%s6164 + $0x3c] sm:$0xf]
      %v6181 = vrot.slane %v3779, 3
      %v6182 = vrot.slane %v3788, 3
      %v6183 = vsel %vm2977, %v6181, %v6182
      %v6184 = vrot.slane %v3797, 3
      %v6185 = vsel %vm2977, %v6182, %v6184
      %v6186 = vrot.slane %v3806, 3
      %v6187 = vsel %vm2977, %v6184, %v6186
      %v6188 = vrot.slane %v3815, 3
      %v6189 = vsel %vm2977, %v6186, %v6188
      %v6190 = vrot.slane %v3824, 3
      %v6191 = vsel %vm2977, %v6188, %v6190
      %v6192 = vrot.slane %v3833, 3
      %v6193 = vsel %vm2977, %v6190, %v6192
      %v6194 = vrot.slane %v3842, 3
      %v6195 = vsel %vm2977, %v6192, %v6194
      %v6196 = vrot.slane %v3851, 3
      %v6197 = vsel %vm2977, %v6194, %v6196
      %v6198 = vrot.slane %v3860, 3
      %v6199 = vsel %vm2977, %v6196, %v6198
      %v6200 = vrot.slane %v3869, 3
      %v6201 = vsel %vm2977, %v6198, %v6200
      %v6202 = vrot.slane %v3878, 3
      %v6203 = vsel %vm2977, %v6200, %v6202
      %v6204 = vrot.slane %v3887, 3
      %v6205 = vsel %vm2977, %v6202, %v6204
      %v6206 = vrot.slane %v3896, 3
      %v6207 = vsel %vm2977, %v6204, %v6206
      %v6208 = vrot.slane %v3905, 3
      %v6209 = vsel %vm2977, %v6206, %v6208
      %v6210 = vrot.slane %v3914, 3
      %v6211 = vsel %vm2977, %v6208, %v6210
      %v6212 = vrot.slane %v3923, 3
      %v6213 = vsel %vm2977, %v6210, %v6212
      %v6214 = vrot.slane %v3932, 3
      %v6215 = vsel %vm2977, %v6212, %v6214
      %v6216 = vrot.slane %v3941, 3
      %v6217 = vsel %vm2977, %v6214, %v6216
      %v6218 = vrot.slane %v3973, 3
      %v6219 = vsel %vm2977, %v6216, %v6218
      %v6220 = vsel %vm2977, %v6218, %v3017
      %v6257 = vunpack.c.l.b16 %v6165
      %v6258 = vunpack.c.l.b16 %v6166
      %v6259 = vunpack.c.l.b16 %v6167
      %v6260 = vunpack.c.l.b16 %v6168
      %v6261 = vunpack.c.l.b16 %v6169
      %v6262 = vunpack.c.l.b16 %v6170
      %v6263 = vunpack.c.l.b16 %v6171
      %v6264 = vunpack.c.l.b16 %v6172
      %v6265 = vunpack.c.l.b16 %v6173
      %v6266 = vunpack.c.l.b16 %v6174
      %v6267 = vunpack.c.l.b16 %v6175
      %v6268 = vunpack.c.l.b16 %v6176
      %v6269 = vunpack.c.l.b16 %v6177
      %v6270 = vunpack.c.l.b16 %v6178
      %v6271 = vunpack.c.l.b16 %v6179
      %v6272 = vunpack.c.l.b16 %v6180
      %v6273 = vpack.c.b16 %v6258, %v6257
      %v6274 = vpack.c.b16 %v6260, %v6259
      %v6275 = vpack.c.b16 %v6262, %v6261
      %v6276 = vpack.c.b16 %v6264, %v6263
      %v6277 = vpack.c.b16 %v6266, %v6265
      %v6278 = vpack.c.b16 %v6268, %v6267
      %v6279 = vpack.c.b16 %v6270, %v6269
      %v6280 = vpack.c.b16 %v6272, %v6271
      %6289 = vmatpush.bf16.msra.mxu0 %v6280
      %6290 = vmatpush.bf16.msra.mxu0 %v6279
      %6291 = vmatpush.bf16.msra.mxu0 %v6278
      %6292 = vmatpush.bf16.msra.mxu0 %v6277
      %6293 = vmatpush.bf16.msra.mxu0 %v6276
      %6294 = vmatpush.bf16.msra.mxu0 %v6275
      %6295 = vmatpush.bf16.msra.mxu0 %v6274
      %6296 = vmatpush.bf16.msra.mxu0 %v6273
      %6297 = vmatmul.bf16.gmra.mxu0 %v6183
      %v6298 = vpop.f32.mrf.mxu0
      %v6299 = vadd.f32 0.0, %v6298
      %v6300 = vpop.f32.mrf.mxu0
      %v6301 = vadd.f32 0.0, %v6300
      %6302 = vmatmul.bf16.gmra.mxu0 %v6185
      %v6303 = vpop.f32.mrf.mxu0
      %v6304 = vadd.f32 0.0, %v6303
      %v6305 = vpop.f32.mrf.mxu0
      %v6306 = vadd.f32 0.0, %v6305
      %6307 = vmatmul.bf16.gmra.mxu0 %v6187
      %v6308 = vpop.f32.mrf.mxu0
      %v6309 = vadd.f32 0.0, %v6308
      %v6310 = vpop.f32.mrf.mxu0
      %v6311 = vadd.f32 0.0, %v6310
      %6312 = vmatmul.bf16.gmra.mxu0 %v6189
      %v6313 = vpop.f32.mrf.mxu0
      %v6314 = vadd.f32 0.0, %v6313
      %v6315 = vpop.f32.mrf.mxu0
      %v6316 = vadd.f32 0.0, %v6315
      %6317 = vmatmul.bf16.gmra.mxu0 %v6191
      %v6318 = vpop.f32.mrf.mxu0
      %v6319 = vadd.f32 0.0, %v6318
      %v6320 = vpop.f32.mrf.mxu0
      %v6321 = vadd.f32 0.0, %v6320
      %6322 = vmatmul.bf16.gmra.mxu0 %v6193
      %v6323 = vpop.f32.mrf.mxu0
      %v6324 = vadd.f32 0.0, %v6323
      %v6325 = vpop.f32.mrf.mxu0
      %v6326 = vadd.f32 0.0, %v6325
      %6327 = vmatmul.bf16.gmra.mxu0 %v6195
      %v6328 = vpop.f32.mrf.mxu0
      %v6329 = vadd.f32 0.0, %v6328
      %v6330 = vpop.f32.mrf.mxu0
      %v6331 = vadd.f32 0.0, %v6330
      %6332 = vmatmul.bf16.gmra.mxu0 %v6197
      %v6333 = vpop.f32.mrf.mxu0
      %v6334 = vadd.f32 0.0, %v6333
      %v6335 = vpop.f32.mrf.mxu0
      %v6336 = vadd.f32 0.0, %v6335
      %6337 = vmatmul.bf16.gmra.mxu0 %v6199
      %v6338 = vpop.f32.mrf.mxu0
      %v6339 = vadd.f32 0.0, %v6338
      %v6340 = vpop.f32.mrf.mxu0
      %v6341 = vadd.f32 0.0, %v6340
      %6342 = vmatmul.bf16.gmra.mxu0 %v6201
      %v6343 = vpop.f32.mrf.mxu0
      %v6344 = vadd.f32 0.0, %v6343
      %v6345 = vpop.f32.mrf.mxu0
      %v6346 = vadd.f32 0.0, %v6345
      %6347 = vmatmul.bf16.gmra.mxu0 %v6203
      %v6348 = vpop.f32.mrf.mxu0
      %v6349 = vadd.f32 0.0, %v6348
      %v6350 = vpop.f32.mrf.mxu0
      %v6351 = vadd.f32 0.0, %v6350
      %6352 = vmatmul.bf16.gmra.mxu0 %v6205
      %v6353 = vpop.f32.mrf.mxu0
      %v6354 = vadd.f32 0.0, %v6353
      %v6355 = vpop.f32.mrf.mxu0
      %v6356 = vadd.f32 0.0, %v6355
      %6357 = vmatmul.bf16.gmra.mxu0 %v6207
      %v6358 = vpop.f32.mrf.mxu0
      %v6359 = vadd.f32 0.0, %v6358
      %v6360 = vpop.f32.mrf.mxu0
      %v6361 = vadd.f32 0.0, %v6360
      %6362 = vmatmul.bf16.gmra.mxu0 %v6209
      %v6363 = vpop.f32.mrf.mxu0
      %v6364 = vadd.f32 0.0, %v6363
      %v6365 = vpop.f32.mrf.mxu0
      %v6366 = vadd.f32 0.0, %v6365
      %6367 = vmatmul.bf16.gmra.mxu0 %v6211
      %v6368 = vpop.f32.mrf.mxu0
      %v6369 = vadd.f32 0.0, %v6368
      %v6370 = vpop.f32.mrf.mxu0
      %v6371 = vadd.f32 0.0, %v6370
      %6372 = vmatmul.bf16.gmra.mxu0 %v6213
      %v6373 = vpop.f32.mrf.mxu0
      %v6374 = vadd.f32 0.0, %v6373
      %v6375 = vpop.f32.mrf.mxu0
      %v6376 = vadd.f32 0.0, %v6375
      %6377 = vmatmul.bf16.gmra.mxu0 %v6215
      %v6378 = vpop.f32.mrf.mxu0
      %v6379 = vadd.f32 0.0, %v6378
      %v6380 = vpop.f32.mrf.mxu0
      %v6381 = vadd.f32 0.0, %v6380
      %6382 = vmatmul.bf16.gmra.mxu0 %v6217
      %v6383 = vpop.f32.mrf.mxu0
      %v6384 = vadd.f32 0.0, %v6383
      %v6385 = vpop.f32.mrf.mxu0
      %v6386 = vadd.f32 0.0, %v6385
      %6387 = vmatmul.bf16.gmra.mxu0 %v6219
      %v6388 = vpop.f32.mrf.mxu0
      %v6389 = vadd.f32 0.0, %v6388
      %v6390 = vpop.f32.mrf.mxu0
      %v6391 = vadd.f32 0.0, %v6390
      %6392 = vmatmul.bf16.gmra.mxu0 %v6220
      %v6393 = vpop.f32.mrf.mxu0
      %v6394 = vadd.f32 0.0, %v6393
      %v6395 = vpop.f32.mrf.mxu0
      %v6396 = vadd.f32 0.0, %v6395
      %6397 = vmatmul.bf16.gmra.mxu0 %v3017
      %v6398 = vpop.f32.mrf.mxu0
      %v6399 = vadd.f32 0.0, %v6398
      %v6400 = vpop.f32.mrf.mxu0
      %6401 = vdwg.mxu0
      %v6402 = vadd.f32 %v6123, %v6299
      %v6403 = vadd.f32 %v6124, %v6301
      %v6404 = vadd.f32 %v6125, %v6304
      %v6405 = vadd.f32 %v6126, %v6306
      %v6406 = vadd.f32 %v6127, %v6309
      %v6407 = vadd.f32 %v6128, %v6311
      %v6408 = vadd.f32 %v6129, %v6314
      %v6409 = vadd.f32 %v6130, %v6316
      %v6410 = vadd.f32 %v6131, %v6319
      %v6411 = vadd.f32 %v6132, %v6321
      %v6412 = vadd.f32 %v6133, %v6324
      %v6413 = vadd.f32 %v6134, %v6326
      %v6414 = vadd.f32 %v6135, %v6329
      %v6415 = vadd.f32 %v6136, %v6331
      %v6416 = vadd.f32 %v6137, %v6334
      %v6417 = vadd.f32 %v6138, %v6336
      %v6418 = vadd.f32 %v6139, %v6339
      %v6419 = vadd.f32 %v6140, %v6341
      %v6420 = vadd.f32 %v6141, %v6344
      %v6421 = vadd.f32 %v6142, %v6346
      %v6422 = vadd.f32 %v6143, %v6349
      %v6423 = vadd.f32 %v6144, %v6351
      %v6424 = vadd.f32 %v6145, %v6354
      %v6425 = vadd.f32 %v6146, %v6356
      %v6426 = vadd.f32 %v6147, %v6359
      %v6427 = vadd.f32 %v6148, %v6361
      %v6428 = vadd.f32 %v6149, %v6364
      %v6429 = vadd.f32 %v6150, %v6366
      %v6430 = vadd.f32 %v6151, %v6369
      %v6431 = vadd.f32 %v6152, %v6371
      %v6432 = vadd.f32 %v6153, %v6374
      %v6433 = vadd.f32 %v6154, %v6376
      %v6434 = vadd.f32 %v6155, %v6379
      %v6435 = vadd.f32 %v6156, %v6381
      %v6436 = vadd.f32 %v6157, %v6384
      %v6437 = vadd.f32 %v6158, %v6386
      %v6438 = vadd.f32 %v6159, %v6389
      %v6439 = vadd.f32 %v6160, %v6391
      %v6440 = vadd.f32 %v6161, %v6394
      %v6441 = vadd.f32 %v6162, %v6396
      %v6442 = vadd.f32 %v6163, %v6399
      %v6443 = vld [vmem:[%s6] sm:$0x1]
      %v6445 = vperm.slane %v6443, 0
      %v6447 = vmul.f32 %v6402, %v6445
      %v6448 = vmul.f32 %v6403, %v6445
      %v6449 = vmul.f32 %v6404, %v6445
      %v6450 = vmul.f32 %v6405, %v6445
      %v6451 = vmul.f32 %v6406, %v6445
      %v6452 = vmul.f32 %v6407, %v6445
      %v6453 = vmul.f32 %v6408, %v6445
      %v6454 = vmul.f32 %v6409, %v6445
      %v6455 = vmul.f32 %v6410, %v6445
      %v6456 = vmul.f32 %v6411, %v6445
      %v6457 = vmul.f32 %v6412, %v6445
      %v6458 = vmul.f32 %v6413, %v6445
      %v6459 = vmul.f32 %v6414, %v6445
      %v6460 = vmul.f32 %v6415, %v6445
      %v6461 = vmul.f32 %v6416, %v6445
      %v6462 = vmul.f32 %v6417, %v6445
      %v6463 = vmul.f32 %v6418, %v6445
      %v6464 = vmul.f32 %v6419, %v6445
      %v6465 = vmul.f32 %v6420, %v6445
      %v6466 = vmul.f32 %v6421, %v6445
      %v6467 = vmul.f32 %v6422, %v6445
      %v6468 = vmul.f32 %v6423, %v6445
      %v6469 = vmul.f32 %v6424, %v6445
      %v6470 = vmul.f32 %v6425, %v6445
      %v6471 = vmul.f32 %v6426, %v6445
      %v6472 = vmul.f32 %v6427, %v6445
      %v6473 = vmul.f32 %v6428, %v6445
      %v6474 = vmul.f32 %v6429, %v6445
      %v6475 = vmul.f32 %v6430, %v6445
      %v6476 = vmul.f32 %v6431, %v6445
      %v6477 = vmul.f32 %v6432, %v6445
      %v6478 = vmul.f32 %v6433, %v6445
      %v6479 = vmul.f32 %v6434, %v6445
      %v6480 = vmul.f32 %v6435, %v6445
      %v6481 = vmul.f32 %v6436, %v6445
      %v6482 = vmul.f32 %v6437, %v6445
      %v6483 = vmul.f32 %v6438, %v6445
      %v6484 = vmul.f32 %v6439, %v6445
      %v6485 = vmul.f32 %v6440, %v6445
      %v6486 = vmul.f32 %v6441, %v6445
      %v6487 = vmul.f32 %v6442, %v6445
      %v6488 = vld [vmem:[%s7] sm:$0x1]
      %v6490 = vperm.slane %v6488, 0
      %v6492 = vadd.f32 %v6447, %v6490
      %v6493 = vadd.f32 %v6448, %v6490
      %v6494 = vadd.f32 %v6449, %v6490
      %v6495 = vadd.f32 %v6450, %v6490
      %v6496 = vadd.f32 %v6451, %v6490
      %v6497 = vadd.f32 %v6452, %v6490
      %v6498 = vadd.f32 %v6453, %v6490
      %v6499 = vadd.f32 %v6454, %v6490
      %v6500 = vadd.f32 %v6455, %v6490
      %v6501 = vadd.f32 %v6456, %v6490
      %v6502 = vadd.f32 %v6457, %v6490
      %v6503 = vadd.f32 %v6458, %v6490
      %v6504 = vadd.f32 %v6459, %v6490
      %v6505 = vadd.f32 %v6460, %v6490
      %v6506 = vadd.f32 %v6461, %v6490
      %v6507 = vadd.f32 %v6462, %v6490
      %v6508 = vadd.f32 %v6463, %v6490
      %v6509 = vadd.f32 %v6464, %v6490
      %v6510 = vadd.f32 %v6465, %v6490
      %v6511 = vadd.f32 %v6466, %v6490
      %v6512 = vadd.f32 %v6467, %v6490
      %v6513 = vadd.f32 %v6468, %v6490
      %v6514 = vadd.f32 %v6469, %v6490
      %v6515 = vadd.f32 %v6470, %v6490
      %v6516 = vadd.f32 %v6471, %v6490
      %v6517 = vadd.f32 %v6472, %v6490
      %v6518 = vadd.f32 %v6473, %v6490
      %v6519 = vadd.f32 %v6474, %v6490
      %v6520 = vadd.f32 %v6475, %v6490
      %v6521 = vadd.f32 %v6476, %v6490
      %v6522 = vadd.f32 %v6477, %v6490
      %v6523 = vadd.f32 %v6478, %v6490
      %v6524 = vadd.f32 %v6479, %v6490
      %v6525 = vadd.f32 %v6480, %v6490
      %v6526 = vadd.f32 %v6481, %v6490
      %v6527 = vadd.f32 %v6482, %v6490
      %v6528 = vadd.f32 %v6483, %v6490
      %v6529 = vadd.f32 %v6484, %v6490
      %v6530 = vadd.f32 %v6485, %v6490
      %v6531 = vadd.f32 %v6486, %v6490
      %v6532 = vadd.f32 %v6487, %v6490
      %v6533 = vadd.f32 %v6492, %v307
      %v6534 = vadd.f32 %v6493, %v308
      %v6535 = vadd.f32 %v6494, %v309
      %v6536 = vadd.f32 %v6495, %v310
      %v6537 = vadd.f32 %v6496, %v311
      %v6538 = vadd.f32 %v6497, %v312
      %v6539 = vadd.f32 %v6498, %v313
      %v6540 = vadd.f32 %v6499, %v314
      %v6541 = vadd.f32 %v6500, %v315
      %v6542 = vadd.f32 %v6501, %v316
      %v6543 = vadd.f32 %v6502, %v317
      %v6544 = vadd.f32 %v6503, %v318
      %v6545 = vadd.f32 %v6504, %v319
      %v6546 = vadd.f32 %v6505, %v320
      %v6547 = vadd.f32 %v6506, %v321
      %v6548 = vadd.f32 %v6507, %v322
      %v6549 = vadd.f32 %v6508, %v323
      %v6550 = vadd.f32 %v6509, %v324
      %v6551 = vadd.f32 %v6510, %v325
      %v6552 = vadd.f32 %v6511, %v326
      %v6553 = vadd.f32 %v6512, %v327
      %v6554 = vadd.f32 %v6513, %v328
      %v6555 = vadd.f32 %v6514, %v329
      %v6556 = vadd.f32 %v6515, %v330
      %v6557 = vadd.f32 %v6516, %v331
      %v6558 = vadd.f32 %v6517, %v332
      %v6559 = vadd.f32 %v6518, %v333
      %v6560 = vadd.f32 %v6519, %v334
      %v6561 = vadd.f32 %v6520, %v335
      %v6562 = vadd.f32 %v6521, %v336
      %v6563 = vadd.f32 %v6522, %v337
      %v6564 = vadd.f32 %v6523, %v338
      %v6565 = vadd.f32 %v6524, %v339
      %v6566 = vadd.f32 %v6525, %v340
      %v6567 = vadd.f32 %v6526, %v341
      %v6568 = vadd.f32 %v6527, %v342
      %v6569 = vadd.f32 %v6528, %v343
      %v6570 = vadd.f32 %v6529, %v344
      %v6571 = vadd.f32 %v6530, %v345
      %v6572 = vadd.f32 %v6531, %v346
      %v6573 = vadd.f32 %v6532, %v347
      %v6574 = vmax.f32 %v6533, 0.0
      %v6575 = vmax.f32 %v6534, 0.0
      %v6576 = vmax.f32 %v6535, 0.0
      %v6577 = vmax.f32 %v6536, 0.0
      %v6578 = vmax.f32 %v6537, 0.0
      %v6579 = vmax.f32 %v6538, 0.0
      %v6580 = vmax.f32 %v6539, 0.0
      %v6581 = vmax.f32 %v6540, 0.0
      %v6582 = vmax.f32 %v6541, 0.0
      %v6583 = vmax.f32 %v6542, 0.0
      %v6584 = vmax.f32 %v6543, 0.0
      %v6585 = vmax.f32 %v6544, 0.0
      %v6586 = vmax.f32 %v6545, 0.0
      %v6587 = vmax.f32 %v6546, 0.0
      %v6588 = vmax.f32 %v6547, 0.0
      %v6589 = vmax.f32 %v6548, 0.0
      %v6590 = vmax.f32 %v6549, 0.0
      %v6591 = vmax.f32 %v6550, 0.0
      %v6592 = vmax.f32 %v6551, 0.0
      %v6593 = vmax.f32 %v6552, 0.0
      %v6594 = vmax.f32 %v6553, 0.0
      %v6595 = vmax.f32 %v6554, 0.0
      %v6596 = vmax.f32 %v6555, 0.0
      %v6597 = vmax.f32 %v6556, 0.0
      %v6598 = vmax.f32 %v6557, 0.0
      %v6599 = vmax.f32 %v6558, 0.0
      %v6600 = vmax.f32 %v6559, 0.0
      %v6601 = vmax.f32 %v6560, 0.0
      %v6602 = vmax.f32 %v6561, 0.0
      %v6603 = vmax.f32 %v6562, 0.0
      %v6604 = vmax.f32 %v6563, 0.0
      %v6605 = vmax.f32 %v6564, 0.0
      %v6606 = vmax.f32 %v6565, 0.0
      %v6607 = vmax.f32 %v6566, 0.0
      %v6608 = vmax.f32 %v6567, 0.0
      %v6609 = vmax.f32 %v6568, 0.0
      %v6610 = vmax.f32 %v6569, 0.0
      %v6611 = vmax.f32 %v6570, 0.0
      %v6612 = vmax.f32 %v6571, 0.0
      %v6613 = vmax.f32 %v6572, 0.0
      %v6614 = vmax.f32 %v6573, 0.0
      %6615 = vst [vmem:[%s305] sm:$0xff] %v6574
      %6616 = vst [vmem:[%s305 + $0x8] sm:$0xff] %v6575
      %6617 = vst [vmem:[%s305 + $0x10] sm:$0xff] %v6576
      %6618 = vst [vmem:[%s305 + $0x18] sm:$0xff] %v6577
      %6619 = vst [vmem:[%s305 + $0x20] sm:$0xff] %v6578
      %6620 = vst [vmem:[%s305 + $0x28] sm:$0xff] %v6579
      %6621 = vst [vmem:[%s305 + $0x30] sm:$0xff] %v6580
      %6622 = vst [vmem:[%s305 + $0x38] sm:$0xff] %v6581
      %6623 = vst [vmem:[%s305 + $0x40] sm:$0xff] %v6582
      %6624 = vst [vmem:[%s305 + $0x48] sm:$0xff] %v6583
      %6625 = vst [vmem:[%s305 + $0x50] sm:$0xff] %v6584
      %6626 = vst [vmem:[%s305 + $0x58] sm:$0xff] %v6585
      %6627 = vst [vmem:[%s305 + $0x60] sm:$0xff] %v6586
      %6628 = vst [vmem:[%s305 + $0x68] sm:$0xff] %v6587
      %6629 = vst [vmem:[%s305 + $0x70] sm:$0xff] %v6588
      %6630 = vst [vmem:[%s305 + $0x78] sm:$0xff] %v6589
      %6631 = vst [vmem:[%s305 + $0x80] sm:$0xff] %v6590
      %6632 = vst [vmem:[%s305 + $0x88] sm:$0xff] %v6591
      %6633 = vst [vmem:[%s305 + $0x90] sm:$0xff] %v6592
      %6634 = vst [vmem:[%s305 + $0x98] sm:$0xff] %v6593
      %6635 = vst [vmem:[%s305 + $0xa0] sm:$0xff] %v6594
      %6636 = vst [vmem:[%s305 + $0xa8] sm:$0xff] %v6595
      %6637 = vst [vmem:[%s305 + $0xb0] sm:$0xff] %v6596
      %6638 = vst [vmem:[%s305 + $0xb8] sm:$0xff] %v6597
      %6639 = vst [vmem:[%s305 + $0xc0] sm:$0xff] %v6598
      %6640 = vst [vmem:[%s305 + $0xc8] sm:$0xff] %v6599
      %6641 = vst [vmem:[%s305 + $0xd0] sm:$0xff] %v6600
      %6642 = vst [vmem:[%s305 + $0xd8] sm:$0xff] %v6601
      %6643 = vst [vmem:[%s305 + $0xe0] sm:$0xff] %v6602
      %6644 = vst [vmem:[%s305 + $0xe8] sm:$0xff] %v6603
      %6645 = vst [vmem:[%s305 + $0xf0] sm:$0xff] %v6604
      %6646 = vst [vmem:[%s305 + $0xf8] sm:$0xff] %v6605
      %6647 = vst [vmem:[%s305 + $0x100] sm:$0xff] %v6606
      %6648 = vst [vmem:[%s305 + $0x108] sm:$0xff] %v6607
      %6649 = vst [vmem:[%s305 + $0x110] sm:$0xff] %v6608
      %6650 = vst [vmem:[%s305 + $0x118] sm:$0xff] %v6609
      %6651 = vst [vmem:[%s305 + $0x120] sm:$0xff] %v6610
      %6652 = vst [vmem:[%s305 + $0x128] sm:$0xff] %v6611
      %6653 = vst [vmem:[%s305 + $0x130] sm:$0xff] %v6612
      %6654 = vst [vmem:[%s305 + $0x138] sm:$0xff] %v6613
      %6655 = vst [vmem:[%s305 + $0x140] sm:$0xf] %v6614
      %p6656 = scmp.lt.s32.totalorder %s19, 1
      %s6657 = scalar_select %p6656, %s19, 1
      %s6658 = smul.addr %s6657, 41
      %s6659 = smul.addr %s6658, 8
      %s6660 = scalar_lea.vmem %s8, %s6659
      // Predicated region
      $region53: #{tpu_custom_call.1} parent=51 // pred_check
        %p6661 = pneg %p210
      $region54: #{tpu_custom_call.1} parent=51 // pred_check_branch
        %6663 = sbr.rel (%p6661) target = $region56
      $region55: #{tpu_custom_call.1} parent=51 // pred_region
        _
      $region56: #{tpu_custom_call.1} parent=51 // pred_fallthru
        _
    $region52: #{tpu_custom_call.1} parent=5 // pred_fallthru
      _
    %p6664 = scmp.le.s32.totalorder 2, %s14
    // Predicated region
    $region57: #{tpu_custom_call.1} parent=5 // pred_check
      %p6665 = pneg %p6664
    $region58: #{tpu_custom_call.1} parent=5 // pred_check_branch
      %6667 = sbr.rel (%p6665) target = $region60
    $region59: #{tpu_custom_call.1} parent=5 // pred_region
      %s6668 = ssub.s32 %s14, 2
      // Predicated region
      $region61: #{tpu_custom_call.1} parent=59 // pred_check
        %p6669 = pneg %p216
      $region62: #{tpu_custom_call.1} parent=59 // pred_check_branch
        %6671 = sbr.rel (%p6669) target = $region64
      $region63: #{tpu_custom_call.1} parent=59 // pred_region
        %p6672 = scmp.lt.s32.totalorder %s20, 1
        %s6673 = scalar_select %p6672, %s20, 1
        %s6674 = smul.addr %s6673, 41
        %s6675 = smul.addr %s6674, 8
        %s6676 = scalar_lea.vmem %s8, %s6675
      $region64: #{tpu_custom_call.1} parent=59 // pred_fallthru
        _
    $region60: #{tpu_custom_call.1} parent=5 // pred_fallthru
      _
  $region6: #{tpu_custom_call.1} parent=0 // loop_footer
    %s18 = sadd.s32 1, %s14
  $region7: #{tpu_custom_call.1} parent=0 // loop_footer_branch
    %13 = sbr.rel target = $region3
  $region8: #{tpu_custom_call.1} parent=0 // loop_exit
    _

</llo_original>
